<compile_context>
chip_gen: v7x
topology: tpu7x:2x2x1
jax: 0.10.0
libtpu: 0.0.40
codegen_flags: <defaults>
</compile_context>

<pallas_src>
import functools
import math

import numpy as np
import jax
import jax.numpy as jnp
from jax.experimental import pallas as pl
from jax.experimental.pallas import tpu as pltpu


_ROW_TILE = 512                       # rows per grid step for the FFN kernel (multiple of 8)
_VMEM_LIMIT_BYTES = 64 * 1024 * 1024  # raise scoped-VMEM limit (v5e default is only 16 MiB)


# --------------------------------------------------------------------------- kernels

def _fused_attn_kernel(x_ref, mem_ref, wq_ref, bq_ref, wkv_ref, bkv_ref,
                       wo_ref, bo_ref, g_ref, beta_ref, o_ref, w_ref,
                       *, nhead, eps):
    """LayerNorm(x + out_proj(MHA(x, mem, mem))) for one batch element.

    x: (Lq, D), mem: (Lk, D); all weights pre-transposed to (Din, Dout).
    Outputs: o (Lq, D) and head-averaged attention weights w (Lq, Lk).
    """
    x = x_ref[...]
    mem = mem_ref[...]
    Lq, D = x.shape
    Lk = mem.shape[0]
    dh = D // nhead
    scale = 1.0 / math.sqrt(dh)

    # In-projections: one MXU call each; heads become lane slices afterwards.
    q = jnp.dot(x, wq_ref[...], preferred_element_type=jnp.float32) + bq_ref[...]
    kv = jnp.dot(mem, wkv_ref[...], preferred_element_type=jnp.float32) + bkv_ref[...]

    acc = jnp.zeros((Lq, D), jnp.float32)      # out-proj accumulator (head merge folded in)
    w_acc = jnp.zeros((Lq, Lk), jnp.float32)   # head-summed attention probabilities
    dn = (((1,), (1,)), ((), ()))              # contract last dims: (Lq,dh)x(Lk,dh)->(Lq,Lk)

    for h in range(nhead):                     # static unroll; one (Lq, Lk) tile live per head
        lo = h * dh
        qh = q[:, lo:lo + dh]
        kh = kv[:, lo:lo + dh]
        vh = kv[:, D + lo:D + lo + dh]
        s = jax.lax.dot_general(qh, kh, dn, preferred_element_type=jnp.float32) * scale
        e = jnp.exp(s - jnp.max(s, axis=-1, keepdims=True))
        # EUP reciprocal instead of a VPU divide; scale the PV result, not the scores.
        inv = pl.reciprocal(jnp.sum(e, axis=-1, keepdims=True), approx=True)
        ctx = jnp.dot(e, vh, preferred_element_type=jnp.float32) * inv        # (Lq, dh)
        # head merge + out_proj folded into a row-slice of the out-proj weight
        acc = acc + jnp.dot(ctx.astype(wo_ref.dtype), wo_ref[lo:lo + dh, :],
                            preferred_element_type=jnp.float32)
        w_acc = w_acc + e * inv

    # residual add + LayerNorm (f32)
    z = x.astype(jnp.float32) + acc + bo_ref[...]
    mu = jnp.mean(z, axis=-1, keepdims=True)
    zc = z - mu
    var = jnp.mean(zc * zc, axis=-1, keepdims=True)
    o_ref[...] = (zc * jax.lax.rsqrt(var + eps) * g_ref[...] + beta_ref[...]).astype(o_ref.dtype)
    w_ref[...] = (w_acc * (1.0 / nhead)).astype(w_ref.dtype)


def _ffn_add_ln_kernel(x_ref, w1_ref, b1_ref, w2_ref, b2_ref, g_ref, beta_ref, o_ref, *, eps):
    # LayerNorm(x + relu(x @ W1 + b1) @ W2 + b2); matmuls in native dtype, f32 accumulate.
    x = x_ref[...]
    h = jnp.maximum(
        jnp.dot(x, w1_ref[...], preferred_element_type=jnp.float32) + b1_ref[...], 0.0)
    y = jnp.dot(h.astype(w2_ref.dtype), w2_ref[...],
                preferred_element_type=jnp.float32) + b2_ref[...]
    z = x.astype(jnp.float32) + y
    mu = jnp.mean(z, axis=-1, keepdims=True)
    zc = z - mu
    var = jnp.mean(zc * zc, axis=-1, keepdims=True)
    o_ref[...] = (zc * jax.lax.rsqrt(var + eps) * g_ref[...] + beta_ref[...]).astype(o_ref.dtype)


# --------------------------------------------------------------------------- wrappers

def fused_attention_block(x3, mem3, wq, bq, wkv, bkv, wo, bo, gamma, beta, *, nhead, eps=1e-5):
    """x3: (B, Lq, D), mem3: (B, Lk, D) -> (out (B, Lq, D), attn_weights (B, Lq, Lk))."""
    B, Lq, D = x3.shape
    Lk = mem3.shape[1]
    kernel = functools.partial(_fused_attn_kernel, nhead=nhead, eps=eps)
    flops = 2 * B * (Lq * D * D            # q in-proj
                     + Lk * D * 2 * D      # kv in-proj
                     + 2 * Lq * Lk * D     # scores + PV
                     + Lq * D * D)         # out-proj
    bytes_accessed = 4 * (x3.size + mem3.size + wq.size + wkv.size + wo.size
                          + bq.size + bkv.size + bo.size + gamma.size + beta.size
                          + B * Lq * D + B * Lq * Lk)
    return pl.pallas_call(
        kernel,
        out_shape=(
            jax.ShapeDtypeStruct((B, Lq, D), x3.dtype),
            jax.ShapeDtypeStruct((B, Lq, Lk), jnp.float32),
        ),
        grid_spec=pltpu.PrefetchScalarGridSpec(
            num_scalar_prefetch=0,
            grid=(B,),
            in_specs=[
                pl.BlockSpec((pl.Squeezed(), Lq, D), lambda b: (b, 0, 0)),
                pl.BlockSpec((pl.Squeezed(), Lk, D), lambda b: (b, 0, 0)),
                pl.BlockSpec((D, D), lambda b: (0, 0)),        # wq   (resident)
                pl.BlockSpec((1, D), lambda b: (0, 0)),        # bq
                pl.BlockSpec((D, 2 * D), lambda b: (0, 0)),    # wkv  (resident)
                pl.BlockSpec((1, 2 * D), lambda b: (0, 0)),    # bkv
                pl.BlockSpec((D, D), lambda b: (0, 0)),        # wo   (resident)
                pl.BlockSpec((1, D), lambda b: (0, 0)),        # bo
                pl.BlockSpec((1, D), lambda b: (0, 0)),        # ln gamma
                pl.BlockSpec((1, D), lambda b: (0, 0)),        # ln beta
            ],
            out_specs=(
                pl.BlockSpec((pl.Squeezed(), Lq, D), lambda b: (b, 0, 0)),
                pl.BlockSpec((pl.Squeezed(), Lq, Lk), lambda b: (b, 0, 0)),
            ),
        ),
        compiler_params=pltpu.CompilerParams(
            dimension_semantics=("parallel",),
            vmem_limit_bytes=_VMEM_LIMIT_BYTES),
        cost_estimate=pl.CostEstimate(
            flops=flops, transcendentals=B * nhead * Lq * Lk,
            bytes_accessed=bytes_accessed),
    )(x3, mem3, wq, bq, wkv, bkv, wo, bo, gamma, beta)


def ffn_add_ln(x, w1_t, b1, w2_t, b2, gamma, beta, eps=1e-5):
    """LayerNorm(x + relu(x @ w1_t + b1) @ w2_t + b2); x: (N, D); weights pre-transposed."""
    N, D = x.shape
    Dff = w1_t.shape[1]
    tn = min(N, _ROW_TILE)
    kernel = functools.partial(_ffn_add_ln_kernel, eps=eps)
    flops = 2 * N * D * Dff * 2
    bytes_accessed = 4 * (2 * x.size + w1_t.size + w2_t.size + b1.size + b2.size
                          + gamma.size + beta.size)
    return pl.pallas_call(
        kernel,
        out_shape=jax.ShapeDtypeStruct((N, D), x.dtype),
        grid_spec=pltpu.PrefetchScalarGridSpec(
            num_scalar_prefetch=0,
            grid=(pl.cdiv(N, tn),),
            in_specs=[
                pl.BlockSpec((tn, D), lambda i: (i, 0)),
                pl.BlockSpec((D, Dff), lambda i: (0, 0)),    # resident W1
                pl.BlockSpec((1, Dff), lambda i: (0, 0)),
                pl.BlockSpec((Dff, D), lambda i: (0, 0)),    # resident W2
                pl.BlockSpec((1, D), lambda i: (0, 0)),
                pl.BlockSpec((1, D), lambda i: (0, 0)),
                pl.BlockSpec((1, D), lambda i: (0, 0)),
            ],
            out_specs=pl.BlockSpec((tn, D), lambda i: (i, 0)),
        ),
        compiler_params=pltpu.CompilerParams(
            dimension_semantics=("parallel",),
            vmem_limit_bytes=_VMEM_LIMIT_BYTES),
        cost_estimate=pl.CostEstimate(flops=flops, transcendentals=0,
                                      bytes_accessed=bytes_accessed),
    )(x, w1_t, b1, w2_t, b2, gamma, beta)


# --------------------------------------------------------------------------- params & forward

def prepare_params(params):
    """Hoist all weight transposes / bias reshapes out of the forward (run once, outside jit)."""
    D = params["sa_w_out"].shape[0]

    def t(w):
        return jnp.asarray(w).T

    def row(v):
        return jnp.asarray(v).reshape(1, -1)

    return {
        "sa_wq": t(params["sa_w_in"][:D]),       "sa_bq": row(params["sa_b_in"][:D]),
        "sa_wkv": t(params["sa_w_in"][D:]),      "sa_bkv": row(params["sa_b_in"][D:]),
        "sa_wo": t(params["sa_w_out"]),          "sa_bo": row(params["sa_b_out"]),
        "ca_wq": t(params["ca_w_in"][:D]),       "ca_bq": row(params["ca_b_in"][:D]),
        "ca_wkv": t(params["ca_w_in"][D:]),      "ca_bkv": row(params["ca_b_in"][D:]),
        "ca_wo": t(params["ca_w_out"]),          "ca_bo": row(params["ca_b_out"]),
        "ff_w1t": t(params["ff_w1"]),            "ff_b1": row(params["ff_b1"]),
        "ff_w2t": t(params["ff_w2"]),            "ff_b2": row(params["ff_b2"]),
        "ln1_g": row(params["ln1_g"]), "ln1_b": row(params["ln1_b"]),
        "ln2_g": row(params["ln2_g"]), "ln2_b": row(params["ln2_b"]),
        "ln3_g": row(params["ln3_g"]), "ln3_b": row(params["ln3_b"]),
    }


def transformer_decoder_layer(tgt, memory, kp, *, nhead):
    """tgt: (T,B,D), memory: (S,B,D) -> (out (T,B,D), cross_attn (B,T,S), self_attn (B,T,T))."""
    T, B, D = tgt.shape

    x3 = tgt.transpose(1, 0, 2)        # (B, T, D)  -- only boundary transposes remain
    mem3 = memory.transpose(1, 0, 2)   # (B, S, D)

    # self-attention + out_proj + residual + norm1   (dropout1 = identity)
    x3, sa_w = fused_attention_block(
        x3, x3, kp["sa_wq"], kp["sa_bq"], kp["sa_wkv"], kp["sa_bkv"],
        kp["sa_wo"], kp["sa_bo"], kp["ln1_g"], kp["ln1_b"], nhead=nhead)

    # cross-attention + out_proj + residual + norm2  (dropout2 = identity)
    x3, ca_w = fused_attention_block(
        x3, mem3, kp["ca_wq"], kp["ca_bq"], kp["ca_wkv"], kp["ca_bkv"],
        kp["ca_wo"], kp["ca_bo"], kp["ln2_g"], kp["ln2_b"], nhead=nhead)

    # feed-forward + residual + norm3                (dropout / dropout3 = identity)
    x2 = ffn_add_ln(x3.reshape(B * T, D), kp["ff_w1t"], kp["ff_b1"],
                    kp["ff_w2t"], kp["ff_b2"], kp["ln3_g"], kp["ln3_b"])

    out = x2.reshape(B, T, D).transpose(1, 0, 2)     # back to (T, B, D)
    return out, ca_w, sa_w


# --------------------------------------------------------------------------- demo / check

if __name__ == "__main__":
    d_model, nhead, dim_ff = 32, 4, 64
    T, S, B = 8, 16, 2

    key = jax.random.PRNGKey(0)
    keys = jax.random.split(key, 16)

    def w(k, shape, scale=0.1):
        return jax.random.normal(k, shape, dtype=jnp.float32) * scale

    params = {
        "sa_w_in": w(keys[0], (3 * d_model, d_model)),
        "sa_b_in": w(keys[1], (3 * d_model,)),
        "sa_w_out": w(keys[2], (d_model, d_model)),
        "sa_b_out": w(keys[3], (d_model,)),
        "ca_w_in": w(keys[4], (3 * d_model, d_model)),
        "ca_b_in": w(keys[5], (3 * d_model,)),
        "ca_w_out": w(keys[6], (d_model, d_model)),
        "ca_b_out": w(keys[7], (d_model,)),
        "ff_w1": w(keys[8], (dim_ff, d_model)),
        "ff_b1": w(keys[9], (dim_ff,)),
        "ff_w2": w(keys[10], (d_model, dim_ff)),
        "ff_b2": w(keys[11], (d_model,)),
        "ln1_g": jnp.ones((d_model,), jnp.float32),
        "ln1_b": jnp.zeros((d_model,), jnp.float32),
        "ln2_g": jnp.ones((d_model,), jnp.float32),
        "ln2_b": jnp.zeros((d_model,), jnp.float32),
        "ln3_g": jnp.ones((d_model,), jnp.float32),
        "ln3_b": jnp.zeros((d_model,), jnp.float32),
    }

    tgt = jax.random.normal(keys[12], (T, B, d_model), dtype=jnp.float32)
    memory = jax.random.normal(keys[13], (S, B, d_model), dtype=jnp.float32)

    kparams = prepare_params(params)   # all weight .T / reshape done once, OUTSIDE jit

    fwd = jax.jit(functools.partial(transformer_decoder_layer, nhead=nhead))
    out, cross_attn, self_attn = fwd(tgt, memory, kparams)
    out, cross_attn, self_attn = jax.block_until_ready((out, cross_attn, self_attn))

    # ---------------- pure NumPy (float64) reference of the same forward ----------------
    P = {k: np.asarray(v, dtype=np.float64) for k, v in params.items()}
    t_np = np.asarray(tgt, np.float64)
    m_np = np.asarray(memory, np.float64)

    def ln_np(x, g, b, eps=1e-5):
        mu = x.mean(-1, keepdims=True)
        var = ((x - mu) ** 2).mean(-1, keepdims=True)
        return (x - mu) / np.sqrt(var + eps) * g + b

    def mha_np(q_in, k_in, v_in, w_in, b_in, w_o, b_o, H):
        L, N, E = q_in.shape
        S_ = k_in.shape[0]
        dh = E // H
        q = q_in @ w_in[:E].T + b_in[:E]
        k = k_in @ w_in[E:2 * E].T + b_in[E:2 * E]
        v = v_in @ w_in[2 * E:].T + b_in[2 * E:]
        q = q.reshape(L, N * H, dh).transpose(1, 0, 2) / np.sqrt(dh)
        k = k.reshape(S_, N * H, dh).transpose(1, 0, 2)
        v = v.reshape(S_, N * H, dh).transpose(1, 0, 2)
        s = q @ k.transpose(0, 2, 1)
        s = s - s.max(-1, keepdims=True)
        p = np.exp(s)
        p = p / p.sum(-1, keepdims=True)
        o = (p @ v).transpose(1, 0, 2).reshape(L, N, E) @ w_o.T + b_o
        return o, p.reshape(N, H, L, S_).mean(axis=1)

    t2, ref_sa = mha_np(t_np, t_np, t_np, P["sa_w_in"], P["sa_b_in"],
                        P["sa_w_out"], P["sa_b_out"], nhead)
    xr = ln_np(t_np + t2, P["ln1_g"], P["ln1_b"])
    t2, ref_ca = mha_np(xr, m_np, m_np, P["ca_w_in"], P["ca_b_in"],
                        P["ca_w_out"], P["ca_b_out"], nhead)
    xr = ln_np(xr + t2, P["ln2_g"], P["ln2_b"])
    h = np.maximum(xr @ P["ff_w1"].T + P["ff_b1"], 0.0)
    t2 = h @ P["ff_w2"].T + P["ff_b2"]
    ref_out = ln_np(xr + t2, P["ln3_g"], P["ln3_b"])

    assert out.shape == (T, B, d_model)
    assert cross_attn.shape == (B, T, S)
    assert self_attn.shape == (B, T, T)
    np.testing.assert_allclose(np.asarray(out), ref_out, rtol=2e-2, atol=2e-2)
    np.testing.assert_allclose(np.asarray(self_attn), ref_sa, rtol=2e-2, atol=2e-2)
    np.testing.assert_allclose(np.asarray(cross_attn), ref_ca, rtol=2e-2, atol=2e-2)

    print("KERNEL_OK")
</pallas_src>

<mosaic_0001>
module attributes {stable_mosaic.version = 11 : i64} {
  func.func @_fused_attn_kernel(%arg0: i32, %arg1: memref<1x8x32xf32, #tpu.memory_space<vmem>>, %arg2: memref<1x8x32xf32, #tpu.memory_space<vmem>>, %arg3: memref<32x32xf32, #tpu.memory_space<vmem>>, %arg4: memref<1x32xf32, #tpu.memory_space<vmem>>, %arg5: memref<32x64xf32, #tpu.memory_space<vmem>>, %arg6: memref<1x64xf32, #tpu.memory_space<vmem>>, %arg7: memref<32x32xf32, #tpu.memory_space<vmem>>, %arg8: memref<1x32xf32, #tpu.memory_space<vmem>>, %arg9: memref<1x32xf32, #tpu.memory_space<vmem>>, %arg10: memref<1x32xf32, #tpu.memory_space<vmem>>, %arg11: memref<1x8x32xf32, #tpu.memory_space<vmem>>, %arg12: memref<1x8x8xf32, #tpu.memory_space<vmem>>) attributes {dimension_semantics = [#tpu.dimension_semantics<parallel>], iteration_bounds = array<i64: 2>, scalar_prefetch = 0 : i64, scratch_operands = 0 : i64, tpu.core_type = #tpu.core_type<tc>, window_params = [{transform_indices = @transform_0, window_bounds = array<i64: 1, 8, 32>}, {transform_indices = @transform_1, window_bounds = array<i64: 1, 8, 32>}, {pipeline_mode = #tpu.pipeline_mode<synchronous>, transform_indices = @transform_2, window_bounds = array<i64: 32, 32>}, {pipeline_mode = #tpu.pipeline_mode<synchronous>, transform_indices = @transform_3, window_bounds = array<i64: 1, 32>}, {pipeline_mode = #tpu.pipeline_mode<synchronous>, transform_indices = @transform_4, window_bounds = array<i64: 32, 64>}, {pipeline_mode = #tpu.pipeline_mode<synchronous>, transform_indices = @transform_5, window_bounds = array<i64: 1, 64>}, {pipeline_mode = #tpu.pipeline_mode<synchronous>, transform_indices = @transform_6, window_bounds = array<i64: 32, 32>}, {pipeline_mode = #tpu.pipeline_mode<synchronous>, transform_indices = @transform_7, window_bounds = array<i64: 1, 32>}, {pipeline_mode = #tpu.pipeline_mode<synchronous>, transform_indices = @transform_8, window_bounds = array<i64: 1, 32>}, {pipeline_mode = #tpu.pipeline_mode<synchronous>, transform_indices = @transform_9, window_bounds = array<i64: 1, 32>}, {transform_indices = @transform_10, window_bounds = array<i64: 1, 8, 32>}, {transform_indices = @transform_11, window_bounds = array<i64: 1, 8, 8>}]} {
    %c0 = arith.constant 0 : index
    %c0_0 = arith.constant 0 : index
    %c0_1 = arith.constant 0 : index
    %0 = vector.load %arg1[%c0, %c0_0, %c0_1] : memref<1x8x32xf32, #tpu.memory_space<vmem>>, vector<1x8x32xf32>
    %1 = vector.shape_cast %0 : vector<1x8x32xf32> to vector<8x32xf32>
    %c0_2 = arith.constant 0 : index
    %c0_3 = arith.constant 0 : index
    %c0_4 = arith.constant 0 : index
    %2 = vector.load %arg2[%c0_2, %c0_3, %c0_4] : memref<1x8x32xf32, #tpu.memory_space<vmem>>, vector<1x8x32xf32>
    %3 = vector.shape_cast %2 : vector<1x8x32xf32> to vector<8x32xf32>
    %c0_5 = arith.constant 0 : index
    %c0_6 = arith.constant 0 : index
    %4 = vector.load %arg3[%c0_5, %c0_6] : memref<32x32xf32, #tpu.memory_space<vmem>>, vector<32x32xf32>
    %cst = arith.constant dense<0.000000e+00> : vector<8x32xf32>
    %5 = tpu.matmul %1, %4, %cst {dimension_numbers = #tpu.dot_dimension_numbers<[1], [0], [0], [1], [0, 0, 1, 1], [], []>} : vector<8x32xf32>, vector<32x32xf32>, vector<8x32xf32> -> vector<8x32xf32>
    %c0_7 = arith.constant 0 : index
    %c0_8 = arith.constant 0 : index
    %6 = vector.load %arg4[%c0_7, %c0_8] : memref<1x32xf32, #tpu.memory_space<vmem>>, vector<1x32xf32>
    %7 = vector.broadcast %6 : vector<1x32xf32> to vector<8x32xf32>
    %8 = arith.addf %5, %7 : vector<8x32xf32>
    %c0_9 = arith.constant 0 : index
    %c0_10 = arith.constant 0 : index
    %9 = vector.load %arg5[%c0_9, %c0_10] : memref<32x64xf32, #tpu.memory_space<vmem>>, vector<32x64xf32>
    %cst_11 = arith.constant dense<0.000000e+00> : vector<8x64xf32>
    %10 = tpu.matmul %3, %9, %cst_11 {dimension_numbers = #tpu.dot_dimension_numbers<[1], [0], [0], [1], [0, 0, 1, 1], [], []>} : vector<8x32xf32>, vector<32x64xf32>, vector<8x64xf32> -> vector<8x64xf32>
    %c0_12 = arith.constant 0 : index
    %c0_13 = arith.constant 0 : index
    %11 = vector.load %arg6[%c0_12, %c0_13] : memref<1x64xf32, #tpu.memory_space<vmem>>, vector<1x64xf32>
    %12 = vector.broadcast %11 : vector<1x64xf32> to vector<8x64xf32>
    %13 = arith.addf %10, %12 : vector<8x64xf32>
    %cst_14 = arith.constant 0.000000e+00 : f32
    %14 = vector.broadcast %cst_14 : f32 to vector<8x32xf32>
    %cst_15 = arith.constant 0.000000e+00 : f32
    %15 = vector.broadcast %cst_15 : f32 to vector<8x8xf32>
    %16 = vector.extract_strided_slice %8 {offsets = [0, 0], sizes = [8, 8], strides = [1, 1]} : vector<8x32xf32> to vector<8x8xf32>
    %17 = vector.extract_strided_slice %13 {offsets = [0, 0], sizes = [8, 8], strides = [1, 1]} : vector<8x64xf32> to vector<8x8xf32>
    %18 = vector.extract_strided_slice %13 {offsets = [0, 32], sizes = [8, 8], strides = [1, 1]} : vector<8x64xf32> to vector<8x8xf32>
    %cst_16 = arith.constant dense<0.000000e+00> : vector<8x8xf32>
    %19 = tpu.matmul %16, %17, %cst_16 {dimension_numbers = #tpu.dot_dimension_numbers<[1], [1], [0], [0], [0, 0, 1, 0], [], []>} : vector<8x8xf32>, vector<8x8xf32>, vector<8x8xf32> -> vector<8x8xf32>
    %cst_17 = arith.constant 0.353553385 : f32
    %20 = vector.broadcast %cst_17 : f32 to vector<8x8xf32>
    %21 = arith.mulf %19, %20 : vector<8x8xf32>
    %cst_18 = arith.constant dense<0xFF800000> : vector<8xf32>
    %22 = vector.multi_reduction <maximumf>, %21, %cst_18 [1] : vector<8x8xf32> to vector<8xf32>
    %23 = vector.shape_cast %22 : vector<8xf32> to vector<8x1xf32>
    %24 = vector.broadcast %23 : vector<8x1xf32> to vector<8x8xf32>
    %25 = arith.subf %21, %24 : vector<8x8xf32>
    %26 = math.exp %25 : vector<8x8xf32>
    %cst_19 = arith.constant dense<0.000000e+00> : vector<8xf32>
    %27 = vector.multi_reduction <add>, %26, %cst_19 [1] : vector<8x8xf32> to vector<8xf32>
    %28 = vector.shape_cast %27 : vector<8xf32> to vector<8x1xf32>
    %29 = tpu.reciprocal %28 {approx = true} : vector<8x1xf32> -> vector<8x1xf32>
    %cst_20 = arith.constant dense<0.000000e+00> : vector<8x8xf32>
    %30 = tpu.matmul %26, %18, %cst_20 {dimension_numbers = #tpu.dot_dimension_numbers<[1], [0], [0], [1], [0, 0, 1, 1], [], []>} : vector<8x8xf32>, vector<8x8xf32>, vector<8x8xf32> -> vector<8x8xf32>
    %31 = vector.broadcast %29 : vector<8x1xf32> to vector<8x8xf32>
    %32 = arith.mulf %30, %31 : vector<8x8xf32>
    %c0_21 = arith.constant 0 : index
    %c0_22 = arith.constant 0 : index
    %33 = vector.load %arg7[%c0_21, %c0_22] : memref<32x32xf32, #tpu.memory_space<vmem>>, vector<8x32xf32>
    %cst_23 = arith.constant dense<0.000000e+00> : vector<8x32xf32>
    %34 = tpu.matmul %32, %33, %cst_23 {dimension_numbers = #tpu.dot_dimension_numbers<[1], [0], [0], [1], [0, 0, 1, 1], [], []>} : vector<8x8xf32>, vector<8x32xf32>, vector<8x32xf32> -> vector<8x32xf32>
    %35 = arith.addf %14, %34 : vector<8x32xf32>
    %36 = vector.broadcast %29 : vector<8x1xf32> to vector<8x8xf32>
    %37 = arith.mulf %26, %36 : vector<8x8xf32>
    %38 = arith.addf %15, %37 : vector<8x8xf32>
    %39 = vector.extract_strided_slice %8 {offsets = [0, 8], sizes = [8, 8], strides = [1, 1]} : vector<8x32xf32> to vector<8x8xf32>
    %40 = vector.extract_strided_slice %13 {offsets = [0, 8], sizes = [8, 8], strides = [1, 1]} : vector<8x64xf32> to vector<8x8xf32>
    %41 = vector.extract_strided_slice %13 {offsets = [0, 40], sizes = [8, 8], strides = [1, 1]} : vector<8x64xf32> to vector<8x8xf32>
    %cst_24 = arith.constant dense<0.000000e+00> : vector<8x8xf32>
    %42 = tpu.matmul %39, %40, %cst_24 {dimension_numbers = #tpu.dot_dimension_numbers<[1], [1], [0], [0], [0, 0, 1, 0], [], []>} : vector<8x8xf32>, vector<8x8xf32>, vector<8x8xf32> -> vector<8x8xf32>
    %cst_25 = arith.constant 0.353553385 : f32
    %43 = vector.broadcast %cst_25 : f32 to vector<8x8xf32>
    %44 = arith.mulf %42, %43 : vector<8x8xf32>
    %cst_26 = arith.constant dense<0xFF800000> : vector<8xf32>
    %45 = vector.multi_reduction <maximumf>, %44, %cst_26 [1] : vector<8x8xf32> to vector<8xf32>
    %46 = vector.shape_cast %45 : vector<8xf32> to vector<8x1xf32>
    %47 = vector.broadcast %46 : vector<8x1xf32> to vector<8x8xf32>
    %48 = arith.subf %44, %47 : vector<8x8xf32>
    %49 = math.exp %48 : vector<8x8xf32>
    %cst_27 = arith.constant dense<0.000000e+00> : vector<8xf32>
    %50 = vector.multi_reduction <add>, %49, %cst_27 [1] : vector<8x8xf32> to vector<8xf32>
    %51 = vector.shape_cast %50 : vector<8xf32> to vector<8x1xf32>
    %52 = tpu.reciprocal %51 {approx = true} : vector<8x1xf32> -> vector<8x1xf32>
    %cst_28 = arith.constant dense<0.000000e+00> : vector<8x8xf32>
    %53 = tpu.matmul %49, %41, %cst_28 {dimension_numbers = #tpu.dot_dimension_numbers<[1], [0], [0], [1], [0, 0, 1, 1], [], []>} : vector<8x8xf32>, vector<8x8xf32>, vector<8x8xf32> -> vector<8x8xf32>
    %54 = vector.broadcast %52 : vector<8x1xf32> to vector<8x8xf32>
    %55 = arith.mulf %53, %54 : vector<8x8xf32>
    %c8 = arith.constant 8 : index
    %c0_29 = arith.constant 0 : index
    %56 = vector.load %arg7[%c8, %c0_29] : memref<32x32xf32, #tpu.memory_space<vmem>>, vector<8x32xf32>
    %cst_30 = arith.constant dense<0.000000e+00> : vector<8x32xf32>
    %57 = tpu.matmul %55, %56, %cst_30 {dimension_numbers = #tpu.dot_dimension_numbers<[1], [0], [0], [1], [0, 0, 1, 1], [], []>} : vector<8x8xf32>, vector<8x32xf32>, vector<8x32xf32> -> vector<8x32xf32>
    %58 = arith.addf %35, %57 : vector<8x32xf32>
    %59 = vector.broadcast %52 : vector<8x1xf32> to vector<8x8xf32>
    %60 = arith.mulf %49, %59 : vector<8x8xf32>
    %61 = arith.addf %38, %60 : vector<8x8xf32>
    %62 = vector.extract_strided_slice %8 {offsets = [0, 16], sizes = [8, 8], strides = [1, 1]} : vector<8x32xf32> to vector<8x8xf32>
    %63 = vector.extract_strided_slice %13 {offsets = [0, 16], sizes = [8, 8], strides = [1, 1]} : vector<8x64xf32> to vector<8x8xf32>
    %64 = vector.extract_strided_slice %13 {offsets = [0, 48], sizes = [8, 8], strides = [1, 1]} : vector<8x64xf32> to vector<8x8xf32>
    %cst_31 = arith.constant dense<0.000000e+00> : vector<8x8xf32>
    %65 = tpu.matmul %62, %63, %cst_31 {dimension_numbers = #tpu.dot_dimension_numbers<[1], [1], [0], [0], [0, 0, 1, 0], [], []>} : vector<8x8xf32>, vector<8x8xf32>, vector<8x8xf32> -> vector<8x8xf32>
    %cst_32 = arith.constant 0.353553385 : f32
    %66 = vector.broadcast %cst_32 : f32 to vector<8x8xf32>
    %67 = arith.mulf %65, %66 : vector<8x8xf32>
    %cst_33 = arith.constant dense<0xFF800000> : vector<8xf32>
    %68 = vector.multi_reduction <maximumf>, %67, %cst_33 [1] : vector<8x8xf32> to vector<8xf32>
    %69 = vector.shape_cast %68 : vector<8xf32> to vector<8x1xf32>
    %70 = vector.broadcast %69 : vector<8x1xf32> to vector<8x8xf32>
    %71 = arith.subf %67, %70 : vector<8x8xf32>
    %72 = math.exp %71 : vector<8x8xf32>
    %cst_34 = arith.constant dense<0.000000e+00> : vector<8xf32>
    %73 = vector.multi_reduction <add>, %72, %cst_34 [1] : vector<8x8xf32> to vector<8xf32>
    %74 = vector.shape_cast %73 : vector<8xf32> to vector<8x1xf32>
    %75 = tpu.reciprocal %74 {approx = true} : vector<8x1xf32> -> vector<8x1xf32>
    %cst_35 = arith.constant dense<0.000000e+00> : vector<8x8xf32>
    %76 = tpu.matmul %72, %64, %cst_35 {dimension_numbers = #tpu.dot_dimension_numbers<[1], [0], [0], [1], [0, 0, 1, 1], [], []>} : vector<8x8xf32>, vector<8x8xf32>, vector<8x8xf32> -> vector<8x8xf32>
    %77 = vector.broadcast %75 : vector<8x1xf32> to vector<8x8xf32>
    %78 = arith.mulf %76, %77 : vector<8x8xf32>
    %c16 = arith.constant 16 : index
    %c0_36 = arith.constant 0 : index
    %79 = vector.load %arg7[%c16, %c0_36] : memref<32x32xf32, #tpu.memory_space<vmem>>, vector<8x32xf32>
    %cst_37 = arith.constant dense<0.000000e+00> : vector<8x32xf32>
    %80 = tpu.matmul %78, %79, %cst_37 {dimension_numbers = #tpu.dot_dimension_numbers<[1], [0], [0], [1], [0, 0, 1, 1], [], []>} : vector<8x8xf32>, vector<8x32xf32>, vector<8x32xf32> -> vector<8x32xf32>
    %81 = arith.addf %58, %80 : vector<8x32xf32>
    %82 = vector.broadcast %75 : vector<8x1xf32> to vector<8x8xf32>
    %83 = arith.mulf %72, %82 : vector<8x8xf32>
    %84 = arith.addf %61, %83 : vector<8x8xf32>
    %85 = vector.extract_strided_slice %8 {offsets = [0, 24], sizes = [8, 8], strides = [1, 1]} : vector<8x32xf32> to vector<8x8xf32>
    %86 = vector.extract_strided_slice %13 {offsets = [0, 24], sizes = [8, 8], strides = [1, 1]} : vector<8x64xf32> to vector<8x8xf32>
    %87 = vector.extract_strided_slice %13 {offsets = [0, 56], sizes = [8, 8], strides = [1, 1]} : vector<8x64xf32> to vector<8x8xf32>
    %cst_38 = arith.constant dense<0.000000e+00> : vector<8x8xf32>
    %88 = tpu.matmul %85, %86, %cst_38 {dimension_numbers = #tpu.dot_dimension_numbers<[1], [1], [0], [0], [0, 0, 1, 0], [], []>} : vector<8x8xf32>, vector<8x8xf32>, vector<8x8xf32> -> vector<8x8xf32>
    %cst_39 = arith.constant 0.353553385 : f32
    %89 = vector.broadcast %cst_39 : f32 to vector<8x8xf32>
    %90 = arith.mulf %88, %89 : vector<8x8xf32>
    %cst_40 = arith.constant dense<0xFF800000> : vector<8xf32>
    %91 = vector.multi_reduction <maximumf>, %90, %cst_40 [1] : vector<8x8xf32> to vector<8xf32>
    %92 = vector.shape_cast %91 : vector<8xf32> to vector<8x1xf32>
    %93 = vector.broadcast %92 : vector<8x1xf32> to vector<8x8xf32>
    %94 = arith.subf %90, %93 : vector<8x8xf32>
    %95 = math.exp %94 : vector<8x8xf32>
    %cst_41 = arith.constant dense<0.000000e+00> : vector<8xf32>
    %96 = vector.multi_reduction <add>, %95, %cst_41 [1] : vector<8x8xf32> to vector<8xf32>
    %97 = vector.shape_cast %96 : vector<8xf32> to vector<8x1xf32>
    %98 = tpu.reciprocal %97 {approx = true} : vector<8x1xf32> -> vector<8x1xf32>
    %cst_42 = arith.constant dense<0.000000e+00> : vector<8x8xf32>
    %99 = tpu.matmul %95, %87, %cst_42 {dimension_numbers = #tpu.dot_dimension_numbers<[1], [0], [0], [1], [0, 0, 1, 1], [], []>} : vector<8x8xf32>, vector<8x8xf32>, vector<8x8xf32> -> vector<8x8xf32>
    %100 = vector.broadcast %98 : vector<8x1xf32> to vector<8x8xf32>
    %101 = arith.mulf %99, %100 : vector<8x8xf32>
    %c24 = arith.constant 24 : index
    %c0_43 = arith.constant 0 : index
    %102 = vector.load %arg7[%c24, %c0_43] : memref<32x32xf32, #tpu.memory_space<vmem>>, vector<8x32xf32>
    %cst_44 = arith.constant dense<0.000000e+00> : vector<8x32xf32>
    %103 = tpu.matmul %101, %102, %cst_44 {dimension_numbers = #tpu.dot_dimension_numbers<[1], [0], [0], [1], [0, 0, 1, 1], [], []>} : vector<8x8xf32>, vector<8x32xf32>, vector<8x32xf32> -> vector<8x32xf32>
    %104 = arith.addf %81, %103 : vector<8x32xf32>
    %105 = vector.broadcast %98 : vector<8x1xf32> to vector<8x8xf32>
    %106 = arith.mulf %95, %105 : vector<8x8xf32>
    %107 = arith.addf %84, %106 : vector<8x8xf32>
    %108 = arith.addf %1, %104 : vector<8x32xf32>
    %c0_45 = arith.constant 0 : index
    %c0_46 = arith.constant 0 : index
    %109 = vector.load %arg8[%c0_45, %c0_46] : memref<1x32xf32, #tpu.memory_space<vmem>>, vector<1x32xf32>
    %110 = vector.broadcast %109 : vector<1x32xf32> to vector<8x32xf32>
    %111 = arith.addf %108, %110 : vector<8x32xf32>
    %cst_47 = arith.constant dense<0.000000e+00> : vector<8xf32>
    %112 = vector.multi_reduction <add>, %111, %cst_47 [1] : vector<8x32xf32> to vector<8xf32>
    %113 = vector.shape_cast %112 : vector<8xf32> to vector<8x1xf32>
    %cst_48 = arith.constant 3.200000e+01 : f32
    %114 = vector.broadcast %cst_48 : f32 to vector<8x1xf32>
    %115 = arith.divf %113, %114 : vector<8x1xf32>
    %116 = vector.broadcast %115 : vector<8x1xf32> to vector<8x32xf32>
    %117 = arith.subf %111, %116 : vector<8x32xf32>
    %118 = arith.mulf %117, %117 : vector<8x32xf32>
    %cst_49 = arith.constant dense<0.000000e+00> : vector<8xf32>
    %119 = vector.multi_reduction <add>, %118, %cst_49 [1] : vector<8x32xf32> to vector<8xf32>
    %120 = vector.shape_cast %119 : vector<8xf32> to vector<8x1xf32>
    %cst_50 = arith.constant 3.200000e+01 : f32
    %121 = vector.broadcast %cst_50 : f32 to vector<8x1xf32>
    %122 = arith.divf %120, %121 : vector<8x1xf32>
    %cst_51 = arith.constant 9.99999974E-6 : f32
    %123 = vector.broadcast %cst_51 : f32 to vector<8x1xf32>
    %124 = arith.addf %122, %123 : vector<8x1xf32>
    %125 = math.rsqrt %124 : vector<8x1xf32>
    %126 = vector.broadcast %125 : vector<8x1xf32> to vector<8x32xf32>
    %127 = arith.mulf %117, %126 : vector<8x32xf32>
    %c0_52 = arith.constant 0 : index
    %c0_53 = arith.constant 0 : index
    %128 = vector.load %arg9[%c0_52, %c0_53] : memref<1x32xf32, #tpu.memory_space<vmem>>, vector<1x32xf32>
    %129 = vector.broadcast %128 : vector<1x32xf32> to vector<8x32xf32>
    %130 = arith.mulf %127, %129 : vector<8x32xf32>
    %c0_54 = arith.constant 0 : index
    %c0_55 = arith.constant 0 : index
    %131 = vector.load %arg10[%c0_54, %c0_55] : memref<1x32xf32, #tpu.memory_space<vmem>>, vector<1x32xf32>
    %132 = vector.broadcast %131 : vector<1x32xf32> to vector<8x32xf32>
    %133 = arith.addf %130, %132 : vector<8x32xf32>
    %c0_56 = arith.constant 0 : index
    %c0_57 = arith.constant 0 : index
    %c0_58 = arith.constant 0 : index
    %134 = vector.load %arg11[%c0_56, %c0_57, %c0_58] : memref<1x8x32xf32, #tpu.memory_space<vmem>>, vector<1x8x32xf32>
    %135 = vector.shape_cast %134 : vector<1x8x32xf32> to vector<8x32xf32>
    %136 = vector.shape_cast %133 : vector<8x32xf32> to vector<1x8x32xf32>
    tpu.vector_store %arg11[%c0_56, %c0_57, %c0_58], %136 {strides = array<i32>} : memref<1x8x32xf32, #tpu.memory_space<vmem>>, vector<1x8x32xf32>,
    %cst_59 = arith.constant 2.500000e-01 : f32
    %137 = vector.broadcast %cst_59 : f32 to vector<8x8xf32>
    %138 = arith.mulf %107, %137 : vector<8x8xf32>
    %c0_60 = arith.constant 0 : index
    %c0_61 = arith.constant 0 : index
    %c0_62 = arith.constant 0 : index
    %139 = vector.load %arg12[%c0_60, %c0_61, %c0_62] : memref<1x8x8xf32, #tpu.memory_space<vmem>>, vector<1x8x8xf32>
    %140 = vector.shape_cast %139 : vector<1x8x8xf32> to vector<8x8xf32>
    %141 = vector.shape_cast %138 : vector<8x8xf32> to vector<1x8x8xf32>
    tpu.vector_store %arg12[%c0_60, %c0_61, %c0_62], %141 {strides = array<i32>} : memref<1x8x8xf32, #tpu.memory_space<vmem>>, vector<1x8x8xf32>,
    return
  }
  func.func @transform_0(%arg0: i32) -> (i32, i32, i32) {
    %c0_i32 = arith.constant 0 : i32
    %c0_i32_0 = arith.constant 0 : i32
    %c0_i32_1 = arith.constant 0 : i32
    return %arg0, %c0_i32, %c0_i32_0 : i32, i32, i32
  }
  func.func @transform_1(%arg0: i32) -> (i32, i32, i32) {
    %c0_i32 = arith.constant 0 : i32
    %c0_i32_0 = arith.constant 0 : i32
    %c0_i32_1 = arith.constant 0 : i32
    return %arg0, %c0_i32, %c0_i32_0 : i32, i32, i32
  }
  func.func @transform_2(%arg0: i32) -> (i32, i32) {
    %c0_i32 = arith.constant 0 : i32
    %c0_i32_0 = arith.constant 0 : i32
    %c0_i32_1 = arith.constant 0 : i32
    return %c0_i32, %c0_i32_0 : i32, i32
  }
  func.func @transform_3(%arg0: i32) -> (i32, i32) {
    %c0_i32 = arith.constant 0 : i32
    %c0_i32_0 = arith.constant 0 : i32
    %c0_i32_1 = arith.constant 0 : i32
    return %c0_i32, %c0_i32_0 : i32, i32
  }
  func.func @transform_4(%arg0: i32) -> (i32, i32) {
    %c0_i32 = arith.constant 0 : i32
    %c0_i32_0 = arith.constant 0 : i32
    %c0_i32_1 = arith.constant 0 : i32
    return %c0_i32, %c0_i32_0 : i32, i32
  }
  func.func @transform_5(%arg0: i32) -> (i32, i32) {
    %c0_i32 = arith.constant 0 : i32
    %c0_i32_0 = arith.constant 0 : i32
    %c0_i32_1 = arith.constant 0 : i32
    return %c0_i32, %c0_i32_0 : i32, i32
  }
  func.func @transform_6(%arg0: i32) -> (i32, i32) {
    %c0_i32 = arith.constant 0 : i32
    %c0_i32_0 = arith.constant 0 : i32
    %c0_i32_1 = arith.constant 0 : i32
    return %c0_i32, %c0_i32_0 : i32, i32
  }
  func.func @transform_7(%arg0: i32) -> (i32, i32) {
    %c0_i32 = arith.constant 0 : i32
    %c0_i32_0 = arith.constant 0 : i32
    %c0_i32_1 = arith.constant 0 : i32
    return %c0_i32, %c0_i32_0 : i32, i32
  }
  func.func @transform_8(%arg0: i32) -> (i32, i32) {
    %c0_i32 = arith.constant 0 : i32
    %c0_i32_0 = arith.constant 0 : i32
    %c0_i32_1 = arith.constant 0 : i32
    return %c0_i32, %c0_i32_0 : i32, i32
  }
  func.func @transform_9(%arg0: i32) -> (i32, i32) {
    %c0_i32 = arith.constant 0 : i32
    %c0_i32_0 = arith.constant 0 : i32
    %c0_i32_1 = arith.constant 0 : i32
    return %c0_i32, %c0_i32_0 : i32, i32
  }
  func.func @transform_10(%arg0: i32) -> (i32, i32, i32) {
    %c0_i32 = arith.constant 0 : i32
    %c0_i32_0 = arith.constant 0 : i32
    %c0_i32_1 = arith.constant 0 : i32
    return %arg0, %c0_i32, %c0_i32_0 : i32, i32, i32
  }
  func.func @transform_11(%arg0: i32) -> (i32, i32, i32) {
    %c0_i32 = arith.constant 0 : i32
    %c0_i32_0 = arith.constant 0 : i32
    %c0_i32_1 = arith.constant 0 : i32
    return %arg0, %c0_i32, %c0_i32_0 : i32, i32, i32
  }
}

module attributes {stable_mosaic.version = 11 : i64} {
  func.func @_fused_attn_kernel(%arg0: i32, %arg1: memref<1x8x32xf32, #tpu.memory_space<vmem>>, %arg2: memref<1x16x32xf32, #tpu.memory_space<vmem>>, %arg3: memref<32x32xf32, #tpu.memory_space<vmem>>, %arg4: memref<1x32xf32, #tpu.memory_space<vmem>>, %arg5: memref<32x64xf32, #tpu.memory_space<vmem>>, %arg6: memref<1x64xf32, #tpu.memory_space<vmem>>, %arg7: memref<32x32xf32, #tpu.memory_space<vmem>>, %arg8: memref<1x32xf32, #tpu.memory_space<vmem>>, %arg9: memref<1x32xf32, #tpu.memory_space<vmem>>, %arg10: memref<1x32xf32, #tpu.memory_space<vmem>>, %arg11: memref<1x8x32xf32, #tpu.memory_space<vmem>>, %arg12: memref<1x8x16xf32, #tpu.memory_space<vmem>>) attributes {dimension_semantics = [#tpu.dimension_semantics<parallel>], iteration_bounds = array<i64: 2>, scalar_prefetch = 0 : i64, scratch_operands = 0 : i64, tpu.core_type = #tpu.core_type<tc>, window_params = [{transform_indices = @transform_0, window_bounds = array<i64: 1, 8, 32>}, {transform_indices = @transform_1, window_bounds = array<i64: 1, 16, 32>}, {pipeline_mode = #tpu.pipeline_mode<synchronous>, transform_indices = @transform_2, window_bounds = array<i64: 32, 32>}, {pipeline_mode = #tpu.pipeline_mode<synchronous>, transform_indices = @transform_3, window_bounds = array<i64: 1, 32>}, {pipeline_mode = #tpu.pipeline_mode<synchronous>, transform_indices = @transform_4, window_bounds = array<i64: 32, 64>}, {pipeline_mode = #tpu.pipeline_mode<synchronous>, transform_indices = @transform_5, window_bounds = array<i64: 1, 64>}, {pipeline_mode = #tpu.pipeline_mode<synchronous>, transform_indices = @transform_6, window_bounds = array<i64: 32, 32>}, {pipeline_mode = #tpu.pipeline_mode<synchronous>, transform_indices = @transform_7, window_bounds = array<i64: 1, 32>}, {pipeline_mode = #tpu.pipeline_mode<synchronous>, transform_indices = @transform_8, window_bounds = array<i64: 1, 32>}, {pipeline_mode = #tpu.pipeline_mode<synchronous>, transform_indices = @transform_9, window_bounds = array<i64: 1, 32>}, {transform_indices = @transform_10, window_bounds = array<i64: 1, 8, 32>}, {transform_indices = @transform_11, window_bounds = array<i64: 1, 8, 16>}]} {
    %c0 = arith.constant 0 : index
    %c0_0 = arith.constant 0 : index
    %c0_1 = arith.constant 0 : index
    %0 = vector.load %arg1[%c0, %c0_0, %c0_1] : memref<1x8x32xf32, #tpu.memory_space<vmem>>, vector<1x8x32xf32>
    %1 = vector.shape_cast %0 : vector<1x8x32xf32> to vector<8x32xf32>
    %c0_2 = arith.constant 0 : index
    %c0_3 = arith.constant 0 : index
    %c0_4 = arith.constant 0 : index
    %2 = vector.load %arg2[%c0_2, %c0_3, %c0_4] : memref<1x16x32xf32, #tpu.memory_space<vmem>>, vector<1x16x32xf32>
    %3 = vector.shape_cast %2 : vector<1x16x32xf32> to vector<16x32xf32>
    %c0_5 = arith.constant 0 : index
    %c0_6 = arith.constant 0 : index
    %4 = vector.load %arg3[%c0_5, %c0_6] : memref<32x32xf32, #tpu.memory_space<vmem>>, vector<32x32xf32>
    %cst = arith.constant dense<0.000000e+00> : vector<8x32xf32>
    %5 = tpu.matmul %1, %4, %cst {dimension_numbers = #tpu.dot_dimension_numbers<[1], [0], [0], [1], [0, 0, 1, 1], [], []>} : vector<8x32xf32>, vector<32x32xf32>, vector<8x32xf32> -> vector<8x32xf32>
    %c0_7 = arith.constant 0 : index
    %c0_8 = arith.constant 0 : index
    %6 = vector.load %arg4[%c0_7, %c0_8] : memref<1x32xf32, #tpu.memory_space<vmem>>, vector<1x32xf32>
    %7 = vector.broadcast %6 : vector<1x32xf32> to vector<8x32xf32>
    %8 = arith.addf %5, %7 : vector<8x32xf32>
    %c0_9 = arith.constant 0 : index
    %c0_10 = arith.constant 0 : index
    %9 = vector.load %arg5[%c0_9, %c0_10] : memref<32x64xf32, #tpu.memory_space<vmem>>, vector<32x64xf32>
    %cst_11 = arith.constant dense<0.000000e+00> : vector<16x64xf32>
    %10 = tpu.matmul %3, %9, %cst_11 {dimension_numbers = #tpu.dot_dimension_numbers<[1], [0], [0], [1], [0, 0, 1, 1], [], []>} : vector<16x32xf32>, vector<32x64xf32>, vector<16x64xf32> -> vector<16x64xf32>
    %c0_12 = arith.constant 0 : index
    %c0_13 = arith.constant 0 : index
    %11 = vector.load %arg6[%c0_12, %c0_13] : memref<1x64xf32, #tpu.memory_space<vmem>>, vector<1x64xf32>
    %12 = vector.broadcast %11 : vector<1x64xf32> to vector<16x64xf32>
    %13 = arith.addf %10, %12 : vector<16x64xf32>
    %cst_14 = arith.constant 0.000000e+00 : f32
    %14 = vector.broadcast %cst_14 : f32 to vector<8x32xf32>
    %cst_15 = arith.constant 0.000000e+00 : f32
    %15 = vector.broadcast %cst_15 : f32 to vector<8x16xf32>
    %16 = vector.extract_strided_slice %8 {offsets = [0, 0], sizes = [8, 8], strides = [1, 1]} : vector<8x32xf32> to vector<8x8xf32>
    %17 = vector.extract_strided_slice %13 {offsets = [0, 0], sizes = [16, 8], strides = [1, 1]} : vector<16x64xf32> to vector<16x8xf32>
    %18 = vector.extract_strided_slice %13 {offsets = [0, 32], sizes = [16, 8], strides = [1, 1]} : vector<16x64xf32> to vector<16x8xf32>
    %cst_16 = arith.constant dense<0.000000e+00> : vector<8x16xf32>
    %19 = tpu.matmul %16, %17, %cst_16 {dimension_numbers = #tpu.dot_dimension_numbers<[1], [1], [0], [0], [0, 0, 1, 0], [], []>} : vector<8x8xf32>, vector<16x8xf32>, vector<8x16xf32> -> vector<8x16xf32>
    %cst_17 = arith.constant 0.353553385 : f32
    %20 = vector.broadcast %cst_17 : f32 to vector<8x16xf32>
    %21 = arith.mulf %19, %20 : vector<8x16xf32>
    %cst_18 = arith.constant dense<0xFF800000> : vector<8xf32>
    %22 = vector.multi_reduction <maximumf>, %21, %cst_18 [1] : vector<8x16xf32> to vector<8xf32>
    %23 = vector.shape_cast %22 : vector<8xf32> to vector<8x1xf32>
    %24 = vector.broadcast %23 : vector<8x1xf32> to vector<8x16xf32>
    %25 = arith.subf %21, %24 : vector<8x16xf32>
    %26 = math.exp %25 : vector<8x16xf32>
    %cst_19 = arith.constant dense<0.000000e+00> : vector<8xf32>
    %27 = vector.multi_reduction <add>, %26, %cst_19 [1] : vector<8x16xf32> to vector<8xf32>
    %28 = vector.shape_cast %27 : vector<8xf32> to vector<8x1xf32>
    %29 = tpu.reciprocal %28 {approx = true} : vector<8x1xf32> -> vector<8x1xf32>
    %cst_20 = arith.constant dense<0.000000e+00> : vector<8x8xf32>
    %30 = tpu.matmul %26, %18, %cst_20 {dimension_numbers = #tpu.dot_dimension_numbers<[1], [0], [0], [1], [0, 0, 1, 1], [], []>} : vector<8x16xf32>, vector<16x8xf32>, vector<8x8xf32> -> vector<8x8xf32>
    %31 = vector.broadcast %29 : vector<8x1xf32> to vector<8x8xf32>
    %32 = arith.mulf %30, %31 : vector<8x8xf32>
    %c0_21 = arith.constant 0 : index
    %c0_22 = arith.constant 0 : index
    %33 = vector.load %arg7[%c0_21, %c0_22] : memref<32x32xf32, #tpu.memory_space<vmem>>, vector<8x32xf32>
    %cst_23 = arith.constant dense<0.000000e+00> : vector<8x32xf32>
    %34 = tpu.matmul %32, %33, %cst_23 {dimension_numbers = #tpu.dot_dimension_numbers<[1], [0], [0], [1], [0, 0, 1, 1], [], []>} : vector<8x8xf32>, vector<8x32xf32>, vector<8x32xf32> -> vector<8x32xf32>
    %35 = arith.addf %14, %34 : vector<8x32xf32>
    %36 = vector.broadcast %29 : vector<8x1xf32> to vector<8x16xf32>
    %37 = arith.mulf %26, %36 : vector<8x16xf32>
    %38 = arith.addf %15, %37 : vector<8x16xf32>
    %39 = vector.extract_strided_slice %8 {offsets = [0, 8], sizes = [8, 8], strides = [1, 1]} : vector<8x32xf32> to vector<8x8xf32>
    %40 = vector.extract_strided_slice %13 {offsets = [0, 8], sizes = [16, 8], strides = [1, 1]} : vector<16x64xf32> to vector<16x8xf32>
    %41 = vector.extract_strided_slice %13 {offsets = [0, 40], sizes = [16, 8], strides = [1, 1]} : vector<16x64xf32> to vector<16x8xf32>
    %cst_24 = arith.constant dense<0.000000e+00> : vector<8x16xf32>
    %42 = tpu.matmul %39, %40, %cst_24 {dimension_numbers = #tpu.dot_dimension_numbers<[1], [1], [0], [0], [0, 0, 1, 0], [], []>} : vector<8x8xf32>, vector<16x8xf32>, vector<8x16xf32> -> vector<8x16xf32>
    %cst_25 = arith.constant 0.353553385 : f32
    %43 = vector.broadcast %cst_25 : f32 to vector<8x16xf32>
    %44 = arith.mulf %42, %43 : vector<8x16xf32>
    %cst_26 = arith.constant dense<0xFF800000> : vector<8xf32>
    %45 = vector.multi_reduction <maximumf>, %44, %cst_26 [1] : vector<8x16xf32> to vector<8xf32>
    %46 = vector.shape_cast %45 : vector<8xf32> to vector<8x1xf32>
    %47 = vector.broadcast %46 : vector<8x1xf32> to vector<8x16xf32>
    %48 = arith.subf %44, %47 : vector<8x16xf32>
    %49 = math.exp %48 : vector<8x16xf32>
    %cst_27 = arith.constant dense<0.000000e+00> : vector<8xf32>
    %50 = vector.multi_reduction <add>, %49, %cst_27 [1] : vector<8x16xf32> to vector<8xf32>
    %51 = vector.shape_cast %50 : vector<8xf32> to vector<8x1xf32>
    %52 = tpu.reciprocal %51 {approx = true} : vector<8x1xf32> -> vector<8x1xf32>
    %cst_28 = arith.constant dense<0.000000e+00> : vector<8x8xf32>
    %53 = tpu.matmul %49, %41, %cst_28 {dimension_numbers = #tpu.dot_dimension_numbers<[1], [0], [0], [1], [0, 0, 1, 1], [], []>} : vector<8x16xf32>, vector<16x8xf32>, vector<8x8xf32> -> vector<8x8xf32>
    %54 = vector.broadcast %52 : vector<8x1xf32> to vector<8x8xf32>
    %55 = arith.mulf %53, %54 : vector<8x8xf32>
    %c8 = arith.constant 8 : index
    %c0_29 = arith.constant 0 : index
    %56 = vector.load %arg7[%c8, %c0_29] : memref<32x32xf32, #tpu.memory_space<vmem>>, vector<8x32xf32>
    %cst_30 = arith.constant dense<0.000000e+00> : vector<8x32xf32>
    %57 = tpu.matmul %55, %56, %cst_30 {dimension_numbers = #tpu.dot_dimension_numbers<[1], [0], [0], [1], [0, 0, 1, 1], [], []>} : vector<8x8xf32>, vector<8x32xf32>, vector<8x32xf32> -> vector<8x32xf32>
    %58 = arith.addf %35, %57 : vector<8x32xf32>
    %59 = vector.broadcast %52 : vector<8x1xf32> to vector<8x16xf32>
    %60 = arith.mulf %49, %59 : vector<8x16xf32>
    %61 = arith.addf %38, %60 : vector<8x16xf32>
    %62 = vector.extract_strided_slice %8 {offsets = [0, 16], sizes = [8, 8], strides = [1, 1]} : vector<8x32xf32> to vector<8x8xf32>
    %63 = vector.extract_strided_slice %13 {offsets = [0, 16], sizes = [16, 8], strides = [1, 1]} : vector<16x64xf32> to vector<16x8xf32>
    %64 = vector.extract_strided_slice %13 {offsets = [0, 48], sizes = [16, 8], strides = [1, 1]} : vector<16x64xf32> to vector<16x8xf32>
    %cst_31 = arith.constant dense<0.000000e+00> : vector<8x16xf32>
    %65 = tpu.matmul %62, %63, %cst_31 {dimension_numbers = #tpu.dot_dimension_numbers<[1], [1], [0], [0], [0, 0, 1, 0], [], []>} : vector<8x8xf32>, vector<16x8xf32>, vector<8x16xf32> -> vector<8x16xf32>
    %cst_32 = arith.constant 0.353553385 : f32
    %66 = vector.broadcast %cst_32 : f32 to vector<8x16xf32>
    %67 = arith.mulf %65, %66 : vector<8x16xf32>
    %cst_33 = arith.constant dense<0xFF800000> : vector<8xf32>
    %68 = vector.multi_reduction <maximumf>, %67, %cst_33 [1] : vector<8x16xf32> to vector<8xf32>
    %69 = vector.shape_cast %68 : vector<8xf32> to vector<8x1xf32>
    %70 = vector.broadcast %69 : vector<8x1xf32> to vector<8x16xf32>
    %71 = arith.subf %67, %70 : vector<8x16xf32>
    %72 = math.exp %71 : vector<8x16xf32>
    %cst_34 = arith.constant dense<0.000000e+00> : vector<8xf32>
    %73 = vector.multi_reduction <add>, %72, %cst_34 [1] : vector<8x16xf32> to vector<8xf32>
    %74 = vector.shape_cast %73 : vector<8xf32> to vector<8x1xf32>
    %75 = tpu.reciprocal %74 {approx = true} : vector<8x1xf32> -> vector<8x1xf32>
    %cst_35 = arith.constant dense<0.000000e+00> : vector<8x8xf32>
    %76 = tpu.matmul %72, %64, %cst_35 {dimension_numbers = #tpu.dot_dimension_numbers<[1], [0], [0], [1], [0, 0, 1, 1], [], []>} : vector<8x16xf32>, vector<16x8xf32>, vector<8x8xf32> -> vector<8x8xf32>
    %77 = vector.broadcast %75 : vector<8x1xf32> to vector<8x8xf32>
    %78 = arith.mulf %76, %77 : vector<8x8xf32>
    %c16 = arith.constant 16 : index
    %c0_36 = arith.constant 0 : index
    %79 = vector.load %arg7[%c16, %c0_36] : memref<32x32xf32, #tpu.memory_space<vmem>>, vector<8x32xf32>
    %cst_37 = arith.constant dense<0.000000e+00> : vector<8x32xf32>
    %80 = tpu.matmul %78, %79, %cst_37 {dimension_numbers = #tpu.dot_dimension_numbers<[1], [0], [0], [1], [0, 0, 1, 1], [], []>} : vector<8x8xf32>, vector<8x32xf32>, vector<8x32xf32> -> vector<8x32xf32>
    %81 = arith.addf %58, %80 : vector<8x32xf32>
    %82 = vector.broadcast %75 : vector<8x1xf32> to vector<8x16xf32>
    %83 = arith.mulf %72, %82 : vector<8x16xf32>
    %84 = arith.addf %61, %83 : vector<8x16xf32>
    %85 = vector.extract_strided_slice %8 {offsets = [0, 24], sizes = [8, 8], strides = [1, 1]} : vector<8x32xf32> to vector<8x8xf32>
    %86 = vector.extract_strided_slice %13 {offsets = [0, 24], sizes = [16, 8], strides = [1, 1]} : vector<16x64xf32> to vector<16x8xf32>
    %87 = vector.extract_strided_slice %13 {offsets = [0, 56], sizes = [16, 8], strides = [1, 1]} : vector<16x64xf32> to vector<16x8xf32>
    %cst_38 = arith.constant dense<0.000000e+00> : vector<8x16xf32>
    %88 = tpu.matmul %85, %86, %cst_38 {dimension_numbers = #tpu.dot_dimension_numbers<[1], [1], [0], [0], [0, 0, 1, 0], [], []>} : vector<8x8xf32>, vector<16x8xf32>, vector<8x16xf32> -> vector<8x16xf32>
    %cst_39 = arith.constant 0.353553385 : f32
    %89 = vector.broadcast %cst_39 : f32 to vector<8x16xf32>
    %90 = arith.mulf %88, %89 : vector<8x16xf32>
    %cst_40 = arith.constant dense<0xFF800000> : vector<8xf32>
    %91 = vector.multi_reduction <maximumf>, %90, %cst_40 [1] : vector<8x16xf32> to vector<8xf32>
    %92 = vector.shape_cast %91 : vector<8xf32> to vector<8x1xf32>
    %93 = vector.broadcast %92 : vector<8x1xf32> to vector<8x16xf32>
    %94 = arith.subf %90, %93 : vector<8x16xf32>
    %95 = math.exp %94 : vector<8x16xf32>
    %cst_41 = arith.constant dense<0.000000e+00> : vector<8xf32>
    %96 = vector.multi_reduction <add>, %95, %cst_41 [1] : vector<8x16xf32> to vector<8xf32>
    %97 = vector.shape_cast %96 : vector<8xf32> to vector<8x1xf32>
    %98 = tpu.reciprocal %97 {approx = true} : vector<8x1xf32> -> vector<8x1xf32>
    %cst_42 = arith.constant dense<0.000000e+00> : vector<8x8xf32>
    %99 = tpu.matmul %95, %87, %cst_42 {dimension_numbers = #tpu.dot_dimension_numbers<[1], [0], [0], [1], [0, 0, 1, 1], [], []>} : vector<8x16xf32>, vector<16x8xf32>, vector<8x8xf32> -> vector<8x8xf32>
    %100 = vector.broadcast %98 : vector<8x1xf32> to vector<8x8xf32>
    %101 = arith.mulf %99, %100 : vector<8x8xf32>
    %c24 = arith.constant 24 : index
    %c0_43 = arith.constant 0 : index
    %102 = vector.load %arg7[%c24, %c0_43] : memref<32x32xf32, #tpu.memory_space<vmem>>, vector<8x32xf32>
    %cst_44 = arith.constant dense<0.000000e+00> : vector<8x32xf32>
    %103 = tpu.matmul %101, %102, %cst_44 {dimension_numbers = #tpu.dot_dimension_numbers<[1], [0], [0], [1], [0, 0, 1, 1], [], []>} : vector<8x8xf32>, vector<8x32xf32>, vector<8x32xf32> -> vector<8x32xf32>
    %104 = arith.addf %81, %103 : vector<8x32xf32>
    %105 = vector.broadcast %98 : vector<8x1xf32> to vector<8x16xf32>
    %106 = arith.mulf %95, %105 : vector<8x16xf32>
    %107 = arith.addf %84, %106 : vector<8x16xf32>
    %108 = arith.addf %1, %104 : vector<8x32xf32>
    %c0_45 = arith.constant 0 : index
    %c0_46 = arith.constant 0 : index
    %109 = vector.load %arg8[%c0_45, %c0_46] : memref<1x32xf32, #tpu.memory_space<vmem>>, vector<1x32xf32>
    %110 = vector.broadcast %109 : vector<1x32xf32> to vector<8x32xf32>
    %111 = arith.addf %108, %110 : vector<8x32xf32>
    %cst_47 = arith.constant dense<0.000000e+00> : vector<8xf32>
    %112 = vector.multi_reduction <add>, %111, %cst_47 [1] : vector<8x32xf32> to vector<8xf32>
    %113 = vector.shape_cast %112 : vector<8xf32> to vector<8x1xf32>
    %cst_48 = arith.constant 3.200000e+01 : f32
    %114 = vector.broadcast %cst_48 : f32 to vector<8x1xf32>
    %115 = arith.divf %113, %114 : vector<8x1xf32>
    %116 = vector.broadcast %115 : vector<8x1xf32> to vector<8x32xf32>
    %117 = arith.subf %111, %116 : vector<8x32xf32>
    %118 = arith.mulf %117, %117 : vector<8x32xf32>
    %cst_49 = arith.constant dense<0.000000e+00> : vector<8xf32>
    %119 = vector.multi_reduction <add>, %118, %cst_49 [1] : vector<8x32xf32> to vector<8xf32>
    %120 = vector.shape_cast %119 : vector<8xf32> to vector<8x1xf32>
    %cst_50 = arith.constant 3.200000e+01 : f32
    %121 = vector.broadcast %cst_50 : f32 to vector<8x1xf32>
    %122 = arith.divf %120, %121 : vector<8x1xf32>
    %cst_51 = arith.constant 9.99999974E-6 : f32
    %123 = vector.broadcast %cst_51 : f32 to vector<8x1xf32>
    %124 = arith.addf %122, %123 : vector<8x1xf32>
    %125 = math.rsqrt %124 : vector<8x1xf32>
    %126 = vector.broadcast %125 : vector<8x1xf32> to vector<8x32xf32>
    %127 = arith.mulf %117, %126 : vector<8x32xf32>
    %c0_52 = arith.constant 0 : index
    %c0_53 = arith.constant 0 : index
    %128 = vector.load %arg9[%c0_52, %c0_53] : memref<1x32xf32, #tpu.memory_space<vmem>>, vector<1x32xf32>
    %129 = vector.broadcast %128 : vector<1x32xf32> to vector<8x32xf32>
    %130 = arith.mulf %127, %129 : vector<8x32xf32>
    %c0_54 = arith.constant 0 : index
    %c0_55 = arith.constant 0 : index
    %131 = vector.load %arg10[%c0_54, %c0_55] : memref<1x32xf32, #tpu.memory_space<vmem>>, vector<1x32xf32>
    %132 = vector.broadcast %131 : vector<1x32xf32> to vector<8x32xf32>
    %133 = arith.addf %130, %132 : vector<8x32xf32>
    %c0_56 = arith.constant 0 : index
    %c0_57 = arith.constant 0 : index
    %c0_58 = arith.constant 0 : index
    %134 = vector.load %arg11[%c0_56, %c0_57, %c0_58] : memref<1x8x32xf32, #tpu.memory_space<vmem>>, vector<1x8x32xf32>
    %135 = vector.shape_cast %134 : vector<1x8x32xf32> to vector<8x32xf32>
    %136 = vector.shape_cast %133 : vector<8x32xf32> to vector<1x8x32xf32>
    tpu.vector_store %arg11[%c0_56, %c0_57, %c0_58], %136 {strides = array<i32>} : memref<1x8x32xf32, #tpu.memory_space<vmem>>, vector<1x8x32xf32>,
    %cst_59 = arith.constant 2.500000e-01 : f32
    %137 = vector.broadcast %cst_59 : f32 to vector<8x16xf32>
    %138 = arith.mulf %107, %137 : vector<8x16xf32>
    %c0_60 = arith.constant 0 : index
    %c0_61 = arith.constant 0 : index
    %c0_62 = arith.constant 0 : index
    %139 = vector.load %arg12[%c0_60, %c0_61, %c0_62] : memref<1x8x16xf32, #tpu.memory_space<vmem>>, vector<1x8x16xf32>
    %140 = vector.shape_cast %139 : vector<1x8x16xf32> to vector<8x16xf32>
    %141 = vector.shape_cast %138 : vector<8x16xf32> to vector<1x8x16xf32>
    tpu.vector_store %arg12[%c0_60, %c0_61, %c0_62], %141 {strides = array<i32>} : memref<1x8x16xf32, #tpu.memory_space<vmem>>, vector<1x8x16xf32>,
    return
  }
  func.func @transform_0(%arg0: i32) -> (i32, i32, i32) {
    %c0_i32 = arith.constant 0 : i32
    %c0_i32_0 = arith.constant 0 : i32
    %c0_i32_1 = arith.constant 0 : i32
    return %arg0, %c0_i32, %c0_i32_0 : i32, i32, i32
  }
  func.func @transform_1(%arg0: i32) -> (i32, i32, i32) {
    %c0_i32 = arith.constant 0 : i32
    %c0_i32_0 = arith.constant 0 : i32
    %c0_i32_1 = arith.constant 0 : i32
    return %arg0, %c0_i32, %c0_i32_0 : i32, i32, i32
  }
  func.func @transform_2(%arg0: i32) -> (i32, i32) {
    %c0_i32 = arith.constant 0 : i32
    %c0_i32_0 = arith.constant 0 : i32
    %c0_i32_1 = arith.constant 0 : i32
    return %c0_i32, %c0_i32_0 : i32, i32
  }
  func.func @transform_3(%arg0: i32) -> (i32, i32) {
    %c0_i32 = arith.constant 0 : i32
    %c0_i32_0 = arith.constant 0 : i32
    %c0_i32_1 = arith.constant 0 : i32
    return %c0_i32, %c0_i32_0 : i32, i32
  }
  func.func @transform_4(%arg0: i32) -> (i32, i32) {
    %c0_i32 = arith.constant 0 : i32
    %c0_i32_0 = arith.constant 0 : i32
    %c0_i32_1 = arith.constant 0 : i32
    return %c0_i32, %c0_i32_0 : i32, i32
  }
  func.func @transform_5(%arg0: i32) -> (i32, i32) {
    %c0_i32 = arith.constant 0 : i32
    %c0_i32_0 = arith.constant 0 : i32
    %c0_i32_1 = arith.constant 0 : i32
    return %c0_i32, %c0_i32_0 : i32, i32
  }
  func.func @transform_6(%arg0: i32) -> (i32, i32) {
    %c0_i32 = arith.constant 0 : i32
    %c0_i32_0 = arith.constant 0 : i32
    %c0_i32_1 = arith.constant 0 : i32
    return %c0_i32, %c0_i32_0 : i32, i32
  }
  func.func @transform_7(%arg0: i32) -> (i32, i32) {
    %c0_i32 = arith.constant 0 : i32
    %c0_i32_0 = arith.constant 0 : i32
    %c0_i32_1 = arith.constant 0 : i32
    return %c0_i32, %c0_i32_0 : i32, i32
  }
  func.func @transform_8(%arg0: i32) -> (i32, i32) {
    %c0_i32 = arith.constant 0 : i32
    %c0_i32_0 = arith.constant 0 : i32
    %c0_i32_1 = arith.constant 0 : i32
    return %c0_i32, %c0_i32_0 : i32, i32
  }
  func.func @transform_9(%arg0: i32) -> (i32, i32) {
    %c0_i32 = arith.constant 0 : i32
    %c0_i32_0 = arith.constant 0 : i32
    %c0_i32_1 = arith.constant 0 : i32
    return %c0_i32, %c0_i32_0 : i32, i32
  }
  func.func @transform_10(%arg0: i32) -> (i32, i32, i32) {
    %c0_i32 = arith.constant 0 : i32
    %c0_i32_0 = arith.constant 0 : i32
    %c0_i32_1 = arith.constant 0 : i32
    return %arg0, %c0_i32, %c0_i32_0 : i32, i32, i32
  }
  func.func @transform_11(%arg0: i32) -> (i32, i32, i32) {
    %c0_i32 = arith.constant 0 : i32
    %c0_i32_0 = arith.constant 0 : i32
    %c0_i32_1 = arith.constant 0 : i32
    return %arg0, %c0_i32, %c0_i32_0 : i32, i32, i32
  }
}

module attributes {stable_mosaic.version = 11 : i64} {
  func.func @_ffn_add_ln_kernel(%arg0: i32, %arg1: memref<16x32xf32, #tpu.memory_space<vmem>>, %arg2: memref<32x64xf32, #tpu.memory_space<vmem>>, %arg3: memref<1x64xf32, #tpu.memory_space<vmem>>, %arg4: memref<64x32xf32, #tpu.memory_space<vmem>>, %arg5: memref<1x32xf32, #tpu.memory_space<vmem>>, %arg6: memref<1x32xf32, #tpu.memory_space<vmem>>, %arg7: memref<1x32xf32, #tpu.memory_space<vmem>>, %arg8: memref<16x32xf32, #tpu.memory_space<vmem>>) attributes {dimension_semantics = [#tpu.dimension_semantics<parallel>], iteration_bounds = array<i64: 1>, scalar_prefetch = 0 : i64, scratch_operands = 0 : i64, tpu.core_type = #tpu.core_type<tc>, window_params = [{transform_indices = @transform_0, window_bounds = array<i64: 16, 32>}, {pipeline_mode = #tpu.pipeline_mode<synchronous>, transform_indices = @transform_1, window_bounds = array<i64: 32, 64>}, {pipeline_mode = #tpu.pipeline_mode<synchronous>, transform_indices = @transform_2, window_bounds = array<i64: 1, 64>}, {pipeline_mode = #tpu.pipeline_mode<synchronous>, transform_indices = @transform_3, window_bounds = array<i64: 64, 32>}, {pipeline_mode = #tpu.pipeline_mode<synchronous>, transform_indices = @transform_4, window_bounds = array<i64: 1, 32>}, {pipeline_mode = #tpu.pipeline_mode<synchronous>, transform_indices = @transform_5, window_bounds = array<i64: 1, 32>}, {pipeline_mode = #tpu.pipeline_mode<synchronous>, transform_indices = @transform_6, window_bounds = array<i64: 1, 32>}, {transform_indices = @transform_7, window_bounds = array<i64: 16, 32>}]} {
    %c0 = arith.constant 0 : index
    %c0_0 = arith.constant 0 : index
    %0 = vector.load %arg1[%c0, %c0_0] : memref<16x32xf32, #tpu.memory_space<vmem>>, vector<16x32xf32>
    %c0_1 = arith.constant 0 : index
    %c0_2 = arith.constant 0 : index
    %1 = vector.load %arg2[%c0_1, %c0_2] : memref<32x64xf32, #tpu.memory_space<vmem>>, vector<32x64xf32>
    %cst = arith.constant dense<0.000000e+00> : vector<16x64xf32>
    %2 = tpu.matmul %0, %1, %cst {dimension_numbers = #tpu.dot_dimension_numbers<[1], [0], [0], [1], [0, 0, 1, 1], [], []>} : vector<16x32xf32>, vector<32x64xf32>, vector<16x64xf32> -> vector<16x64xf32>
    %c0_3 = arith.constant 0 : index
    %c0_4 = arith.constant 0 : index
    %3 = vector.load %arg3[%c0_3, %c0_4] : memref<1x64xf32, #tpu.memory_space<vmem>>, vector<1x64xf32>
    %4 = vector.broadcast %3 : vector<1x64xf32> to vector<16x64xf32>
    %5 = arith.addf %2, %4 : vector<16x64xf32>
    %cst_5 = arith.constant 0.000000e+00 : f32
    %6 = vector.broadcast %cst_5 : f32 to vector<16x64xf32>
    %7 = arith.maximumf %5, %6 : vector<16x64xf32>
    %c0_6 = arith.constant 0 : index
    %c0_7 = arith.constant 0 : index
    %8 = vector.load %arg4[%c0_6, %c0_7] : memref<64x32xf32, #tpu.memory_space<vmem>>, vector<64x32xf32>
    %cst_8 = arith.constant dense<0.000000e+00> : vector<16x32xf32>
    %9 = tpu.matmul %7, %8, %cst_8 {dimension_numbers = #tpu.dot_dimension_numbers<[1], [0], [0], [1], [0, 0, 1, 1], [], []>} : vector<16x64xf32>, vector<64x32xf32>, vector<16x32xf32> -> vector<16x32xf32>
    %c0_9 = arith.constant 0 : index
    %c0_10 = arith.constant 0 : index
    %10 = vector.load %arg5[%c0_9, %c0_10] : memref<1x32xf32, #tpu.memory_space<vmem>>, vector<1x32xf32>
    %11 = vector.broadcast %10 : vector<1x32xf32> to vector<16x32xf32>
    %12 = arith.addf %9, %11 : vector<16x32xf32>
    %13 = arith.addf %0, %12 : vector<16x32xf32>
    %cst_11 = arith.constant dense<0.000000e+00> : vector<16xf32>
    %14 = vector.multi_reduction <add>, %13, %cst_11 [1] : vector<16x32xf32> to vector<16xf32>
    %15 = vector.shape_cast %14 : vector<16xf32> to vector<16x1xf32>
    %cst_12 = arith.constant 3.200000e+01 : f32
    %16 = vector.broadcast %cst_12 : f32 to vector<16x1xf32>
    %17 = arith.divf %15, %16 : vector<16x1xf32>
    %18 = vector.broadcast %17 : vector<16x1xf32> to vector<16x32xf32>
    %19 = arith.subf %13, %18 : vector<16x32xf32>
    %20 = arith.mulf %19, %19 : vector<16x32xf32>
    %cst_13 = arith.constant dense<0.000000e+00> : vector<16xf32>
    %21 = vector.multi_reduction <add>, %20, %cst_13 [1] : vector<16x32xf32> to vector<16xf32>
    %22 = vector.shape_cast %21 : vector<16xf32> to vector<16x1xf32>
    %cst_14 = arith.constant 3.200000e+01 : f32
    %23 = vector.broadcast %cst_14 : f32 to vector<16x1xf32>
    %24 = arith.divf %22, %23 : vector<16x1xf32>
    %cst_15 = arith.constant 9.99999974E-6 : f32
    %25 = vector.broadcast %cst_15 : f32 to vector<16x1xf32>
    %26 = arith.addf %24, %25 : vector<16x1xf32>
    %27 = math.rsqrt %26 : vector<16x1xf32>
    %28 = vector.broadcast %27 : vector<16x1xf32> to vector<16x32xf32>
    %29 = arith.mulf %19, %28 : vector<16x32xf32>
    %c0_16 = arith.constant 0 : index
    %c0_17 = arith.constant 0 : index
    %30 = vector.load %arg6[%c0_16, %c0_17] : memref<1x32xf32, #tpu.memory_space<vmem>>, vector<1x32xf32>
    %31 = vector.broadcast %30 : vector<1x32xf32> to vector<16x32xf32>
    %32 = arith.mulf %29, %31 : vector<16x32xf32>
    %c0_18 = arith.constant 0 : index
    %c0_19 = arith.constant 0 : index
    %33 = vector.load %arg7[%c0_18, %c0_19] : memref<1x32xf32, #tpu.memory_space<vmem>>, vector<1x32xf32>
    %34 = vector.broadcast %33 : vector<1x32xf32> to vector<16x32xf32>
    %35 = arith.addf %32, %34 : vector<16x32xf32>
    %c0_20 = arith.constant 0 : index
    %c0_21 = arith.constant 0 : index
    %36 = vector.load %arg8[%c0_20, %c0_21] : memref<16x32xf32, #tpu.memory_space<vmem>>, vector<16x32xf32>
    tpu.vector_store %arg8[%c0_20, %c0_21], %35 {strides = array<i32>} : memref<16x32xf32, #tpu.memory_space<vmem>>, vector<16x32xf32>,
    return
  }
  func.func @transform_0(%arg0: i32) -> (i32, i32) {
    %c0_i32 = arith.constant 0 : i32
    %c0_i32_0 = arith.constant 0 : i32
    return %arg0, %c0_i32 : i32, i32
  }
  func.func @transform_1(%arg0: i32) -> (i32, i32) {
    %c0_i32 = arith.constant 0 : i32
    %c0_i32_0 = arith.constant 0 : i32
    %c0_i32_1 = arith.constant 0 : i32
    return %c0_i32, %c0_i32_0 : i32, i32
  }
  func.func @transform_2(%arg0: i32) -> (i32, i32) {
    %c0_i32 = arith.constant 0 : i32
    %c0_i32_0 = arith.constant 0 : i32
    %c0_i32_1 = arith.constant 0 : i32
    return %c0_i32, %c0_i32_0 : i32, i32
  }
  func.func @transform_3(%arg0: i32) -> (i32, i32) {
    %c0_i32 = arith.constant 0 : i32
    %c0_i32_0 = arith.constant 0 : i32
    %c0_i32_1 = arith.constant 0 : i32
    return %c0_i32, %c0_i32_0 : i32, i32
  }
  func.func @transform_4(%arg0: i32) -> (i32, i32) {
    %c0_i32 = arith.constant 0 : i32
    %c0_i32_0 = arith.constant 0 : i32
    %c0_i32_1 = arith.constant 0 : i32
    return %c0_i32, %c0_i32_0 : i32, i32
  }
  func.func @transform_5(%arg0: i32) -> (i32, i32) {
    %c0_i32 = arith.constant 0 : i32
    %c0_i32_0 = arith.constant 0 : i32
    %c0_i32_1 = arith.constant 0 : i32
    return %c0_i32, %c0_i32_0 : i32, i32
  }
  func.func @transform_6(%arg0: i32) -> (i32, i32) {
    %c0_i32 = arith.constant 0 : i32
    %c0_i32_0 = arith.constant 0 : i32
    %c0_i32_1 = arith.constant 0 : i32
    return %c0_i32, %c0_i32_0 : i32, i32
  }
  func.func @transform_7(%arg0: i32) -> (i32, i32) {
    %c0_i32 = arith.constant 0 : i32
    %c0_i32_0 = arith.constant 0 : i32
    return %arg0, %c0_i32 : i32, i32
  }
}

</mosaic_0001>

<llo_original>
// kernel: transformer_decoder_layer.3
$region0: #{transformer_decoder_layer.3}
  #allocation0 [shape = 'u32[]', space=smem, size = 0x4, offset = 0x4, fixed_abs, tag = 'smem constant byte address 0x4 - core index']
  #allocation1 [shape = 'u32[144,128]{1,0:T(1,128)}', space=vmem, size = 0x12000, scoped, tag = 'internal scratch']
  %s0 = inlined_call_operand.hbm [shape: f32[2,8,32], index: 0, kind: input, shape index: {}, may-alias: {0,1}]
  %s1 = inlined_call_operand.hbm [shape: f32[2,8,32], index: 1, kind: input, shape index: {}, may-alias: {0,1}]
  %s2 = inlined_call_operand.hbm [shape: f32[32,32], index: 2, kind: input, shape index: {}]
  %s3 = inlined_call_operand.hbm [shape: f32[1,32], index: 3, kind: input, shape index: {}]
  %s4 = inlined_call_operand.hbm [shape: f32[32,64], index: 4, kind: input, shape index: {}]
  %s5 = inlined_call_operand.hbm [shape: f32[1,64], index: 5, kind: input, shape index: {}]
  %s6 = inlined_call_operand.hbm [shape: f32[32,32], index: 6, kind: input, shape index: {}]
  %s7 = inlined_call_operand.hbm [shape: f32[1,32], index: 7, kind: input, shape index: {}]
  %s8 = inlined_call_operand.hbm [shape: f32[1,32], index: 8, kind: input, shape index: {}]
  %s9 = inlined_call_operand.hbm [shape: f32[1,32], index: 9, kind: input, shape index: {}]
  %s10 = inlined_call_operand.hbm [shape: f32[2,8,32], index: 10, kind: output, shape index: {0}]
  %s11 = inlined_call_operand.hbm [shape: f32[2,8,8], index: 11, kind: output, shape index: {1}]
  %12 = xla_tuple %s10, %s11
  %s13 = sld [smem:[#allocation0]]
  $region121: #{transformer_decoder_layer.3} parent=0
    _
  %s15 = ssub.s32 1, %s13
  %s16 = scalar_select 0, %s15, %s13
  $region1: #{transformer_decoder_layer.3} parent=0
    #allocation2 [shape = 'u8[8192]{0}', space=vmem, size = 0x2000, scoped, tag = 'input window, operand 0']
    #allocation3 [shape = 's32[2]{0}', space=sflag, size = 0x8, scoped, tag = 'scoped memory for transformer_decoder_layer.3']
    #allocation4 [shape = 's32[2]{0}', space=sflag, size = 0x8, scoped, tag = 'scoped memory for transformer_decoder_layer.3']
    #allocation5 [shape = 'u8[8192]{0}', space=vmem, size = 0x2000, scoped, tag = 'input window, operand 1']
    #allocation6 [shape = 's32[2]{0}', space=sflag, size = 0x8, scoped, tag = 'scoped memory for transformer_decoder_layer.3']
    #allocation7 [shape = 'u8[16384]{0}', space=vmem, size = 0x4000, scoped, tag = 'input window, operand 2, single buffered']
    #allocation8 [shape = 'u8[512]{0}', space=vmem, size = 0x400, scoped, tag = 'input window, operand 3, single buffered']
    #allocation9 [shape = 's32[1]{0}', space=sflag, size = 0x4, scoped, tag = 'scoped memory for transformer_decoder_layer.3']
    #allocation10 [shape = 'u8[16384]{0}', space=vmem, size = 0x4000, scoped, tag = 'input window, operand 4, single buffered']
    #allocation11 [shape = 'u8[512]{0}', space=vmem, size = 0x400, scoped, tag = 'input window, operand 5, single buffered']
    #allocation12 [shape = 's32[1]{0}', space=sflag, size = 0x4, scoped, tag = 'scoped memory for transformer_decoder_layer.3']
    #allocation13 [shape = 'u8[16384]{0}', space=vmem, size = 0x4000, scoped, tag = 'input window, operand 6, single buffered']
    #allocation14 [shape = 'u8[512]{0}', space=vmem, size = 0x400, scoped, tag = 'input window, operand 7, single buffered']
    #allocation15 [shape = 's32[1]{0}', space=sflag, size = 0x4, scoped, tag = 'scoped memory for transformer_decoder_layer.3']
    #allocation16 [shape = 'u8[512]{0}', space=vmem, size = 0x400, scoped, tag = 'input window, operand 8, single buffered']
    #allocation17 [shape = 'u8[512]{0}', space=vmem, size = 0x400, scoped, tag = 'input window, operand 9, single buffered']
    #allocation18 [shape = 's32[1]{0}', space=sflag, size = 0x4, scoped, tag = 'scoped memory for transformer_decoder_layer.3']
    #allocation19 [shape = 'u8[8192]{0}', space=vmem, size = 0x2000, scoped, tag = 'output window, operand 0']
    #allocation20 [shape = 'u8[8192]{0}', space=vmem, size = 0x2000, scoped, tag = 'output window, operand 1']
    #allocation21 [shape = 's32[2]{0}', space=sflag, size = 0x8, scoped, tag = 'scoped memory for transformer_decoder_layer.3']
    %17 = vsyncpa [#allocation3], 0
    %s18 = scalar_lea.sflag [#allocation3], 1
    %19 = vsyncpa %s18, 0
    %20 = vsyncpa [#allocation6], 0
    %s21 = scalar_lea.sflag [#allocation6], 1
    %22 = vsyncpa %s21, 0
    %23 = vsyncpa [#allocation9], 0
    %24 = vsyncpa [#allocation12], 0
    %25 = vsyncpa [#allocation15], 0
    %26 = vsyncpa [#allocation18], 0
    %27 = vsyncpa [#allocation4], 0
    %s28 = scalar_lea.sflag [#allocation4], 1
    %29 = vsyncpa %s28, 0
    %30 = vsyncpa [#allocation21], 0
    %s31 = scalar_lea.sflag [#allocation21], 1
    %32 = vsyncpa %s31, 0
    loop: start=0, step=1, limit=4
    $region2: #{transformer_decoder_layer.3} parent=1 // loop_pre_header
      _
    $region3: #{transformer_decoder_layer.3} parent=1 // loop_header
      %s34 = sphi 0, %s38
      %p35 = scmp.ge.s32.totalorder %s34, 4
      %s44 = sphi 0, %s46
      %s47 = sphi 0, %s44
      %s48 = sphi 0, %s47
      %s64 = sphi 0, %s48
      %s70 = sphi 0, %s72
      %s73 = sphi 0, %s70
      %s74 = sphi 0, %s73
      %s90 = sphi 0, %s74
      %s94 = sphi 0, %s94
      %s96 = sphi 0, %s94
      %s97 = sphi 0, %s96
      %s111 = sphi 0, %s97
      %s115 = sphi 0, %s115
      %s117 = sphi 0, %s115
      %s118 = sphi 0, %s117
      %s132 = sphi 0, %s118
      %s136 = sphi 0, %s136
      %s138 = sphi 0, %s136
      %s139 = sphi 0, %s138
      %s153 = sphi 0, %s139
      %s157 = sphi 0, %s157
      %s159 = sphi 0, %s157
      %s160 = sphi 0, %s159
      %s174 = sphi 0, %s160
      %s178 = sphi 0, %s178
      %s180 = sphi 0, %s178
      %s181 = sphi 0, %s180
      %s195 = sphi 0, %s181
      %s199 = sphi 0, %s199
      %s201 = sphi 0, %s199
      %s202 = sphi 0, %s201
      %s216 = sphi 0, %s202
      %s220 = sphi 0, %s220
      %s222 = sphi 0, %s220
      %s223 = sphi 0, %s222
      %s237 = sphi 0, %s223
      %s241 = sphi 0, %s241
      %s243 = sphi 0, %s241
      %s244 = sphi 0, %s243
      %s258 = sphi 0, %s244
      %s264 = sphi 0, %s266
      %s267 = sphi 0, %s264
      %s268 = sphi 0, %s267
      %s284 = sphi 0, %s268
      %s290 = sphi 0, %s292
      %s293 = sphi 0, %s290
      %s294 = sphi 0, %s293
      %s310 = sphi 0, %s294
    $region4: #{transformer_decoder_layer.3} parent=1 // loop_header_branch
      %37 = sbr.rel (%p35) target = $region8
    $region5: #{transformer_decoder_layer.3} parent=1 // loop_body
      %s39 = ssub.s32 %s34, 1
      %s40 = ssub.s32 %s34, 2
      %s41 = sadd.s32 %s34, 1
      %s42 = ssub.s32 %s34, %s41
      %p43 = scmp.eq.s32.totalorder %s42, 0
      %s45 = sadd.s32 %s44, 1
      %s46 = scalar_select %p43, %s44, %s45
      %p49 = pneg %p43
      %p50 = scmp.eq.s32.totalorder %s34, 1
      %p51 = por %p49, %p50
      %p52 = scmp.ne.s32.totalorder %s44, %s47
      %p53 = scmp.eq.s32.totalorder %s34, 0
      %p54 = por %p52, %p53
      %p55 = scmp.ne.s32.totalorder %s44, %s47
      %p56 = scmp.eq.s32.totalorder %s39, 1
      %p57 = por %p55, %p56
      %p58 = scmp.ne.s32.totalorder %s47, %s48
      %p59 = scmp.eq.s32.totalorder %s39, 0
      %p60 = por %p58, %p59
      %p61 = scmp.ne.s32.totalorder %s47, %s48
      %p62 = scmp.eq.s32.totalorder %s40, 1
      %p63 = por %p61, %p62
      %p65 = scmp.ne.s32.totalorder %s48, %s64
      %p66 = scmp.eq.s32.totalorder %s40, 0
      %p67 = por %p65, %p66
      %s68 = ssub.s32 %s34, %s41
      %p69 = scmp.eq.s32.totalorder %s68, 0
      %s71 = sadd.s32 %s70, 1
      %s72 = scalar_select %p69, %s70, %s71
      %p75 = pneg %p69
      %p76 = scmp.eq.s32.totalorder %s34, 1
      %p77 = por %p75, %p76
      %p78 = scmp.ne.s32.totalorder %s70, %s73
      %p79 = scmp.eq.s32.totalorder %s34, 0
      %p80 = por %p78, %p79
      %p81 = scmp.ne.s32.totalorder %s70, %s73
      %p82 = scmp.eq.s32.totalorder %s39, 1
      %p83 = por %p81, %p82
      %p84 = scmp.ne.s32.totalorder %s73, %s74
      %p85 = scmp.eq.s32.totalorder %s39, 0
      %p86 = por %p84, %p85
      %p87 = scmp.ne.s32.totalorder %s73, %s74
      %p88 = scmp.eq.s32.totalorder %s40, 1
      %p89 = por %p87, %p88
      %p91 = scmp.ne.s32.totalorder %s74, %s90
      %p92 = scmp.eq.s32.totalorder %s40, 0
      %p93 = por %p91, %p92
      %s95 = sadd.s32 %s94, 1
      %p98 = scmp.eq.s32.totalorder %s34, 1
      %p99 = scmp.ne.s32.totalorder %s94, %s96
      %p100 = scmp.eq.s32.totalorder %s34, 0
      %p101 = por %p99, %p100
      %p102 = scmp.ne.s32.totalorder %s94, %s96
      %p103 = scmp.eq.s32.totalorder %s39, 1
      %p104 = por %p102, %p103
      %p105 = scmp.ne.s32.totalorder %s96, %s97
      %p106 = scmp.eq.s32.totalorder %s39, 0
      %p107 = por %p105, %p106
      %p108 = scmp.ne.s32.totalorder %s96, %s97
      %p109 = scmp.eq.s32.totalorder %s40, 1
      %p110 = por %p108, %p109
      %p112 = scmp.ne.s32.totalorder %s97, %s111
      %p113 = scmp.eq.s32.totalorder %s40, 0
      %p114 = por %p112, %p113
      %s116 = sadd.s32 %s115, 1
      %p119 = scmp.eq.s32.totalorder %s34, 1
      %p120 = scmp.ne.s32.totalorder %s115, %s117
      %p121 = scmp.eq.s32.totalorder %s34, 0
      %p122 = por %p120, %p121
      %p123 = scmp.ne.s32.totalorder %s115, %s117
      %p124 = scmp.eq.s32.totalorder %s39, 1
      %p125 = por %p123, %p124
      %p126 = scmp.ne.s32.totalorder %s117, %s118
      %p127 = scmp.eq.s32.totalorder %s39, 0
      %p128 = por %p126, %p127
      %p129 = scmp.ne.s32.totalorder %s117, %s118
      %p130 = scmp.eq.s32.totalorder %s40, 1
      %p131 = por %p129, %p130
      %p133 = scmp.ne.s32.totalorder %s118, %s132
      %p134 = scmp.eq.s32.totalorder %s40, 0
      %p135 = por %p133, %p134
      %s137 = sadd.s32 %s136, 1
      %p140 = scmp.eq.s32.totalorder %s34, 1
      %p141 = scmp.ne.s32.totalorder %s136, %s138
      %p142 = scmp.eq.s32.totalorder %s34, 0
      %p143 = por %p141, %p142
      %p144 = scmp.ne.s32.totalorder %s136, %s138
      %p145 = scmp.eq.s32.totalorder %s39, 1
      %p146 = por %p144, %p145
      %p147 = scmp.ne.s32.totalorder %s138, %s139
      %p148 = scmp.eq.s32.totalorder %s39, 0
      %p149 = por %p147, %p148
      %p150 = scmp.ne.s32.totalorder %s138, %s139
      %p151 = scmp.eq.s32.totalorder %s40, 1
      %p152 = por %p150, %p151
      %p154 = scmp.ne.s32.totalorder %s139, %s153
      %p155 = scmp.eq.s32.totalorder %s40, 0
      %p156 = por %p154, %p155
      %s158 = sadd.s32 %s157, 1
      %p161 = scmp.eq.s32.totalorder %s34, 1
      %p162 = scmp.ne.s32.totalorder %s157, %s159
      %p163 = scmp.eq.s32.totalorder %s34, 0
      %p164 = por %p162, %p163
      %p165 = scmp.ne.s32.totalorder %s157, %s159
      %p166 = scmp.eq.s32.totalorder %s39, 1
      %p167 = por %p165, %p166
      %p168 = scmp.ne.s32.totalorder %s159, %s160
      %p169 = scmp.eq.s32.totalorder %s39, 0
      %p170 = por %p168, %p169
      %p171 = scmp.ne.s32.totalorder %s159, %s160
      %p172 = scmp.eq.s32.totalorder %s40, 1
      %p173 = por %p171, %p172
      %p175 = scmp.ne.s32.totalorder %s160, %s174
      %p176 = scmp.eq.s32.totalorder %s40, 0
      %p177 = por %p175, %p176
      %s179 = sadd.s32 %s178, 1
      %p182 = scmp.eq.s32.totalorder %s34, 1
      %p183 = scmp.ne.s32.totalorder %s178, %s180
      %p184 = scmp.eq.s32.totalorder %s34, 0
      %p185 = por %p183, %p184
      %p186 = scmp.ne.s32.totalorder %s178, %s180
      %p187 = scmp.eq.s32.totalorder %s39, 1
      %p188 = por %p186, %p187
      %p189 = scmp.ne.s32.totalorder %s180, %s181
      %p190 = scmp.eq.s32.totalorder %s39, 0
      %p191 = por %p189, %p190
      %p192 = scmp.ne.s32.totalorder %s180, %s181
      %p193 = scmp.eq.s32.totalorder %s40, 1
      %p194 = por %p192, %p193
      %p196 = scmp.ne.s32.totalorder %s181, %s195
      %p197 = scmp.eq.s32.totalorder %s40, 0
      %p198 = por %p196, %p197
      %s200 = sadd.s32 %s199, 1
      %p203 = scmp.eq.s32.totalorder %s34, 1
      %p204 = scmp.ne.s32.totalorder %s199, %s201
      %p205 = scmp.eq.s32.totalorder %s34, 0
      %p206 = por %p204, %p205
      %p207 = scmp.ne.s32.totalorder %s199, %s201
      %p208 = scmp.eq.s32.totalorder %s39, 1
      %p209 = por %p207, %p208
      %p210 = scmp.ne.s32.totalorder %s201, %s202
      %p211 = scmp.eq.s32.totalorder %s39, 0
      %p212 = por %p210, %p211
      %p213 = scmp.ne.s32.totalorder %s201, %s202
      %p214 = scmp.eq.s32.totalorder %s40, 1
      %p215 = por %p213, %p214
      %p217 = scmp.ne.s32.totalorder %s202, %s216
      %p218 = scmp.eq.s32.totalorder %s40, 0
      %p219 = por %p217, %p218
      %s221 = sadd.s32 %s220, 1
      %p224 = scmp.eq.s32.totalorder %s34, 1
      %p225 = scmp.ne.s32.totalorder %s220, %s222
      %p226 = scmp.eq.s32.totalorder %s34, 0
      %p227 = por %p225, %p226
      %p228 = scmp.ne.s32.totalorder %s220, %s222
      %p229 = scmp.eq.s32.totalorder %s39, 1
      %p230 = por %p228, %p229
      %p231 = scmp.ne.s32.totalorder %s222, %s223
      %p232 = scmp.eq.s32.totalorder %s39, 0
      %p233 = por %p231, %p232
      %p234 = scmp.ne.s32.totalorder %s222, %s223
      %p235 = scmp.eq.s32.totalorder %s40, 1
      %p236 = por %p234, %p235
      %p238 = scmp.ne.s32.totalorder %s223, %s237
      %p239 = scmp.eq.s32.totalorder %s40, 0
      %p240 = por %p238, %p239
      %s242 = sadd.s32 %s241, 1
      %p245 = scmp.eq.s32.totalorder %s34, 1
      %p246 = scmp.ne.s32.totalorder %s241, %s243
      %p247 = scmp.eq.s32.totalorder %s34, 0
      %p248 = por %p246, %p247
      %p249 = scmp.ne.s32.totalorder %s241, %s243
      %p250 = scmp.eq.s32.totalorder %s39, 1
      %p251 = por %p249, %p250
      %p252 = scmp.ne.s32.totalorder %s243, %s244
      %p253 = scmp.eq.s32.totalorder %s39, 0
      %p254 = por %p252, %p253
      %p255 = scmp.ne.s32.totalorder %s243, %s244
      %p256 = scmp.eq.s32.totalorder %s40, 1
      %p257 = por %p255, %p256
      %p259 = scmp.ne.s32.totalorder %s244, %s258
      %p260 = scmp.eq.s32.totalorder %s40, 0
      %p261 = por %p259, %p260
      %s262 = ssub.s32 %s34, %s41
      %p263 = scmp.eq.s32.totalorder %s262, 0
      %s265 = sadd.s32 %s264, 1
      %s266 = scalar_select %p263, %s264, %s265
      %p269 = pneg %p263
      %p270 = scmp.eq.s32.totalorder %s34, 1
      %p271 = por %p269, %p270
      %p272 = scmp.ne.s32.totalorder %s264, %s267
      %p273 = scmp.eq.s32.totalorder %s34, 0
      %p274 = por %p272, %p273
      %p275 = scmp.ne.s32.totalorder %s264, %s267
      %p276 = scmp.eq.s32.totalorder %s39, 1
      %p277 = por %p275, %p276
      %p278 = scmp.ne.s32.totalorder %s267, %s268
      %p279 = scmp.eq.s32.totalorder %s39, 0
      %p280 = por %p278, %p279
      %p281 = scmp.ne.s32.totalorder %s267, %s268
      %p282 = scmp.eq.s32.totalorder %s40, 1
      %p283 = por %p281, %p282
      %p285 = scmp.ne.s32.totalorder %s268, %s284
      %p286 = scmp.eq.s32.totalorder %s40, 0
      %p287 = por %p285, %p286
      %s288 = ssub.s32 %s34, %s41
      %p289 = scmp.eq.s32.totalorder %s288, 0
      %s291 = sadd.s32 %s290, 1
      %s292 = scalar_select %p289, %s290, %s291
      %p295 = pneg %p289
      %p296 = scmp.eq.s32.totalorder %s34, 1
      %p297 = por %p295, %p296
      %p298 = scmp.ne.s32.totalorder %s290, %s293
      %p299 = scmp.eq.s32.totalorder %s34, 0
      %p300 = por %p298, %p299
      %p301 = scmp.ne.s32.totalorder %s290, %s293
      %p302 = scmp.eq.s32.totalorder %s39, 1
      %p303 = por %p301, %p302
      %p304 = scmp.ne.s32.totalorder %s293, %s294
      %p305 = scmp.eq.s32.totalorder %s39, 0
      %p306 = por %p304, %p305
      %p307 = scmp.ne.s32.totalorder %s293, %s294
      %p308 = scmp.eq.s32.totalorder %s40, 1
      %p309 = por %p307, %p308
      %p311 = scmp.ne.s32.totalorder %s294, %s310
      %p312 = scmp.eq.s32.totalorder %s40, 0
      %p313 = por %p311, %p312
      %p314 = scmp.le.s32.totalorder 1, %s34
      %p315 = scmp.lt.s32.totalorder %s34, 3
      %p316 = pnand %p314, %p315
      %p317 = pneg %p316
      // Predicated region
      $region9: #{transformer_decoder_layer.3} parent=5 // pred_check
        _
      $region10: #{transformer_decoder_layer.3} parent=5 // pred_check_branch
        %319 = sbr.rel (%p316) target = $region12
      $region11: #{transformer_decoder_layer.3} parent=5 // pred_region
        %s320 = ssub.s32 %s34, 1
        // Predicated region
        $region13: #{transformer_decoder_layer.3} parent=11 // pred_check
          %p321 = pneg %p107
        $region14: #{transformer_decoder_layer.3} parent=11 // pred_check_branch
          %323 = sbr.rel (%p321) target = $region16
        $region15: #{transformer_decoder_layer.3} parent=11 // pred_region
          %s325 = ssub.s32 512, 512
          %326 = vsyncadd [#allocation6], %s325
          %s327 = sshll.u32 [#allocation7], 4
          %s328 = int_to_ptr.vmem [resolvable:$true] %s327
          %333 = dma.hbm_to_vmem [thread:$0]  %s2, 512, %s328, [#allocation6], 128, 128, 8
        $region16: #{transformer_decoder_layer.3} parent=11 // pred_fallthru
          _
        // Predicated region
        $region17: #{transformer_decoder_layer.3} parent=11 // pred_check
          %p334 = pneg %p128
        $region18: #{transformer_decoder_layer.3} parent=11 // pred_check_branch
          %336 = sbr.rel (%p334) target = $region20
        $region19: #{transformer_decoder_layer.3} parent=11 // pred_region
          %s338 = ssub.s32 16, 16
          %339 = vsyncadd [#allocation9], %s338
          %s341 = sshll.u32 [#allocation8], 4
          %s342 = int_to_ptr.vmem [resolvable:$true] %s341
          %344 = dma.hbm_to_vmem [thread:$0]  %s3, 16, %s342, [#allocation9]
        $region20: #{transformer_decoder_layer.3} parent=11 // pred_fallthru
          _
        // Predicated region
        $region21: #{transformer_decoder_layer.3} parent=11 // pred_check
          %p345 = pneg %p149
        $region22: #{transformer_decoder_layer.3} parent=11 // pred_check_branch
          %347 = sbr.rel (%p345) target = $region24
        $region23: #{transformer_decoder_layer.3} parent=11 // pred_region
          %s349 = ssub.s32 512, 512
          %350 = vsyncadd [#allocation9], %s349
          %s351 = sshll.u32 [#allocation10], 4
          %s352 = int_to_ptr.vmem [resolvable:$true] %s351
          %357 = dma.hbm_to_vmem [thread:$0]  %s4, 512, %s352, [#allocation9], 128, 128, 8
        $region24: #{transformer_decoder_layer.3} parent=11 // pred_fallthru
          _
        // Predicated region
        $region25: #{transformer_decoder_layer.3} parent=11 // pred_check
          %p358 = pneg %p170
        $region26: #{transformer_decoder_layer.3} parent=11 // pred_check_branch
          %360 = sbr.rel (%p358) target = $region28
        $region27: #{transformer_decoder_layer.3} parent=11 // pred_region
          %s362 = ssub.s32 16, 16
          %363 = vsyncadd [#allocation12], %s362
          %s365 = sshll.u32 [#allocation11], 4
          %s366 = int_to_ptr.vmem [resolvable:$true] %s365
          %368 = dma.hbm_to_vmem [thread:$0]  %s5, 16, %s366, [#allocation12]
        $region28: #{transformer_decoder_layer.3} parent=11 // pred_fallthru
          _
        // Predicated region
        $region29: #{transformer_decoder_layer.3} parent=11 // pred_check
          %p369 = pneg %p191
        $region30: #{transformer_decoder_layer.3} parent=11 // pred_check_branch
          %371 = sbr.rel (%p369) target = $region32
        $region31: #{transformer_decoder_layer.3} parent=11 // pred_region
          %s373 = ssub.s32 512, 512
          %374 = vsyncadd [#allocation12], %s373
          %s375 = sshll.u32 [#allocation13], 4
          %s376 = int_to_ptr.vmem [resolvable:$true] %s375
          %381 = dma.hbm_to_vmem [thread:$0]  %s6, 512, %s376, [#allocation12], 128, 128, 8
        $region32: #{transformer_decoder_layer.3} parent=11 // pred_fallthru
          _
        // Predicated region
        $region33: #{transformer_decoder_layer.3} parent=11 // pred_check
          %p382 = pneg %p212
        $region34: #{transformer_decoder_layer.3} parent=11 // pred_check_branch
          %384 = sbr.rel (%p382) target = $region36
        $region35: #{transformer_decoder_layer.3} parent=11 // pred_region
          %s386 = ssub.s32 16, 16
          %387 = vsyncadd [#allocation15], %s386
          %s389 = sshll.u32 [#allocation14], 4
          %s390 = int_to_ptr.vmem [resolvable:$true] %s389
          %392 = dma.hbm_to_vmem [thread:$0]  %s7, 16, %s390, [#allocation15]
        $region36: #{transformer_decoder_layer.3} parent=11 // pred_fallthru
          _
        // Predicated region
        $region37: #{transformer_decoder_layer.3} parent=11 // pred_check
          %p393 = pneg %p233
        $region38: #{transformer_decoder_layer.3} parent=11 // pred_check_branch
          %395 = sbr.rel (%p393) target = $region40
        $region39: #{transformer_decoder_layer.3} parent=11 // pred_region
          %s397 = ssub.s32 16, 16
          %398 = vsyncadd [#allocation15], %s397
          %s400 = sshll.u32 [#allocation16], 4
          %s401 = int_to_ptr.vmem [resolvable:$true] %s400
          %403 = dma.hbm_to_vmem [thread:$0]  %s8, 16, %s401, [#allocation15]
        $region40: #{transformer_decoder_layer.3} parent=11 // pred_fallthru
          _
        // Predicated region
        $region41: #{transformer_decoder_layer.3} parent=11 // pred_check
          %p404 = pneg %p254
        $region42: #{transformer_decoder_layer.3} parent=11 // pred_check_branch
          %406 = sbr.rel (%p404) target = $region44
        $region43: #{transformer_decoder_layer.3} parent=11 // pred_region
          %s408 = ssub.s32 16, 16
          %409 = vsyncadd [#allocation18], %s408
          %s411 = sshll.u32 [#allocation17], 4
          %s412 = int_to_ptr.vmem [resolvable:$true] %s411
          %414 = dma.hbm_to_vmem [thread:$0]  %s9, 16, %s412, [#allocation18]
        $region44: #{transformer_decoder_layer.3} parent=11 // pred_fallthru
          _
      $region12: #{transformer_decoder_layer.3} parent=5 // pred_fallthru
        _
      %p415 = scmp.lt.s32.totalorder %s34, 2
      // Predicated region
      $region45: #{transformer_decoder_layer.3} parent=5 // pred_check
        %p416 = pneg %p415
      $region46: #{transformer_decoder_layer.3} parent=5 // pred_check_branch
        %418 = sbr.rel (%p416) target = $region48
      $region47: #{transformer_decoder_layer.3} parent=5 // pred_region
        // Predicated region
        $region49: #{transformer_decoder_layer.3} parent=47 // pred_check
          %p419 = pneg %p54
        $region50: #{transformer_decoder_layer.3} parent=47 // pred_check_branch
          %421 = sbr.rel (%p419) target = $region52
        $region51: #{transformer_decoder_layer.3} parent=47 // pred_region
          %s422 = sand.u32 %s44, 1
          %s423 = scalar_lea.sflag [#allocation3], %s422
          %s424 = sand.u32 %s44, 1
          %s425 = smul.addr %s424, 8
          %s426 = scalar_lea.vmem [#allocation2], %s425
          %s428 = ssub.s32 128, 128
          %429 = vsyncadd %s423, %s428
          %s430 = smul.addr %s34, 128
          %s431 = scalar_lea.hbm %s0, %s430
          %s433 = sshll.u32 %s426, 4
          %s434 = int_to_ptr.vmem [resolvable:$true] %s433
          %436 = dma.hbm_to_vmem [thread:$0]  %s431, 128, %s434, %s423
        $region52: #{transformer_decoder_layer.3} parent=47 // pred_fallthru
          _
        // Predicated region
        $region53: #{transformer_decoder_layer.3} parent=47 // pred_check
          %p437 = pneg %p80
        $region54: #{transformer_decoder_layer.3} parent=47 // pred_check_branch
          %439 = sbr.rel (%p437) target = $region56
        $region55: #{transformer_decoder_layer.3} parent=47 // pred_region
          %s440 = sand.u32 %s34, 1
          %s441 = scalar_lea.sflag [#allocation6], %s440
          %s442 = sand.u32 %s70, 1
          %s443 = smul.addr %s442, 8
          %s444 = scalar_lea.vmem [#allocation5], %s443
          %s446 = ssub.s32 128, 128
          %447 = vsyncadd %s441, %s446
          %s448 = smul.addr %s34, 128
          %s449 = scalar_lea.hbm %s1, %s448
          %s451 = sshll.u32 %s444, 4
          %s452 = int_to_ptr.vmem [resolvable:$true] %s451
          %454 = dma.hbm_to_vmem [thread:$0]  %s449, 128, %s452, %s441
        $region56: #{transformer_decoder_layer.3} parent=47 // pred_fallthru
          _
      $region48: #{transformer_decoder_layer.3} parent=5 // pred_fallthru
        _
      %p455 = scmp.le.s32.totalorder 1, %s34
      %p456 = scmp.lt.s32.totalorder %s34, 3
      %p457 = pnand %p455, %p456
      %p458 = pneg %p457
      // Predicated region
      $region57: #{transformer_decoder_layer.3} parent=5 // pred_check
        _
      $region58: #{transformer_decoder_layer.3} parent=5 // pred_check_branch
        %460 = sbr.rel (%p457) target = $region60
      $region59: #{transformer_decoder_layer.3} parent=5 // pred_region
        %s461 = ssub.s32 %s34, 1
        %s462 = sand.u32 %s47, 1
        %s463 = scalar_lea.sflag [#allocation3], %s462
        %s464 = sand.u32 %s47, 1
        %s465 = smul.addr %s464, 8
        %s466 = scalar_lea.vmem [#allocation2], %s465
        // Predicated region
        $region61: #{transformer_decoder_layer.3} parent=59 // pred_check
          %p467 = pneg %p60
        $region62: #{transformer_decoder_layer.3} parent=59 // pred_check_branch
          %469 = sbr.rel (%p467) target = $region64
        $region63: #{transformer_decoder_layer.3} parent=59 // pred_region
          %470 = dma.done %s463, 128
        $region64: #{transformer_decoder_layer.3} parent=59 // pred_fallthru
          _
        %s471 = sand.u32 %s39, 1
        %s472 = scalar_lea.sflag [#allocation6], %s471
        %s473 = sand.u32 %s73, 1
        %s474 = smul.addr %s473, 8
        %s475 = scalar_lea.vmem [#allocation5], %s474
        // Predicated region
        $region65: #{transformer_decoder_layer.3} parent=59 // pred_check
          %p476 = pneg %p86
        $region66: #{transformer_decoder_layer.3} parent=59 // pred_check_branch
          %478 = sbr.rel (%p476) target = $region68
        $region67: #{transformer_decoder_layer.3} parent=59 // pred_region
          %479 = dma.done %s472, 128
        $region68: #{transformer_decoder_layer.3} parent=59 // pred_fallthru
          _
        // Predicated region
        $region69: #{transformer_decoder_layer.3} parent=59 // pred_check
          %p480 = pneg %p107
        $region70: #{transformer_decoder_layer.3} parent=59 // pred_check_branch
          %482 = sbr.rel (%p480) target = $region72
        $region71: #{transformer_decoder_layer.3} parent=59 // pred_region
          %483 = dma.done [#allocation6], 512
        $region72: #{transformer_decoder_layer.3} parent=59 // pred_fallthru
          _
        // Predicated region
        $region73: #{transformer_decoder_layer.3} parent=59 // pred_check
          %p484 = pneg %p128
        $region74: #{transformer_decoder_layer.3} parent=59 // pred_check_branch
          %486 = sbr.rel (%p484) target = $region76
        $region75: #{transformer_decoder_layer.3} parent=59 // pred_region
          %487 = dma.done [#allocation9], 16
        $region76: #{transformer_decoder_layer.3} parent=59 // pred_fallthru
          _
        // Predicated region
        $region77: #{transformer_decoder_layer.3} parent=59 // pred_check
          %p488 = pneg %p149
        $region78: #{transformer_decoder_layer.3} parent=59 // pred_check_branch
          %490 = sbr.rel (%p488) target = $region80
        $region79: #{transformer_decoder_layer.3} parent=59 // pred_region
          %491 = dma.done [#allocation9], 512
        $region80: #{transformer_decoder_layer.3} parent=59 // pred_fallthru
          _
        // Predicated region
        $region81: #{transformer_decoder_layer.3} parent=59 // pred_check
          %p492 = pneg %p170
        $region82: #{transformer_decoder_layer.3} parent=59 // pred_check_branch
          %494 = sbr.rel (%p492) target = $region84
        $region83: #{transformer_decoder_layer.3} parent=59 // pred_region
          %495 = dma.done [#allocation12], 16
        $region84: #{transformer_decoder_layer.3} parent=59 // pred_fallthru
          _
        // Predicated region
        $region85: #{transformer_decoder_layer.3} parent=59 // pred_check
          %p496 = pneg %p191
        $region86: #{transformer_decoder_layer.3} parent=59 // pred_check_branch
          %498 = sbr.rel (%p496) target = $region88
        $region87: #{transformer_decoder_layer.3} parent=59 // pred_region
          %499 = dma.done [#allocation12], 512
        $region88: #{transformer_decoder_layer.3} parent=59 // pred_fallthru
          _
        // Predicated region
        $region89: #{transformer_decoder_layer.3} parent=59 // pred_check
          %p500 = pneg %p212
        $region90: #{transformer_decoder_layer.3} parent=59 // pred_check_branch
          %502 = sbr.rel (%p500) target = $region92
        $region91: #{transformer_decoder_layer.3} parent=59 // pred_region
          %503 = dma.done [#allocation15], 16
        $region92: #{transformer_decoder_layer.3} parent=59 // pred_fallthru
          _
        // Predicated region
        $region93: #{transformer_decoder_layer.3} parent=59 // pred_check
          %p504 = pneg %p233
        $region94: #{transformer_decoder_layer.3} parent=59 // pred_check_branch
          %506 = sbr.rel (%p504) target = $region96
        $region95: #{transformer_decoder_layer.3} parent=59 // pred_region
          %507 = dma.done [#allocation15], 16
        $region96: #{transformer_decoder_layer.3} parent=59 // pred_fallthru
          _
        // Predicated region
        $region97: #{transformer_decoder_layer.3} parent=59 // pred_check
          %p508 = pneg %p254
        $region98: #{transformer_decoder_layer.3} parent=59 // pred_check_branch
          %510 = sbr.rel (%p508) target = $region100
        $region99: #{transformer_decoder_layer.3} parent=59 // pred_region
          %511 = dma.done [#allocation18], 16
        $region100: #{transformer_decoder_layer.3} parent=59 // pred_fallthru
          _
        %s512 = sand.u32 %s47, 1
        %s513 = scalar_lea.sflag [#allocation3], %s512
        %s514 = sand.u32 %s47, 1
        %s515 = smul.addr %s514, 8
        %s516 = scalar_lea.vmem [#allocation2], %s515
        %p517 = pneg %p60
        %p518 = pneg %p57
        %s519 = sand.u32 %s39, 1
        %s520 = scalar_lea.sflag [#allocation6], %s519
        %s521 = sand.u32 %s73, 1
        %s522 = smul.addr %s521, 8
        %s523 = scalar_lea.vmem [#allocation5], %s522
        %p524 = pneg %p86
        %p525 = pneg %p83
        %p526 = pneg %p107
        %p527 = pneg %p104
        %p528 = pneg %p128
        %p529 = pneg %p125
        %p530 = pneg %p149
        %p531 = pneg %p146
        %p532 = pneg %p170
        %p533 = pneg %p167
        %p534 = pneg %p191
        %p535 = pneg %p188
        %p536 = pneg %p212
        %p537 = pneg %p209
        %p538 = pneg %p233
        %p539 = pneg %p230
        %p540 = pneg %p254
        %p541 = pneg %p251
        %p542 = pneg %p280
        %p543 = pneg %p277
        %s544 = sand.u32 %s267, 1
        %s545 = scalar_lea.sflag [#allocation4], %s544
        %s546 = sand.u32 %s267, 1
        %s547 = smul.addr %s546, 8
        %s548 = scalar_lea.vmem [#allocation19], %s547
        %p549 = pneg %p306
        %p550 = pneg %p303
        %s551 = sand.u32 %s293, 1
        %s552 = scalar_lea.sflag [#allocation21], %s551
        %s553 = sand.u32 %s293, 1
        %s554 = smul.addr %s553, 8
        %s555 = scalar_lea.vmem [#allocation20], %s554
        %v556 = vld [vmem:[%s466] sm:$0xff]
        %v557 = vld [vmem:[%s475] sm:$0xff]
        %v558 = vld [vmem:[#allocation7] sm:$0xff]
        %v559 = vld [vmem:[#allocation7 + $0x8] sm:$0xff]
        %v560 = vld [vmem:[#allocation7 + $0x10] sm:$0xff]
        %v561 = vld [vmem:[#allocation7 + $0x18] sm:$0xff]
        %v562 = vld [vmem:[#allocation8] sm:$0x1]
        %v564 = vlaneseq
        %v565 = vshrl.u32 %v564, 7
        %v566 = vsub.s32 0, %v565
        %v567 = vrot.slane %v562, %v566
        %vm569 = vcmask 261120
        %v571 = vsel %vm569, %v556, 0
        %573 = vmatprep.subr.mxu0 0.0
        %574 = vmatpush1.msra.mxu0 %v558
        %575 = vmatprep.subr.mxu0 0.0
        %576 = vmatpush1.msra.mxu0 %v559
        %577 = vmatprep.subr.mxu0 0.0
        %578 = vmatpush1.msra.mxu0 %v560
        %579 = vmatprep.subr.mxu0 0.0
        %580 = vmatpush1.msra.mxu0 %v561
        %581 = vmatprep.subr.mxu0 0.0
        %582 = vmatpush1.msra.mxu0 0.0
        %583 = vmatprep.subr.mxu0 0.0
        %584 = vmatpush1.msra.mxu0 0.0
        %585 = vmatprep.subr.mxu0 0.0
        %586 = vmatpush1.msra.mxu0 0.0
        %587 = vmatprep.subr.mxu0 0.0
        %588 = vmatpush1.msra.mxu0 0.0
        %589 = vmatprep.subr.mxu0 0.0
        %590 = vmatpush1.msra.mxu0 0.0
        %591 = vmatprep.subr.mxu0 0.0
        %592 = vmatpush1.msra.mxu0 0.0
        %593 = vmatprep.subr.mxu0 0.0
        %594 = vmatpush1.msra.mxu0 0.0
        %595 = vmatprep.subr.mxu0 0.0
        %596 = vmatpush1.msra.mxu0 0.0
        %597 = vmatprep.subr.mxu0 0.0
        %598 = vmatpush1.msra.mxu0 0.0
        %599 = vmatprep.subr.mxu0 0.0
        %600 = vmatpush1.msra.mxu0 0.0
        %601 = vmatprep.subr.mxu0 0.0
        %602 = vmatpush1.msra.mxu0 0.0
        %603 = vmatprep.subr.mxu0 0.0
        %604 = vmatpush1.msra.mxu0 0.0
        %605 = vmatprep.subr.mxu0 0.0
        %606 = vmatpush1.msra.mxu0 0.0
        %607 = vmatprep.subr.mxu0 0.0
        %608 = vmatpush1.msra.mxu0 0.0
        %609 = vmatprep.subr.mxu0 0.0
        %610 = vmatpush1.msra.mxu0 0.0
        %611 = vmatprep.subr.mxu0 0.0
        %612 = vmatpush1.msra.mxu0 0.0
        %613 = vmatprep.subr.mxu0 0.0
        %614 = vmatpush1.msra.mxu0 0.0
        %615 = vmatprep.subr.mxu0 0.0
        %616 = vmatpush1.msra.mxu0 0.0
        %617 = vmatprep.subr.mxu0 0.0
        %618 = vmatpush1.msra.mxu0 0.0
        %619 = vmatprep.subr.mxu0 0.0
        %620 = vmatpush1.msra.mxu0 0.0
        %621 = vmatprep.subr.mxu0 0.0
        %622 = vmatpush1.msra.mxu0 0.0
        %623 = vmatprep.subr.mxu0 0.0
        %624 = vmatpush1.msra.mxu0 0.0
        %625 = vmatprep.subr.mxu0 0.0
        %626 = vmatpush1.msra.mxu0 0.0
        %627 = vmatprep.subr.mxu0 0.0
        %628 = vmatpush1.msra.mxu0 0.0
        %629 = vmatprep.subr.mxu0 0.0
        %630 = vmatpush1.msra.mxu0 0.0
        %631 = vmatprep.subr.mxu0 0.0
        %632 = vmatpush1.msra.mxu0 0.0
        %633 = vmatprep.subr.mxu0 0.0
        %634 = vmatpush1.msra.mxu0 0.0
        %635 = vmatprep.subr.mxu0 0.0
        %636 = vmatpush1.msra.mxu0 0.0
        %637 = vmatprep.mubr.f32.mxu0 0.0
        %638 = vmatmul.mubr.f32.gmra.mrb[0].mxu0 %v571
        %v639 = vpop.f32.mrb[0].mxu0
        %v640 = vadd.f32 %v567, %v639
        %v641 = vpop.f32.mrb[0].mxu0
        %642 = vdwg.mxu0
        %v643 = vld [vmem:[#allocation10] sm:$0xff]
        %v644 = vld [vmem:[#allocation10 + $0x8] sm:$0xff]
        %v645 = vld [vmem:[#allocation10 + $0x10] sm:$0xff]
        %v646 = vld [vmem:[#allocation10 + $0x18] sm:$0xff]
        %v647 = vld [vmem:[#allocation11] sm:$0x1]
        %v649 = vlaneseq
        %v650 = vshrl.u32 %v649, 7
        %v651 = vsub.s32 0, %v650
        %v652 = vrot.slane %v647, %v651
        %v655 = vsel %vm569, %v557, 0
        %657 = vmatprep.subr.mxu0 0.0
        %658 = vmatpush1.msra.mxu0 %v643
        %659 = vmatprep.subr.mxu0 0.0
        %660 = vmatpush1.msra.mxu0 %v644
        %661 = vmatprep.subr.mxu0 0.0
        %662 = vmatpush1.msra.mxu0 %v645
        %663 = vmatprep.subr.mxu0 0.0
        %664 = vmatpush1.msra.mxu0 %v646
        %665 = vmatprep.subr.mxu0 0.0
        %666 = vmatpush1.msra.mxu0 0.0
        %667 = vmatprep.subr.mxu0 0.0
        %668 = vmatpush1.msra.mxu0 0.0
        %669 = vmatprep.subr.mxu0 0.0
        %670 = vmatpush1.msra.mxu0 0.0
        %671 = vmatprep.subr.mxu0 0.0
        %672 = vmatpush1.msra.mxu0 0.0
        %673 = vmatprep.subr.mxu0 0.0
        %674 = vmatpush1.msra.mxu0 0.0
        %675 = vmatprep.subr.mxu0 0.0
        %676 = vmatpush1.msra.mxu0 0.0
        %677 = vmatprep.subr.mxu0 0.0
        %678 = vmatpush1.msra.mxu0 0.0
        %679 = vmatprep.subr.mxu0 0.0
        %680 = vmatpush1.msra.mxu0 0.0
        %681 = vmatprep.subr.mxu0 0.0
        %682 = vmatpush1.msra.mxu0 0.0
        %683 = vmatprep.subr.mxu0 0.0
        %684 = vmatpush1.msra.mxu0 0.0
        %685 = vmatprep.subr.mxu0 0.0
        %686 = vmatpush1.msra.mxu0 0.0
        %687 = vmatprep.subr.mxu0 0.0
        %688 = vmatpush1.msra.mxu0 0.0
        %689 = vmatprep.subr.mxu0 0.0
        %690 = vmatpush1.msra.mxu0 0.0
        %691 = vmatprep.subr.mxu0 0.0
        %692 = vmatpush1.msra.mxu0 0.0
        %693 = vmatprep.subr.mxu0 0.0
        %694 = vmatpush1.msra.mxu0 0.0
        %695 = vmatprep.subr.mxu0 0.0
        %696 = vmatpush1.msra.mxu0 0.0
        %697 = vmatprep.subr.mxu0 0.0
        %698 = vmatpush1.msra.mxu0 0.0
        %699 = vmatprep.subr.mxu0 0.0
        %700 = vmatpush1.msra.mxu0 0.0
        %701 = vmatprep.subr.mxu0 0.0
        %702 = vmatpush1.msra.mxu0 0.0
        %703 = vmatprep.subr.mxu0 0.0
        %704 = vmatpush1.msra.mxu0 0.0
        %705 = vmatprep.subr.mxu0 0.0
        %706 = vmatpush1.msra.mxu0 0.0
        %707 = vmatprep.subr.mxu0 0.0
        %708 = vmatpush1.msra.mxu0 0.0
        %709 = vmatprep.subr.mxu0 0.0
        %710 = vmatpush1.msra.mxu0 0.0
        %711 = vmatprep.subr.mxu0 0.0
        %712 = vmatpush1.msra.mxu0 0.0
        %713 = vmatprep.subr.mxu0 0.0
        %714 = vmatpush1.msra.mxu0 0.0
        %715 = vmatprep.subr.mxu0 0.0
        %716 = vmatpush1.msra.mxu0 0.0
        %717 = vmatprep.subr.mxu0 0.0
        %718 = vmatpush1.msra.mxu0 0.0
        %719 = vmatprep.subr.mxu0 0.0
        %720 = vmatpush1.msra.mxu0 0.0
        %721 = vmatprep.mubr.f32.mxu0 0.0
        %722 = vmatmul.mubr.f32.gmra.mrb[0].mxu0 %v655
        %v723 = vpop.f32.mrb[0].mxu0
        %v724 = vadd.f32 %v652, %v723
        %v725 = vpop.f32.mrb[0].mxu0
        %726 = vdwg.mxu0
        %vm727 = vcmask 64512
        %v729 = vsel %vm727, %v640, 0
        %v732 = vsel %vm727, %v724, 0
        %734 = vmatprep.subr.mxu0 0.0
        %735 = vmatpush1.xpose.msra.mxu0 %v732
        %736 = vmatprep.subr.mxu0 0.0
        %737 = vmatpush1.xpose.msra.mxu0 0.0
        %738 = vmatprep.subr.mxu0 0.0
        %739 = vmatpush1.xpose.msra.mxu0 0.0
        %740 = vmatprep.subr.mxu0 0.0
        %741 = vmatpush1.xpose.msra.mxu0 0.0
        %742 = vmatprep.subr.mxu0 0.0
        %743 = vmatpush1.xpose.msra.mxu0 0.0
        %744 = vmatprep.subr.mxu0 0.0
        %745 = vmatpush1.xpose.msra.mxu0 0.0
        %746 = vmatprep.subr.mxu0 0.0
        %747 = vmatpush1.xpose.msra.mxu0 0.0
        %748 = vmatprep.subr.mxu0 0.0
        %749 = vmatpush1.xpose.msra.mxu0 0.0
        %750 = vmatprep.subr.mxu0 0.0
        %751 = vmatpush1.xpose.msra.mxu0 0.0
        %752 = vmatprep.subr.mxu0 0.0
        %753 = vmatpush1.xpose.msra.mxu0 0.0
        %754 = vmatprep.subr.mxu0 0.0
        %755 = vmatpush1.xpose.msra.mxu0 0.0
        %756 = vmatprep.subr.mxu0 0.0
        %757 = vmatpush1.xpose.msra.mxu0 0.0
        %758 = vmatprep.subr.mxu0 0.0
        %759 = vmatpush1.xpose.msra.mxu0 0.0
        %760 = vmatprep.subr.mxu0 0.0
        %761 = vmatpush1.xpose.msra.mxu0 0.0
        %762 = vmatprep.subr.mxu0 0.0
        %763 = vmatpush1.xpose.msra.mxu0 0.0
        %764 = vmatprep.subr.mxu0 0.0
        %765 = vmatpush1.xpose.msra.mxu0 0.0
        %766 = vmatprep.subr.mxu0 0.0
        %767 = vmatpush1.xpose.msra.mxu0 0.0
        %768 = vmatprep.subr.mxu0 0.0
        %769 = vmatpush1.xpose.msra.mxu0 0.0
        %770 = vmatprep.subr.mxu0 0.0
        %771 = vmatpush1.xpose.msra.mxu0 0.0
        %772 = vmatprep.subr.mxu0 0.0
        %773 = vmatpush1.xpose.msra.mxu0 0.0
        %774 = vmatprep.subr.mxu0 0.0
        %775 = vmatpush1.xpose.msra.mxu0 0.0
        %776 = vmatprep.subr.mxu0 0.0
        %777 = vmatpush1.xpose.msra.mxu0 0.0
        %778 = vmatprep.subr.mxu0 0.0
        %779 = vmatpush1.xpose.msra.mxu0 0.0
        %780 = vmatprep.subr.mxu0 0.0
        %781 = vmatpush1.xpose.msra.mxu0 0.0
        %782 = vmatprep.subr.mxu0 0.0
        %783 = vmatpush1.xpose.msra.mxu0 0.0
        %784 = vmatprep.subr.mxu0 0.0
        %785 = vmatpush1.xpose.msra.mxu0 0.0
        %786 = vmatprep.subr.mxu0 0.0
        %787 = vmatpush1.xpose.msra.mxu0 0.0
        %788 = vmatprep.subr.mxu0 0.0
        %789 = vmatpush1.xpose.msra.mxu0 0.0
        %790 = vmatprep.subr.mxu0 0.0
        %791 = vmatpush1.xpose.msra.mxu0 0.0
        %792 = vmatprep.subr.mxu0 0.0
        %793 = vmatpush1.xpose.msra.mxu0 0.0
        %794 = vmatprep.subr.mxu0 0.0
        %795 = vmatpush1.xpose.msra.mxu0 0.0
        %796 = vmatprep.subr.mxu0 0.0
        %797 = vmatpush1.xpose.msra.mxu0 0.0
        %798 = vmatprep.mubr.f32.mxu0 0.0
        %799 = vmatmul.mubr.f32.gmra.mrb[0].mxu0 %v729
        %v800 = vpop.f32.mrb[0].mxu0
        %v801 = vadd.f32 0.0, %v800
        %v802 = vpop.f32.mrb[0].mxu0
        %803 = vdwg.mxu0
        %v804 = vmul.f32 %v801, 0.35355338
        %v805 = vsel %vm727, %v804, -inf
        %806 = vmax.xlane.f32.xlu0 %v805
        %v807 = vpop.xlane.xlu0 %806
        %v808 = vsub.f32 %v804, %v807
        %v809 = vmul.f32 %v808, 1.442695
        %v810 = vpow.pop %v809
        %v811 = vsel %vm727, %v810, 0.0
        %812 = vadd.xlane.f32.xlu0 %v811
        %v813 = vpop.xlane.xlu0 %812
        %v814 = vrcp.pop %v813
        %815 = vrot.lane.b32.xlu0 %v724, 96
        %v816 = vpop.permute.xlu0 %815
        %v819 = vsel %vm727, %v810, 0
        %821 = vmatprep.subr.mxu0 0.0
        %822 = vmatpush1.msra.mxu0 %v816
        %823 = vmatprep.subr.mxu0 0.0
        %824 = vmatpush1.msra.mxu0 0.0
        %825 = vmatprep.subr.mxu0 0.0
        %826 = vmatpush1.msra.mxu0 0.0
        %827 = vmatprep.subr.mxu0 0.0
        %828 = vmatpush1.msra.mxu0 0.0
        %829 = vmatprep.subr.mxu0 0.0
        %830 = vmatpush1.msra.mxu0 0.0
        %831 = vmatprep.subr.mxu0 0.0
        %832 = vmatpush1.msra.mxu0 0.0
        %833 = vmatprep.subr.mxu0 0.0
        %834 = vmatpush1.msra.mxu0 0.0
        %835 = vmatprep.subr.mxu0 0.0
        %836 = vmatpush1.msra.mxu0 0.0
        %837 = vmatprep.subr.mxu0 0.0
        %838 = vmatpush1.msra.mxu0 0.0
        %839 = vmatprep.subr.mxu0 0.0
        %840 = vmatpush1.msra.mxu0 0.0
        %841 = vmatprep.subr.mxu0 0.0
        %842 = vmatpush1.msra.mxu0 0.0
        %843 = vmatprep.subr.mxu0 0.0
        %844 = vmatpush1.msra.mxu0 0.0
        %845 = vmatprep.subr.mxu0 0.0
        %846 = vmatpush1.msra.mxu0 0.0
        %847 = vmatprep.subr.mxu0 0.0
        %848 = vmatpush1.msra.mxu0 0.0
        %849 = vmatprep.subr.mxu0 0.0
        %850 = vmatpush1.msra.mxu0 0.0
        %851 = vmatprep.subr.mxu0 0.0
        %852 = vmatpush1.msra.mxu0 0.0
        %853 = vmatprep.subr.mxu0 0.0
        %854 = vmatpush1.msra.mxu0 0.0
        %855 = vmatprep.subr.mxu0 0.0
        %856 = vmatpush1.msra.mxu0 0.0
        %857 = vmatprep.subr.mxu0 0.0
        %858 = vmatpush1.msra.mxu0 0.0
        %859 = vmatprep.subr.mxu0 0.0
        %860 = vmatpush1.msra.mxu0 0.0
        %861 = vmatprep.subr.mxu0 0.0
        %862 = vmatpush1.msra.mxu0 0.0
        %863 = vmatprep.subr.mxu0 0.0
        %864 = vmatpush1.msra.mxu0 0.0
        %865 = vmatprep.subr.mxu0 0.0
        %866 = vmatpush1.msra.mxu0 0.0
        %867 = vmatprep.subr.mxu0 0.0
        %868 = vmatpush1.msra.mxu0 0.0
        %869 = vmatprep.subr.mxu0 0.0
        %870 = vmatpush1.msra.mxu0 0.0
        %871 = vmatprep.subr.mxu0 0.0
        %872 = vmatpush1.msra.mxu0 0.0
        %873 = vmatprep.subr.mxu0 0.0
        %874 = vmatpush1.msra.mxu0 0.0
        %875 = vmatprep.subr.mxu0 0.0
        %876 = vmatpush1.msra.mxu0 0.0
        %877 = vmatprep.subr.mxu0 0.0
        %878 = vmatpush1.msra.mxu0 0.0
        %879 = vmatprep.subr.mxu0 0.0
        %880 = vmatpush1.msra.mxu0 0.0
        %881 = vmatprep.subr.mxu0 0.0
        %882 = vmatpush1.msra.mxu0 0.0
        %883 = vmatprep.subr.mxu0 0.0
        %884 = vmatpush1.msra.mxu0 0.0
        %885 = vmatprep.mubr.f32.mxu0 0.0
        %886 = vmatmul.mubr.f32.gmra.mrb[0].mxu0 %v819
        %v887 = vpop.f32.mrb[0].mxu0
        %v888 = vadd.f32 0.0, %v887
        %v889 = vpop.f32.mrb[0].mxu0
        %890 = vdwg.mxu0
        %v891 = vmul.f32 %v888, %v814
        %v892 = vld [vmem:[#allocation13] sm:$0xff]
        %v893 = vmul.f32 %v810, %v814
        %v894 = vadd.f32 %v893, 0.0
        %895 = vrot.lane.b32.xlu0 %v640, 120
        %v896 = vpop.permute.xlu0 %895
        %897 = vrot.lane.b32.xlu0 %v724, 120
        %v898 = vpop.permute.xlu0 %897
        %v899 = vsel %vm727, %v896, 0
        %v901 = vsel %vm727, %v898, 0
        %903 = vmatprep.subr.mxu0 0.0
        %904 = vmatpush1.xpose.msra.mxu0 %v901
        %905 = vmatprep.subr.mxu0 0.0
        %906 = vmatpush1.xpose.msra.mxu0 0.0
        %907 = vmatprep.subr.mxu0 0.0
        %908 = vmatpush1.xpose.msra.mxu0 0.0
        %909 = vmatprep.subr.mxu0 0.0
        %910 = vmatpush1.xpose.msra.mxu0 0.0
        %911 = vmatprep.subr.mxu0 0.0
        %912 = vmatpush1.xpose.msra.mxu0 0.0
        %913 = vmatprep.subr.mxu0 0.0
        %914 = vmatpush1.xpose.msra.mxu0 0.0
        %915 = vmatprep.subr.mxu0 0.0
        %916 = vmatpush1.xpose.msra.mxu0 0.0
        %917 = vmatprep.subr.mxu0 0.0
        %918 = vmatpush1.xpose.msra.mxu0 0.0
        %919 = vmatprep.subr.mxu0 0.0
        %920 = vmatpush1.xpose.msra.mxu0 0.0
        %921 = vmatprep.subr.mxu0 0.0
        %922 = vmatpush1.xpose.msra.mxu0 0.0
        %923 = vmatprep.subr.mxu0 0.0
        %924 = vmatpush1.xpose.msra.mxu0 0.0
        %925 = vmatprep.subr.mxu0 0.0
        %926 = vmatpush1.xpose.msra.mxu0 0.0
        %927 = vmatprep.subr.mxu0 0.0
        %928 = vmatpush1.xpose.msra.mxu0 0.0
        %929 = vmatprep.subr.mxu0 0.0
        %930 = vmatpush1.xpose.msra.mxu0 0.0
        %931 = vmatprep.subr.mxu0 0.0
        %932 = vmatpush1.xpose.msra.mxu0 0.0
        %933 = vmatprep.subr.mxu0 0.0
        %934 = vmatpush1.xpose.msra.mxu0 0.0
        %935 = vmatprep.subr.mxu0 0.0
        %936 = vmatpush1.xpose.msra.mxu0 0.0
        %937 = vmatprep.subr.mxu0 0.0
        %938 = vmatpush1.xpose.msra.mxu0 0.0
        %939 = vmatprep.subr.mxu0 0.0
        %940 = vmatpush1.xpose.msra.mxu0 0.0
        %941 = vmatprep.subr.mxu0 0.0
        %942 = vmatpush1.xpose.msra.mxu0 0.0
        %943 = vmatprep.subr.mxu0 0.0
        %944 = vmatpush1.xpose.msra.mxu0 0.0
        %945 = vmatprep.subr.mxu0 0.0
        %946 = vmatpush1.xpose.msra.mxu0 0.0
        %947 = vmatprep.subr.mxu0 0.0
        %948 = vmatpush1.xpose.msra.mxu0 0.0
        %949 = vmatprep.subr.mxu0 0.0
        %950 = vmatpush1.xpose.msra.mxu0 0.0
        %951 = vmatprep.subr.mxu0 0.0
        %952 = vmatpush1.xpose.msra.mxu0 0.0
        %953 = vmatprep.subr.mxu0 0.0
        %954 = vmatpush1.xpose.msra.mxu0 0.0
        %955 = vmatprep.subr.mxu0 0.0
        %956 = vmatpush1.xpose.msra.mxu0 0.0
        %957 = vmatprep.subr.mxu0 0.0
        %958 = vmatpush1.xpose.msra.mxu0 0.0
        %959 = vmatprep.subr.mxu0 0.0
        %960 = vmatpush1.xpose.msra.mxu0 0.0
        %961 = vmatprep.subr.mxu0 0.0
        %962 = vmatpush1.xpose.msra.mxu0 0.0
        %963 = vmatprep.subr.mxu0 0.0
        %964 = vmatpush1.xpose.msra.mxu0 0.0
        %965 = vmatprep.subr.mxu0 0.0
        %966 = vmatpush1.xpose.msra.mxu0 0.0
        %967 = vmatprep.mubr.f32.mxu0 0.0
        %968 = vmatmul.mubr.f32.gmra.mrb[0].mxu0 %v899
        %v969 = vpop.f32.mrb[0].mxu0
        %v970 = vadd.f32 0.0, %v969
        %v971 = vpop.f32.mrb[0].mxu0
        %972 = vdwg.mxu0
        %v973 = vmul.f32 %v970, 0.35355338
        %v974 = vsel %vm727, %v973, -inf
        %975 = vmax.xlane.f32.xlu0 %v974
        %v976 = vpop.xlane.xlu0 %975
        %v977 = vsub.f32 %v973, %v976
        %v978 = vmul.f32 %v977, 1.442695
        %v979 = vpow.pop %v978
        %v980 = vsel %vm727, %v979, 0.0
        %981 = vadd.xlane.f32.xlu0 %v980
        %v982 = vpop.xlane.xlu0 %981
        %v983 = vrcp.pop %v982
        %984 = vrot.lane.b32.xlu0 %v724, 88
        %v985 = vpop.permute.xlu0 %984
        %v988 = vsel %vm727, %v979, 0
        %990 = vmatprep.subr.mxu0 0.0
        %991 = vmatpush1.msra.mxu0 %v985
        %992 = vmatprep.subr.mxu0 0.0
        %993 = vmatpush1.msra.mxu0 0.0
        %994 = vmatprep.subr.mxu0 0.0
        %995 = vmatpush1.msra.mxu0 0.0
        %996 = vmatprep.subr.mxu0 0.0
        %997 = vmatpush1.msra.mxu0 0.0
        %998 = vmatprep.subr.mxu0 0.0
        %999 = vmatpush1.msra.mxu0 0.0
        %1000 = vmatprep.subr.mxu0 0.0
        %1001 = vmatpush1.msra.mxu0 0.0
        %1002 = vmatprep.subr.mxu0 0.0
        %1003 = vmatpush1.msra.mxu0 0.0
        %1004 = vmatprep.subr.mxu0 0.0
        %1005 = vmatpush1.msra.mxu0 0.0
        %1006 = vmatprep.subr.mxu0 0.0
        %1007 = vmatpush1.msra.mxu0 0.0
        %1008 = vmatprep.subr.mxu0 0.0
        %1009 = vmatpush1.msra.mxu0 0.0
        %1010 = vmatprep.subr.mxu0 0.0
        %1011 = vmatpush1.msra.mxu0 0.0
        %1012 = vmatprep.subr.mxu0 0.0
        %1013 = vmatpush1.msra.mxu0 0.0
        %1014 = vmatprep.subr.mxu0 0.0
        %1015 = vmatpush1.msra.mxu0 0.0
        %1016 = vmatprep.subr.mxu0 0.0
        %1017 = vmatpush1.msra.mxu0 0.0
        %1018 = vmatprep.subr.mxu0 0.0
        %1019 = vmatpush1.msra.mxu0 0.0
        %1020 = vmatprep.subr.mxu0 0.0
        %1021 = vmatpush1.msra.mxu0 0.0
        %1022 = vmatprep.subr.mxu0 0.0
        %1023 = vmatpush1.msra.mxu0 0.0
        %1024 = vmatprep.subr.mxu0 0.0
        %1025 = vmatpush1.msra.mxu0 0.0
        %1026 = vmatprep.subr.mxu0 0.0
        %1027 = vmatpush1.msra.mxu0 0.0
        %1028 = vmatprep.subr.mxu0 0.0
        %1029 = vmatpush1.msra.mxu0 0.0
        %1030 = vmatprep.subr.mxu0 0.0
        %1031 = vmatpush1.msra.mxu0 0.0
        %1032 = vmatprep.subr.mxu0 0.0
        %1033 = vmatpush1.msra.mxu0 0.0
        %1034 = vmatprep.subr.mxu0 0.0
        %1035 = vmatpush1.msra.mxu0 0.0
        %1036 = vmatprep.subr.mxu0 0.0
        %1037 = vmatpush1.msra.mxu0 0.0
        %1038 = vmatprep.subr.mxu0 0.0
        %1039 = vmatpush1.msra.mxu0 0.0
        %1040 = vmatprep.subr.mxu0 0.0
        %1041 = vmatpush1.msra.mxu0 0.0
        %1042 = vmatprep.subr.mxu0 0.0
        %1043 = vmatpush1.msra.mxu0 0.0
        %1044 = vmatprep.subr.mxu0 0.0
        %1045 = vmatpush1.msra.mxu0 0.0
        %1046 = vmatprep.subr.mxu0 0.0
        %1047 = vmatpush1.msra.mxu0 0.0
        %1048 = vmatprep.subr.mxu0 0.0
        %1049 = vmatpush1.msra.mxu0 0.0
        %1050 = vmatprep.subr.mxu0 0.0
        %1051 = vmatpush1.msra.mxu0 0.0
        %1052 = vmatprep.subr.mxu0 0.0
        %1053 = vmatpush1.msra.mxu0 0.0
        %1054 = vmatprep.mubr.f32.mxu0 0.0
        %1055 = vmatmul.mubr.f32.gmra.mrb[0].mxu0 %v988
        %v1056 = vpop.f32.mrb[0].mxu0
        %v1057 = vadd.f32 0.0, %v1056
        %v1058 = vpop.f32.mrb[0].mxu0
        %1059 = vdwg.mxu0
        %v1060 = vmul.f32 %v1057, %v983
        %v1061 = vld [vmem:[#allocation13 + $0x8] sm:$0xff]
        %v1063 = vsel %vm727, %v1060, 0
        %1065 = vmatprep.subr.mxu0 0.0
        %1066 = vmatpush1.msra.mxu0 %v1061
        %1067 = vmatprep.subr.mxu0 0.0
        %1068 = vmatpush1.msra.mxu0 0.0
        %1069 = vmatprep.subr.mxu0 0.0
        %1070 = vmatpush1.msra.mxu0 0.0
        %1071 = vmatprep.subr.mxu0 0.0
        %1072 = vmatpush1.msra.mxu0 0.0
        %1073 = vmatprep.subr.mxu0 0.0
        %1074 = vmatpush1.msra.mxu0 0.0
        %1075 = vmatprep.subr.mxu0 0.0
        %1076 = vmatpush1.msra.mxu0 0.0
        %1077 = vmatprep.subr.mxu0 0.0
        %1078 = vmatpush1.msra.mxu0 0.0
        %1079 = vmatprep.subr.mxu0 0.0
        %1080 = vmatpush1.msra.mxu0 0.0
        %1081 = vmatprep.subr.mxu0 0.0
        %1082 = vmatpush1.msra.mxu0 0.0
        %1083 = vmatprep.subr.mxu0 0.0
        %1084 = vmatpush1.msra.mxu0 0.0
        %1085 = vmatprep.subr.mxu0 0.0
        %1086 = vmatpush1.msra.mxu0 0.0
        %1087 = vmatprep.subr.mxu0 0.0
        %1088 = vmatpush1.msra.mxu0 0.0
        %1089 = vmatprep.subr.mxu0 0.0
        %1090 = vmatpush1.msra.mxu0 0.0
        %1091 = vmatprep.subr.mxu0 0.0
        %1092 = vmatpush1.msra.mxu0 0.0
        %1093 = vmatprep.subr.mxu0 0.0
        %1094 = vmatpush1.msra.mxu0 0.0
        %1095 = vmatprep.subr.mxu0 0.0
        %1096 = vmatpush1.msra.mxu0 0.0
        %1097 = vmatprep.subr.mxu0 0.0
        %1098 = vmatpush1.msra.mxu0 0.0
        %1099 = vmatprep.subr.mxu0 0.0
        %1100 = vmatpush1.msra.mxu0 0.0
        %1101 = vmatprep.subr.mxu0 0.0
        %1102 = vmatpush1.msra.mxu0 0.0
        %1103 = vmatprep.subr.mxu0 0.0
        %1104 = vmatpush1.msra.mxu0 0.0
        %1105 = vmatprep.subr.mxu0 0.0
        %1106 = vmatpush1.msra.mxu0 0.0
        %1107 = vmatprep.subr.mxu0 0.0
        %1108 = vmatpush1.msra.mxu0 0.0
        %1109 = vmatprep.subr.mxu0 0.0
        %1110 = vmatpush1.msra.mxu0 0.0
        %1111 = vmatprep.subr.mxu0 0.0
        %1112 = vmatpush1.msra.mxu0 0.0
        %1113 = vmatprep.subr.mxu0 0.0
        %1114 = vmatpush1.msra.mxu0 0.0
        %1115 = vmatprep.subr.mxu0 0.0
        %1116 = vmatpush1.msra.mxu0 0.0
        %1117 = vmatprep.subr.mxu0 0.0
        %1118 = vmatpush1.msra.mxu0 0.0
        %1119 = vmatprep.subr.mxu0 0.0
        %1120 = vmatpush1.msra.mxu0 0.0
        %1121 = vmatprep.subr.mxu0 0.0
        %1122 = vmatpush1.msra.mxu0 0.0
        %1123 = vmatprep.subr.mxu0 0.0
        %1124 = vmatpush1.msra.mxu0 0.0
        %1125 = vmatprep.subr.mxu0 0.0
        %1126 = vmatpush1.msra.mxu0 0.0
        %1127 = vmatprep.subr.mxu0 0.0
        %1128 = vmatpush1.msra.mxu0 0.0
        %1129 = vmatprep.mubr.f32.mxu0 0.0
        %1130 = vmatmul.mubr.f32.gmra.mrb[0].mxu0 %v1063
        %v1131 = vpop.f32.mrb[0].mxu0
        %v1132 = vadd.f32 0.0, %v1131
        %v1133 = vpop.f32.mrb[0].mxu0
        %1134 = vdwg.mxu0
        %v1136 = vsel %vm727, %v891, 0
        %1138 = vmatprep.subr.mxu0 0.0
        %1139 = vmatpush1.msra.mxu0 %v892
        %1140 = vmatprep.subr.mxu0 0.0
        %1141 = vmatpush1.msra.mxu0 0.0
        %1142 = vmatprep.subr.mxu0 0.0
        %1143 = vmatpush1.msra.mxu0 0.0
        %1144 = vmatprep.subr.mxu0 0.0
        %1145 = vmatpush1.msra.mxu0 0.0
        %1146 = vmatprep.subr.mxu0 0.0
        %1147 = vmatpush1.msra.mxu0 0.0
        %1148 = vmatprep.subr.mxu0 0.0
        %1149 = vmatpush1.msra.mxu0 0.0
        %1150 = vmatprep.subr.mxu0 0.0
        %1151 = vmatpush1.msra.mxu0 0.0
        %1152 = vmatprep.subr.mxu0 0.0
        %1153 = vmatpush1.msra.mxu0 0.0
        %1154 = vmatprep.subr.mxu0 0.0
        %1155 = vmatpush1.msra.mxu0 0.0
        %1156 = vmatprep.subr.mxu0 0.0
        %1157 = vmatpush1.msra.mxu0 0.0
        %1158 = vmatprep.subr.mxu0 0.0
        %1159 = vmatpush1.msra.mxu0 0.0
        %1160 = vmatprep.subr.mxu0 0.0
        %1161 = vmatpush1.msra.mxu0 0.0
        %1162 = vmatprep.subr.mxu0 0.0
        %1163 = vmatpush1.msra.mxu0 0.0
        %1164 = vmatprep.subr.mxu0 0.0
        %1165 = vmatpush1.msra.mxu0 0.0
        %1166 = vmatprep.subr.mxu0 0.0
        %1167 = vmatpush1.msra.mxu0 0.0
        %1168 = vmatprep.subr.mxu0 0.0
        %1169 = vmatpush1.msra.mxu0 0.0
        %1170 = vmatprep.subr.mxu0 0.0
        %1171 = vmatpush1.msra.mxu0 0.0
        %1172 = vmatprep.subr.mxu0 0.0
        %1173 = vmatpush1.msra.mxu0 0.0
        %1174 = vmatprep.subr.mxu0 0.0
        %1175 = vmatpush1.msra.mxu0 0.0
        %1176 = vmatprep.subr.mxu0 0.0
        %1177 = vmatpush1.msra.mxu0 0.0
        %1178 = vmatprep.subr.mxu0 0.0
        %1179 = vmatpush1.msra.mxu0 0.0
        %1180 = vmatprep.subr.mxu0 0.0
        %1181 = vmatpush1.msra.mxu0 0.0
        %1182 = vmatprep.subr.mxu0 0.0
        %1183 = vmatpush1.msra.mxu0 0.0
        %1184 = vmatprep.subr.mxu0 0.0
        %1185 = vmatpush1.msra.mxu0 0.0
        %1186 = vmatprep.subr.mxu0 0.0
        %1187 = vmatpush1.msra.mxu0 0.0
        %1188 = vmatprep.subr.mxu0 0.0
        %1189 = vmatpush1.msra.mxu0 0.0
        %1190 = vmatprep.subr.mxu0 0.0
        %1191 = vmatpush1.msra.mxu0 0.0
        %1192 = vmatprep.subr.mxu0 0.0
        %1193 = vmatpush1.msra.mxu0 0.0
        %1194 = vmatprep.subr.mxu0 0.0
        %1195 = vmatpush1.msra.mxu0 0.0
        %1196 = vmatprep.subr.mxu0 0.0
        %1197 = vmatpush1.msra.mxu0 0.0
        %1198 = vmatprep.subr.mxu0 0.0
        %1199 = vmatpush1.msra.mxu0 0.0
        %1200 = vmatprep.subr.mxu0 0.0
        %1201 = vmatpush1.msra.mxu0 0.0
        %1202 = vmatprep.mubr.f32.mxu0 0.0
        %1203 = vmatmul.mubr.f32.gmra.mrb[0].mxu0 %v1136
        %v1204 = vpop.f32.mrb[0].mxu0
        %v1205 = vadd.f32 %v1132, %v1204
        %v1206 = vpop.f32.mrb[0].mxu0
        %1207 = vdwg.mxu0
        %v1208 = vmul.f32 %v979, %v983
        %v1209 = vadd.f32 %v894, %v1208
        %1210 = vrot.lane.b32.xlu0 %v640, 112
        %v1211 = vpop.permute.xlu0 %1210
        %1212 = vrot.lane.b32.xlu0 %v724, 112
        %v1213 = vpop.permute.xlu0 %1212
        %v1214 = vsel %vm727, %v1211, 0
        %v1216 = vsel %vm727, %v1213, 0
        %1218 = vmatprep.subr.mxu0 0.0
        %1219 = vmatpush1.xpose.msra.mxu0 %v1216
        %1220 = vmatprep.subr.mxu0 0.0
        %1221 = vmatpush1.xpose.msra.mxu0 0.0
        %1222 = vmatprep.subr.mxu0 0.0
        %1223 = vmatpush1.xpose.msra.mxu0 0.0
        %1224 = vmatprep.subr.mxu0 0.0
        %1225 = vmatpush1.xpose.msra.mxu0 0.0
        %1226 = vmatprep.subr.mxu0 0.0
        %1227 = vmatpush1.xpose.msra.mxu0 0.0
        %1228 = vmatprep.subr.mxu0 0.0
        %1229 = vmatpush1.xpose.msra.mxu0 0.0
        %1230 = vmatprep.subr.mxu0 0.0
        %1231 = vmatpush1.xpose.msra.mxu0 0.0
        %1232 = vmatprep.subr.mxu0 0.0
        %1233 = vmatpush1.xpose.msra.mxu0 0.0
        %1234 = vmatprep.subr.mxu0 0.0
        %1235 = vmatpush1.xpose.msra.mxu0 0.0
        %1236 = vmatprep.subr.mxu0 0.0
        %1237 = vmatpush1.xpose.msra.mxu0 0.0
        %1238 = vmatprep.subr.mxu0 0.0
        %1239 = vmatpush1.xpose.msra.mxu0 0.0
        %1240 = vmatprep.subr.mxu0 0.0
        %1241 = vmatpush1.xpose.msra.mxu0 0.0
        %1242 = vmatprep.subr.mxu0 0.0
        %1243 = vmatpush1.xpose.msra.mxu0 0.0
        %1244 = vmatprep.subr.mxu0 0.0
        %1245 = vmatpush1.xpose.msra.mxu0 0.0
        %1246 = vmatprep.subr.mxu0 0.0
        %1247 = vmatpush1.xpose.msra.mxu0 0.0
        %1248 = vmatprep.subr.mxu0 0.0
        %1249 = vmatpush1.xpose.msra.mxu0 0.0
        %1250 = vmatprep.subr.mxu0 0.0
        %1251 = vmatpush1.xpose.msra.mxu0 0.0
        %1252 = vmatprep.subr.mxu0 0.0
        %1253 = vmatpush1.xpose.msra.mxu0 0.0
        %1254 = vmatprep.subr.mxu0 0.0
        %1255 = vmatpush1.xpose.msra.mxu0 0.0
        %1256 = vmatprep.subr.mxu0 0.0
        %1257 = vmatpush1.xpose.msra.mxu0 0.0
        %1258 = vmatprep.subr.mxu0 0.0
        %1259 = vmatpush1.xpose.msra.mxu0 0.0
        %1260 = vmatprep.subr.mxu0 0.0
        %1261 = vmatpush1.xpose.msra.mxu0 0.0
        %1262 = vmatprep.subr.mxu0 0.0
        %1263 = vmatpush1.xpose.msra.mxu0 0.0
        %1264 = vmatprep.subr.mxu0 0.0
        %1265 = vmatpush1.xpose.msra.mxu0 0.0
        %1266 = vmatprep.subr.mxu0 0.0
        %1267 = vmatpush1.xpose.msra.mxu0 0.0
        %1268 = vmatprep.subr.mxu0 0.0
        %1269 = vmatpush1.xpose.msra.mxu0 0.0
        %1270 = vmatprep.subr.mxu0 0.0
        %1271 = vmatpush1.xpose.msra.mxu0 0.0
        %1272 = vmatprep.subr.mxu0 0.0
        %1273 = vmatpush1.xpose.msra.mxu0 0.0
        %1274 = vmatprep.subr.mxu0 0.0
        %1275 = vmatpush1.xpose.msra.mxu0 0.0
        %1276 = vmatprep.subr.mxu0 0.0
        %1277 = vmatpush1.xpose.msra.mxu0 0.0
        %1278 = vmatprep.subr.mxu0 0.0
        %1279 = vmatpush1.xpose.msra.mxu0 0.0
        %1280 = vmatprep.subr.mxu0 0.0
        %1281 = vmatpush1.xpose.msra.mxu0 0.0
        %1282 = vmatprep.mubr.f32.mxu0 0.0
        %1283 = vmatmul.mubr.f32.gmra.mrb[0].mxu0 %v1214
        %v1284 = vpop.f32.mrb[0].mxu0
        %v1285 = vadd.f32 0.0, %v1284
        %v1286 = vpop.f32.mrb[0].mxu0
        %1287 = vdwg.mxu0
        %v1288 = vmul.f32 %v1285, 0.35355338
        %v1289 = vsel %vm727, %v1288, -inf
        %1290 = vmax.xlane.f32.xlu0 %v1289
        %v1291 = vpop.xlane.xlu0 %1290
        %v1292 = vsub.f32 %v1288, %v1291
        %v1293 = vmul.f32 %v1292, 1.442695
        %v1294 = vpow.pop %v1293
        %v1295 = vsel %vm727, %v1294, 0.0
        %1296 = vadd.xlane.f32.xlu0 %v1295
        %v1297 = vpop.xlane.xlu0 %1296
        %v1298 = vrcp.pop %v1297
        %1299 = vrot.lane.b32.xlu0 %v724, 80
        %v1300 = vpop.permute.xlu0 %1299
        %v1303 = vsel %vm727, %v1294, 0
        %1305 = vmatprep.subr.mxu0 0.0
        %1306 = vmatpush1.msra.mxu0 %v1300
        %1307 = vmatprep.subr.mxu0 0.0
        %1308 = vmatpush1.msra.mxu0 0.0
        %1309 = vmatprep.subr.mxu0 0.0
        %1310 = vmatpush1.msra.mxu0 0.0
        %1311 = vmatprep.subr.mxu0 0.0
        %1312 = vmatpush1.msra.mxu0 0.0
        %1313 = vmatprep.subr.mxu0 0.0
        %1314 = vmatpush1.msra.mxu0 0.0
        %1315 = vmatprep.subr.mxu0 0.0
        %1316 = vmatpush1.msra.mxu0 0.0
        %1317 = vmatprep.subr.mxu0 0.0
        %1318 = vmatpush1.msra.mxu0 0.0
        %1319 = vmatprep.subr.mxu0 0.0
        %1320 = vmatpush1.msra.mxu0 0.0
        %1321 = vmatprep.subr.mxu0 0.0
        %1322 = vmatpush1.msra.mxu0 0.0
        %1323 = vmatprep.subr.mxu0 0.0
        %1324 = vmatpush1.msra.mxu0 0.0
        %1325 = vmatprep.subr.mxu0 0.0
        %1326 = vmatpush1.msra.mxu0 0.0
        %1327 = vmatprep.subr.mxu0 0.0
        %1328 = vmatpush1.msra.mxu0 0.0
        %1329 = vmatprep.subr.mxu0 0.0
        %1330 = vmatpush1.msra.mxu0 0.0
        %1331 = vmatprep.subr.mxu0 0.0
        %1332 = vmatpush1.msra.mxu0 0.0
        %1333 = vmatprep.subr.mxu0 0.0
        %1334 = vmatpush1.msra.mxu0 0.0
        %1335 = vmatprep.subr.mxu0 0.0
        %1336 = vmatpush1.msra.mxu0 0.0
        %1337 = vmatprep.subr.mxu0 0.0
        %1338 = vmatpush1.msra.mxu0 0.0
        %1339 = vmatprep.subr.mxu0 0.0
        %1340 = vmatpush1.msra.mxu0 0.0
        %1341 = vmatprep.subr.mxu0 0.0
        %1342 = vmatpush1.msra.mxu0 0.0
        %1343 = vmatprep.subr.mxu0 0.0
        %1344 = vmatpush1.msra.mxu0 0.0
        %1345 = vmatprep.subr.mxu0 0.0
        %1346 = vmatpush1.msra.mxu0 0.0
        %1347 = vmatprep.subr.mxu0 0.0
        %1348 = vmatpush1.msra.mxu0 0.0
        %1349 = vmatprep.subr.mxu0 0.0
        %1350 = vmatpush1.msra.mxu0 0.0
        %1351 = vmatprep.subr.mxu0 0.0
        %1352 = vmatpush1.msra.mxu0 0.0
        %1353 = vmatprep.subr.mxu0 0.0
        %1354 = vmatpush1.msra.mxu0 0.0
        %1355 = vmatprep.subr.mxu0 0.0
        %1356 = vmatpush1.msra.mxu0 0.0
        %1357 = vmatprep.subr.mxu0 0.0
        %1358 = vmatpush1.msra.mxu0 0.0
        %1359 = vmatprep.subr.mxu0 0.0
        %1360 = vmatpush1.msra.mxu0 0.0
        %1361 = vmatprep.subr.mxu0 0.0
        %1362 = vmatpush1.msra.mxu0 0.0
        %1363 = vmatprep.subr.mxu0 0.0
        %1364 = vmatpush1.msra.mxu0 0.0
        %1365 = vmatprep.subr.mxu0 0.0
        %1366 = vmatpush1.msra.mxu0 0.0
        %1367 = vmatprep.subr.mxu0 0.0
        %1368 = vmatpush1.msra.mxu0 0.0
        %1369 = vmatprep.mubr.f32.mxu0 0.0
        %1370 = vmatmul.mubr.f32.gmra.mrb[0].mxu0 %v1303
        %v1371 = vpop.f32.mrb[0].mxu0
        %v1372 = vadd.f32 0.0, %v1371
        %v1373 = vpop.f32.mrb[0].mxu0
        %1374 = vdwg.mxu0
        %v1375 = vmul.f32 %v1372, %v1298
        %v1376 = vld [vmem:[#allocation13 + $0x10] sm:$0xff]
        %v1378 = vsel %vm727, %v1375, 0
        %1380 = vmatprep.subr.mxu0 0.0
        %1381 = vmatpush1.msra.mxu0 %v1376
        %1382 = vmatprep.subr.mxu0 0.0
        %1383 = vmatpush1.msra.mxu0 0.0
        %1384 = vmatprep.subr.mxu0 0.0
        %1385 = vmatpush1.msra.mxu0 0.0
        %1386 = vmatprep.subr.mxu0 0.0
        %1387 = vmatpush1.msra.mxu0 0.0
        %1388 = vmatprep.subr.mxu0 0.0
        %1389 = vmatpush1.msra.mxu0 0.0
        %1390 = vmatprep.subr.mxu0 0.0
        %1391 = vmatpush1.msra.mxu0 0.0
        %1392 = vmatprep.subr.mxu0 0.0
        %1393 = vmatpush1.msra.mxu0 0.0
        %1394 = vmatprep.subr.mxu0 0.0
        %1395 = vmatpush1.msra.mxu0 0.0
        %1396 = vmatprep.subr.mxu0 0.0
        %1397 = vmatpush1.msra.mxu0 0.0
        %1398 = vmatprep.subr.mxu0 0.0
        %1399 = vmatpush1.msra.mxu0 0.0
        %1400 = vmatprep.subr.mxu0 0.0
        %1401 = vmatpush1.msra.mxu0 0.0
        %1402 = vmatprep.subr.mxu0 0.0
        %1403 = vmatpush1.msra.mxu0 0.0
        %1404 = vmatprep.subr.mxu0 0.0
        %1405 = vmatpush1.msra.mxu0 0.0
        %1406 = vmatprep.subr.mxu0 0.0
        %1407 = vmatpush1.msra.mxu0 0.0
        %1408 = vmatprep.subr.mxu0 0.0
        %1409 = vmatpush1.msra.mxu0 0.0
        %1410 = vmatprep.subr.mxu0 0.0
        %1411 = vmatpush1.msra.mxu0 0.0
        %1412 = vmatprep.subr.mxu0 0.0
        %1413 = vmatpush1.msra.mxu0 0.0
        %1414 = vmatprep.subr.mxu0 0.0
        %1415 = vmatpush1.msra.mxu0 0.0
        %1416 = vmatprep.subr.mxu0 0.0
        %1417 = vmatpush1.msra.mxu0 0.0
        %1418 = vmatprep.subr.mxu0 0.0
        %1419 = vmatpush1.msra.mxu0 0.0
        %1420 = vmatprep.subr.mxu0 0.0
        %1421 = vmatpush1.msra.mxu0 0.0
        %1422 = vmatprep.subr.mxu0 0.0
        %1423 = vmatpush1.msra.mxu0 0.0
        %1424 = vmatprep.subr.mxu0 0.0
        %1425 = vmatpush1.msra.mxu0 0.0
        %1426 = vmatprep.subr.mxu0 0.0
        %1427 = vmatpush1.msra.mxu0 0.0
        %1428 = vmatprep.subr.mxu0 0.0
        %1429 = vmatpush1.msra.mxu0 0.0
        %1430 = vmatprep.subr.mxu0 0.0
        %1431 = vmatpush1.msra.mxu0 0.0
        %1432 = vmatprep.subr.mxu0 0.0
        %1433 = vmatpush1.msra.mxu0 0.0
        %1434 = vmatprep.subr.mxu0 0.0
        %1435 = vmatpush1.msra.mxu0 0.0
        %1436 = vmatprep.subr.mxu0 0.0
        %1437 = vmatpush1.msra.mxu0 0.0
        %1438 = vmatprep.subr.mxu0 0.0
        %1439 = vmatpush1.msra.mxu0 0.0
        %1440 = vmatprep.subr.mxu0 0.0
        %1441 = vmatpush1.msra.mxu0 0.0
        %1442 = vmatprep.subr.mxu0 0.0
        %1443 = vmatpush1.msra.mxu0 0.0
        %1444 = vmatprep.mubr.f32.mxu0 0.0
        %1445 = vmatmul.mubr.f32.gmra.mrb[0].mxu0 %v1378
        %v1446 = vpop.f32.mrb[0].mxu0
        %v1447 = vadd.f32 0.0, %v1446
        %v1448 = vpop.f32.mrb[0].mxu0
        %1449 = vdwg.mxu0
        %v1450 = vadd.f32 %v1205, %v1447
        %v1451 = vmul.f32 %v1294, %v1298
        %v1452 = vadd.f32 %v1209, %v1451
        %1453 = vrot.lane.b32.xlu0 %v640, 104
        %v1454 = vpop.permute.xlu0 %1453
        %1455 = vrot.lane.b32.xlu0 %v724, 104
        %v1456 = vpop.permute.xlu0 %1455
        %v1457 = vsel %vm727, %v1454, 0
        %v1459 = vsel %vm727, %v1456, 0
        %1461 = vmatprep.subr.mxu0 0.0
        %1462 = vmatpush1.xpose.msra.mxu0 %v1459
        %1463 = vmatprep.subr.mxu0 0.0
        %1464 = vmatpush1.xpose.msra.mxu0 0.0
        %1465 = vmatprep.subr.mxu0 0.0
        %1466 = vmatpush1.xpose.msra.mxu0 0.0
        %1467 = vmatprep.subr.mxu0 0.0
        %1468 = vmatpush1.xpose.msra.mxu0 0.0
        %1469 = vmatprep.subr.mxu0 0.0
        %1470 = vmatpush1.xpose.msra.mxu0 0.0
        %1471 = vmatprep.subr.mxu0 0.0
        %1472 = vmatpush1.xpose.msra.mxu0 0.0
        %1473 = vmatprep.subr.mxu0 0.0
        %1474 = vmatpush1.xpose.msra.mxu0 0.0
        %1475 = vmatprep.subr.mxu0 0.0
        %1476 = vmatpush1.xpose.msra.mxu0 0.0
        %1477 = vmatprep.subr.mxu0 0.0
        %1478 = vmatpush1.xpose.msra.mxu0 0.0
        %1479 = vmatprep.subr.mxu0 0.0
        %1480 = vmatpush1.xpose.msra.mxu0 0.0
        %1481 = vmatprep.subr.mxu0 0.0
        %1482 = vmatpush1.xpose.msra.mxu0 0.0
        %1483 = vmatprep.subr.mxu0 0.0
        %1484 = vmatpush1.xpose.msra.mxu0 0.0
        %1485 = vmatprep.subr.mxu0 0.0
        %1486 = vmatpush1.xpose.msra.mxu0 0.0
        %1487 = vmatprep.subr.mxu0 0.0
        %1488 = vmatpush1.xpose.msra.mxu0 0.0
        %1489 = vmatprep.subr.mxu0 0.0
        %1490 = vmatpush1.xpose.msra.mxu0 0.0
        %1491 = vmatprep.subr.mxu0 0.0
        %1492 = vmatpush1.xpose.msra.mxu0 0.0
        %1493 = vmatprep.subr.mxu0 0.0
        %1494 = vmatpush1.xpose.msra.mxu0 0.0
        %1495 = vmatprep.subr.mxu0 0.0
        %1496 = vmatpush1.xpose.msra.mxu0 0.0
        %1497 = vmatprep.subr.mxu0 0.0
        %1498 = vmatpush1.xpose.msra.mxu0 0.0
        %1499 = vmatprep.subr.mxu0 0.0
        %1500 = vmatpush1.xpose.msra.mxu0 0.0
        %1501 = vmatprep.subr.mxu0 0.0
        %1502 = vmatpush1.xpose.msra.mxu0 0.0
        %1503 = vmatprep.subr.mxu0 0.0
        %1504 = vmatpush1.xpose.msra.mxu0 0.0
        %1505 = vmatprep.subr.mxu0 0.0
        %1506 = vmatpush1.xpose.msra.mxu0 0.0
        %1507 = vmatprep.subr.mxu0 0.0
        %1508 = vmatpush1.xpose.msra.mxu0 0.0
        %1509 = vmatprep.subr.mxu0 0.0
        %1510 = vmatpush1.xpose.msra.mxu0 0.0
        %1511 = vmatprep.subr.mxu0 0.0
        %1512 = vmatpush1.xpose.msra.mxu0 0.0
        %1513 = vmatprep.subr.mxu0 0.0
        %1514 = vmatpush1.xpose.msra.mxu0 0.0
        %1515 = vmatprep.subr.mxu0 0.0
        %1516 = vmatpush1.xpose.msra.mxu0 0.0
        %1517 = vmatprep.subr.mxu0 0.0
        %1518 = vmatpush1.xpose.msra.mxu0 0.0
        %1519 = vmatprep.subr.mxu0 0.0
        %1520 = vmatpush1.xpose.msra.mxu0 0.0
        %1521 = vmatprep.subr.mxu0 0.0
        %1522 = vmatpush1.xpose.msra.mxu0 0.0
        %1523 = vmatprep.subr.mxu0 0.0
        %1524 = vmatpush1.xpose.msra.mxu0 0.0
        %1525 = vmatprep.mubr.f32.mxu0 0.0
        %1526 = vmatmul.mubr.f32.gmra.mrb[0].mxu0 %v1457
        %v1527 = vpop.f32.mrb[0].mxu0
        %v1528 = vadd.f32 0.0, %v1527
        %v1529 = vpop.f32.mrb[0].mxu0
        %1530 = vdwg.mxu0
        %v1531 = vmul.f32 %v1528, 0.35355338
        %v1532 = vsel %vm727, %v1531, -inf
        %1533 = vmax.xlane.f32.xlu0 %v1532
        %v1534 = vpop.xlane.xlu0 %1533
        %v1535 = vsub.f32 %v1531, %v1534
        %v1536 = vmul.f32 %v1535, 1.442695
        %v1537 = vpow.pop %v1536
        %v1538 = vsel %vm727, %v1537, 0.0
        %1539 = vadd.xlane.f32.xlu0 %v1538
        %v1540 = vpop.xlane.xlu0 %1539
        %v1541 = vrcp.pop %v1540
        %1542 = vrot.lane.b32.xlu0 %v724, 72
        %v1543 = vpop.permute.xlu0 %1542
        %v1546 = vsel %vm727, %v1537, 0
        %1548 = vmatprep.subr.mxu0 0.0
        %1549 = vmatpush1.msra.mxu0 %v1543
        %1550 = vmatprep.subr.mxu0 0.0
        %1551 = vmatpush1.msra.mxu0 0.0
        %1552 = vmatprep.subr.mxu0 0.0
        %1553 = vmatpush1.msra.mxu0 0.0
        %1554 = vmatprep.subr.mxu0 0.0
        %1555 = vmatpush1.msra.mxu0 0.0
        %1556 = vmatprep.subr.mxu0 0.0
        %1557 = vmatpush1.msra.mxu0 0.0
        %1558 = vmatprep.subr.mxu0 0.0
        %1559 = vmatpush1.msra.mxu0 0.0
        %1560 = vmatprep.subr.mxu0 0.0
        %1561 = vmatpush1.msra.mxu0 0.0
        %1562 = vmatprep.subr.mxu0 0.0
        %1563 = vmatpush1.msra.mxu0 0.0
        %1564 = vmatprep.subr.mxu0 0.0
        %1565 = vmatpush1.msra.mxu0 0.0
        %1566 = vmatprep.subr.mxu0 0.0
        %1567 = vmatpush1.msra.mxu0 0.0
        %1568 = vmatprep.subr.mxu0 0.0
        %1569 = vmatpush1.msra.mxu0 0.0
        %1570 = vmatprep.subr.mxu0 0.0
        %1571 = vmatpush1.msra.mxu0 0.0
        %1572 = vmatprep.subr.mxu0 0.0
        %1573 = vmatpush1.msra.mxu0 0.0
        %1574 = vmatprep.subr.mxu0 0.0
        %1575 = vmatpush1.msra.mxu0 0.0
        %1576 = vmatprep.subr.mxu0 0.0
        %1577 = vmatpush1.msra.mxu0 0.0
        %1578 = vmatprep.subr.mxu0 0.0
        %1579 = vmatpush1.msra.mxu0 0.0
        %1580 = vmatprep.subr.mxu0 0.0
        %1581 = vmatpush1.msra.mxu0 0.0
        %1582 = vmatprep.subr.mxu0 0.0
        %1583 = vmatpush1.msra.mxu0 0.0
        %1584 = vmatprep.subr.mxu0 0.0
        %1585 = vmatpush1.msra.mxu0 0.0
        %1586 = vmatprep.subr.mxu0 0.0
        %1587 = vmatpush1.msra.mxu0 0.0
        %1588 = vmatprep.subr.mxu0 0.0
        %1589 = vmatpush1.msra.mxu0 0.0
        %1590 = vmatprep.subr.mxu0 0.0
        %1591 = vmatpush1.msra.mxu0 0.0
        %1592 = vmatprep.subr.mxu0 0.0
        %1593 = vmatpush1.msra.mxu0 0.0
        %1594 = vmatprep.subr.mxu0 0.0
        %1595 = vmatpush1.msra.mxu0 0.0
        %1596 = vmatprep.subr.mxu0 0.0
        %1597 = vmatpush1.msra.mxu0 0.0
        %1598 = vmatprep.subr.mxu0 0.0
        %1599 = vmatpush1.msra.mxu0 0.0
        %1600 = vmatprep.subr.mxu0 0.0
        %1601 = vmatpush1.msra.mxu0 0.0
        %1602 = vmatprep.subr.mxu0 0.0
        %1603 = vmatpush1.msra.mxu0 0.0
        %1604 = vmatprep.subr.mxu0 0.0
        %1605 = vmatpush1.msra.mxu0 0.0
        %1606 = vmatprep.subr.mxu0 0.0
        %1607 = vmatpush1.msra.mxu0 0.0
        %1608 = vmatprep.subr.mxu0 0.0
        %1609 = vmatpush1.msra.mxu0 0.0
        %1610 = vmatprep.subr.mxu0 0.0
        %1611 = vmatpush1.msra.mxu0 0.0
        %1612 = vmatprep.mubr.f32.mxu0 0.0
        %1613 = vmatmul.mubr.f32.gmra.mrb[0].mxu0 %v1546
        %v1614 = vpop.f32.mrb[0].mxu0
        %v1615 = vadd.f32 0.0, %v1614
        %v1616 = vpop.f32.mrb[0].mxu0
        %1617 = vdwg.mxu0
        %v1618 = vmul.f32 %v1615, %v1541
        %v1619 = vld [vmem:[#allocation13 + $0x18] sm:$0xff]
        %v1621 = vsel %vm727, %v1618, 0
        %1623 = vmatprep.subr.mxu0 0.0
        %1624 = vmatpush1.msra.mxu0 %v1619
        %1625 = vmatprep.subr.mxu0 0.0
        %1626 = vmatpush1.msra.mxu0 0.0
        %1627 = vmatprep.subr.mxu0 0.0
        %1628 = vmatpush1.msra.mxu0 0.0
        %1629 = vmatprep.subr.mxu0 0.0
        %1630 = vmatpush1.msra.mxu0 0.0
        %1631 = vmatprep.subr.mxu0 0.0
        %1632 = vmatpush1.msra.mxu0 0.0
        %1633 = vmatprep.subr.mxu0 0.0
        %1634 = vmatpush1.msra.mxu0 0.0
        %1635 = vmatprep.subr.mxu0 0.0
        %1636 = vmatpush1.msra.mxu0 0.0
        %1637 = vmatprep.subr.mxu0 0.0
        %1638 = vmatpush1.msra.mxu0 0.0
        %1639 = vmatprep.subr.mxu0 0.0
        %1640 = vmatpush1.msra.mxu0 0.0
        %1641 = vmatprep.subr.mxu0 0.0
        %1642 = vmatpush1.msra.mxu0 0.0
        %1643 = vmatprep.subr.mxu0 0.0
        %1644 = vmatpush1.msra.mxu0 0.0
        %1645 = vmatprep.subr.mxu0 0.0
        %1646 = vmatpush1.msra.mxu0 0.0
        %1647 = vmatprep.subr.mxu0 0.0
        %1648 = vmatpush1.msra.mxu0 0.0
        %1649 = vmatprep.subr.mxu0 0.0
        %1650 = vmatpush1.msra.mxu0 0.0
        %1651 = vmatprep.subr.mxu0 0.0
        %1652 = vmatpush1.msra.mxu0 0.0
        %1653 = vmatprep.subr.mxu0 0.0
        %1654 = vmatpush1.msra.mxu0 0.0
        %1655 = vmatprep.subr.mxu0 0.0
        %1656 = vmatpush1.msra.mxu0 0.0
        %1657 = vmatprep.subr.mxu0 0.0
        %1658 = vmatpush1.msra.mxu0 0.0
        %1659 = vmatprep.subr.mxu0 0.0
        %1660 = vmatpush1.msra.mxu0 0.0
        %1661 = vmatprep.subr.mxu0 0.0
        %1662 = vmatpush1.msra.mxu0 0.0
        %1663 = vmatprep.subr.mxu0 0.0
        %1664 = vmatpush1.msra.mxu0 0.0
        %1665 = vmatprep.subr.mxu0 0.0
        %1666 = vmatpush1.msra.mxu0 0.0
        %1667 = vmatprep.subr.mxu0 0.0
        %1668 = vmatpush1.msra.mxu0 0.0
        %1669 = vmatprep.subr.mxu0 0.0
        %1670 = vmatpush1.msra.mxu0 0.0
        %1671 = vmatprep.subr.mxu0 0.0
        %1672 = vmatpush1.msra.mxu0 0.0
        %1673 = vmatprep.subr.mxu0 0.0
        %1674 = vmatpush1.msra.mxu0 0.0
        %1675 = vmatprep.subr.mxu0 0.0
        %1676 = vmatpush1.msra.mxu0 0.0
        %1677 = vmatprep.subr.mxu0 0.0
        %1678 = vmatpush1.msra.mxu0 0.0
        %1679 = vmatprep.subr.mxu0 0.0
        %1680 = vmatpush1.msra.mxu0 0.0
        %1681 = vmatprep.subr.mxu0 0.0
        %1682 = vmatpush1.msra.mxu0 0.0
        %1683 = vmatprep.subr.mxu0 0.0
        %1684 = vmatpush1.msra.mxu0 0.0
        %1685 = vmatprep.subr.mxu0 0.0
        %1686 = vmatpush1.msra.mxu0 0.0
        %1687 = vmatprep.mubr.f32.mxu0 0.0
        %1688 = vmatmul.mubr.f32.gmra.mrb[0].mxu0 %v1621
        %v1689 = vpop.f32.mrb[0].mxu0
        %v1690 = vadd.f32 0.0, %v1689
        %v1691 = vpop.f32.mrb[0].mxu0
        %1692 = vdwg.mxu0
        %v1693 = vadd.f32 %v1450, %v1690
        %v1694 = vmul.f32 %v1537, %v1541
        %v1695 = vadd.f32 %v1452, %v1694
        %v1696 = vadd.f32 %v556, %v1693
        %v1697 = vld [vmem:[#allocation14] sm:$0x1]
        %v1699 = vlaneseq
        %v1700 = vshrl.u32 %v1699, 7
        %v1701 = vsub.s32 0, %v1700
        %v1702 = vrot.slane %v1697, %v1701
        %v1704 = vadd.f32 %v1696, %v1702
        %v1705 = vsel %vm569, %v1704, 0.0
        %1706 = vadd.xlane.f32.xlu0 %v1705
        %v1707 = vpop.xlane.xlu0 %1706
        %v1708 = vrcp.pop 32.0
        %v1709 = vmul.f32 %v1707, %v1708
        %v1710 = vsub.f32 %v1704, %v1709
        %v1711 = vmul.f32 %v1710, %v1710
        %v1712 = vsel %vm569, %v1711, 0.0
        %1713 = vadd.xlane.f32.xlu0 %v1712
        %v1714 = vpop.xlane.xlu0 %1713
        %v1715 = vmul.f32 %v1714, %v1708
        %v1716 = vadd.f32 %v1715, 1e-05
        %v1717 = vrsqrt.pop %v1716
        %v1718 = vmul.f32 %v1710, %v1717
        %v1719 = vld [vmem:[#allocation16] sm:$0x1]
        %v1721 = vlaneseq
        %v1722 = vshrl.u32 %v1721, 7
        %v1723 = vsub.s32 0, %v1722
        %v1724 = vrot.slane %v1719, %v1723
        %v1726 = vmul.f32 %v1718, %v1724
        %v1727 = vld [vmem:[#allocation17] sm:$0x1]
        %v1729 = vlaneseq
        %v1730 = vshrl.u32 %v1729, 7
        %v1731 = vsub.s32 0, %v1730
        %v1732 = vrot.slane %v1727, %v1731
        %v1734 = vadd.f32 %v1726, %v1732
        %1735 = vst.msk [vmem:[%s548] sm:$0xff] %vm569, %v1734
        %v1736 = vmul.f32 %v1695, 0.25
        %1737 = vst.msk [vmem:[%s555] sm:$0xff] %vm727, %v1736
        %s1738 = sand.u32 %s267, 1
        %s1739 = scalar_lea.sflag [#allocation4], %s1738
        %s1740 = sand.u32 %s267, 1
        %s1741 = smul.addr %s1740, 8
        %s1742 = scalar_lea.vmem [#allocation19], %s1741
        %s1743 = sand.u32 %s293, 1
        %s1744 = scalar_lea.sflag [#allocation21], %s1743
        %s1745 = sand.u32 %s293, 1
        %s1746 = smul.addr %s1745, 8
        %s1747 = scalar_lea.vmem [#allocation20], %s1746
        // Predicated region
        $region101: #{transformer_decoder_layer.3} parent=59 // pred_check
          %p1748 = pneg %p277
        $region102: #{transformer_decoder_layer.3} parent=59 // pred_check_branch
          %1750 = sbr.rel (%p1748) target = $region104
        $region103: #{transformer_decoder_layer.3} parent=59 // pred_region
          %s1752 = ssub.s32 128, 128
          %1753 = vsyncadd %s1739, %s1752
          %s1754 = smul.addr %s39, 128
          %s1755 = scalar_lea.hbm %s10, %s1754
          %s1757 = sshll.u32 %s1742, 4
          %s1758 = int_to_ptr.vmem [resolvable:$true] %s1757
          %1760 = dma.vmem_to_hbm [thread:$0]  %s1758, 128, %s1755, %s1739
        $region104: #{transformer_decoder_layer.3} parent=59 // pred_fallthru
          _
        // Predicated region
        $region105: #{transformer_decoder_layer.3} parent=59 // pred_check
          %p1761 = pneg %p303
        $region106: #{transformer_decoder_layer.3} parent=59 // pred_check_branch
          %1763 = sbr.rel (%p1761) target = $region108
        $region107: #{transformer_decoder_layer.3} parent=59 // pred_region
          %s1765 = ssub.s32 128, 128
          %1766 = vsyncadd %s1744, %s1765
          %s1767 = smul.addr %s39, 128
          %s1768 = scalar_lea.hbm %s11, %s1767
          %s1770 = sshll.u32 %s1747, 4
          %s1771 = int_to_ptr.vmem [resolvable:$true] %s1770
          %1773 = dma.vmem_to_hbm [thread:$0]  %s1771, 128, %s1768, %s1744
        $region108: #{transformer_decoder_layer.3} parent=59 // pred_fallthru
          _
      $region60: #{transformer_decoder_layer.3} parent=5 // pred_fallthru
        _
      %p1774 = scmp.le.s32.totalorder 2, %s34
      // Predicated region
      $region109: #{transformer_decoder_layer.3} parent=5 // pred_check
        %p1775 = pneg %p1774
      $region110: #{transformer_decoder_layer.3} parent=5 // pred_check_branch
        %1777 = sbr.rel (%p1775) target = $region112
      $region111: #{transformer_decoder_layer.3} parent=5 // pred_region
        %s1778 = ssub.s32 %s34, 2
        // Predicated region
        $region113: #{transformer_decoder_layer.3} parent=111 // pred_check
          %p1779 = pneg %p283
        $region114: #{transformer_decoder_layer.3} parent=111 // pred_check_branch
          %1781 = sbr.rel (%p1779) target = $region116
        $region115: #{transformer_decoder_layer.3} parent=111 // pred_region
          %s1782 = sand.u32 %s268, 1
          %s1783 = scalar_lea.sflag [#allocation4], %s1782
          %s1784 = sand.u32 %s268, 1
          %s1785 = smul.addr %s1784, 8
          %s1786 = scalar_lea.vmem [#allocation19], %s1785
          %1787 = dma.done %s1783, 128
        $region116: #{transformer_decoder_layer.3} parent=111 // pred_fallthru
          _
        // Predicated region
        $region117: #{transformer_decoder_layer.3} parent=111 // pred_check
          %p1788 = pneg %p309
        $region118: #{transformer_decoder_layer.3} parent=111 // pred_check_branch
          %1790 = sbr.rel (%p1788) target = $region120
        $region119: #{transformer_decoder_layer.3} parent=111 // pred_region
          %s1791 = sand.u32 %s294, 1
          %s1792 = scalar_lea.sflag [#allocation21], %s1791
          %s1793 = sand.u32 %s294, 1
          %s1794 = smul.addr %s1793, 8
          %s1795 = scalar_lea.vmem [#allocation20], %s1794
          %1796 = dma.done %s1792, 128
        $region120: #{transformer_decoder_layer.3} parent=111 // pred_fallthru
          _
      $region112: #{transformer_decoder_layer.3} parent=5 // pred_fallthru
        _
    $region6: #{transformer_decoder_layer.3} parent=1 // loop_footer
      %s38 = sadd.s32 1, %s34
    $region7: #{transformer_decoder_layer.3} parent=1 // loop_footer_branch
      %33 = sbr.rel target = $region3
    $region8: #{transformer_decoder_layer.3} parent=1 // loop_exit
      _
    %1797 = vsyncpa [#allocation3], 1
    %s1798 = scalar_lea.sflag [#allocation3], 1
    %1799 = vsyncpa %s1798, 1
    %1800 = vsyncpa [#allocation6], 1
    %s1801 = scalar_lea.sflag [#allocation6], 1
    %1802 = vsyncpa %s1801, 1
    %1803 = vsyncpa [#allocation9], 1
    %1804 = vsyncpa [#allocation12], 1
    %1805 = vsyncpa [#allocation15], 1
    %1806 = vsyncpa [#allocation18], 1
    %1807 = vsyncpa [#allocation4], 1
    %s1808 = scalar_lea.sflag [#allocation4], 1
    %1809 = vsyncpa %s1808, 1
    %1810 = vsyncpa [#allocation21], 1
    %s1811 = scalar_lea.sflag [#allocation21], 1
    %1812 = vsyncpa %s1811, 1

// kernel: transformer_decoder_layer.4
$region0: #{transformer_decoder_layer.4}
  #allocation0 [shape = 'u32[]', space=smem, size = 0x4, offset = 0x4, fixed_abs, tag = 'smem constant byte address 0x4 - core index']
  #allocation1 [shape = 'u32[144,128]{1,0:T(1,128)}', space=vmem, size = 0x12000, scoped, tag = 'internal scratch']
  %s0 = inlined_call_operand.hbm [shape: f32[2,8,32], index: 0, kind: input, shape index: {}]
  %s1 = inlined_call_operand.hbm [shape: f32[2,16,32], index: 1, kind: input, shape index: {}]
  %s2 = inlined_call_operand.hbm [shape: f32[32,32], index: 2, kind: input, shape index: {}]
  %s3 = inlined_call_operand.hbm [shape: f32[1,32], index: 3, kind: input, shape index: {}]
  %s4 = inlined_call_operand.hbm [shape: f32[32,64], index: 4, kind: input, shape index: {}]
  %s5 = inlined_call_operand.hbm [shape: f32[1,64], index: 5, kind: input, shape index: {}]
  %s6 = inlined_call_operand.hbm [shape: f32[32,32], index: 6, kind: input, shape index: {}]
  %s7 = inlined_call_operand.hbm [shape: f32[1,32], index: 7, kind: input, shape index: {}]
  %s8 = inlined_call_operand.hbm [shape: f32[1,32], index: 8, kind: input, shape index: {}]
  %s9 = inlined_call_operand.hbm [shape: f32[1,32], index: 9, kind: input, shape index: {}]
  %s10 = inlined_call_operand.hbm [shape: f32[2,8,32], index: 10, kind: output, shape index: {0}]
  %s11 = inlined_call_operand.hbm [shape: f32[2,8,16], index: 11, kind: output, shape index: {1}]
  %12 = xla_tuple %s10, %s11
  %s13 = sld [smem:[#allocation0]]
  $region121: #{transformer_decoder_layer.4} parent=0
    _
  %s15 = ssub.s32 1, %s13
  %s16 = scalar_select 0, %s15, %s13
  $region1: #{transformer_decoder_layer.4} parent=0
    #allocation2 [shape = 'u8[8192]{0}', space=vmem, size = 0x2000, scoped, tag = 'input window, operand 0']
    #allocation3 [shape = 's32[2]{0}', space=sflag, size = 0x8, scoped, tag = 'scoped memory for transformer_decoder_layer.4']
    #allocation4 [shape = 's32[2]{0}', space=sflag, size = 0x8, scoped, tag = 'scoped memory for transformer_decoder_layer.4']
    #allocation5 [shape = 'u8[16384]{0}', space=vmem, size = 0x4000, scoped, tag = 'input window, operand 1']
    #allocation6 [shape = 's32[2]{0}', space=sflag, size = 0x8, scoped, tag = 'scoped memory for transformer_decoder_layer.4']
    #allocation7 [shape = 'u8[16384]{0}', space=vmem, size = 0x4000, scoped, tag = 'input window, operand 2, single buffered']
    #allocation8 [shape = 'u8[512]{0}', space=vmem, size = 0x400, scoped, tag = 'input window, operand 3, single buffered']
    #allocation9 [shape = 's32[1]{0}', space=sflag, size = 0x4, scoped, tag = 'scoped memory for transformer_decoder_layer.4']
    #allocation10 [shape = 'u8[16384]{0}', space=vmem, size = 0x4000, scoped, tag = 'input window, operand 4, single buffered']
    #allocation11 [shape = 'u8[512]{0}', space=vmem, size = 0x400, scoped, tag = 'input window, operand 5, single buffered']
    #allocation12 [shape = 's32[1]{0}', space=sflag, size = 0x4, scoped, tag = 'scoped memory for transformer_decoder_layer.4']
    #allocation13 [shape = 'u8[16384]{0}', space=vmem, size = 0x4000, scoped, tag = 'input window, operand 6, single buffered']
    #allocation14 [shape = 'u8[512]{0}', space=vmem, size = 0x400, scoped, tag = 'input window, operand 7, single buffered']
    #allocation15 [shape = 's32[1]{0}', space=sflag, size = 0x4, scoped, tag = 'scoped memory for transformer_decoder_layer.4']
    #allocation16 [shape = 'u8[512]{0}', space=vmem, size = 0x400, scoped, tag = 'input window, operand 8, single buffered']
    #allocation17 [shape = 'u8[512]{0}', space=vmem, size = 0x400, scoped, tag = 'input window, operand 9, single buffered']
    #allocation18 [shape = 's32[1]{0}', space=sflag, size = 0x4, scoped, tag = 'scoped memory for transformer_decoder_layer.4']
    #allocation19 [shape = 'u8[8192]{0}', space=vmem, size = 0x2000, scoped, tag = 'output window, operand 0']
    #allocation20 [shape = 'u8[8192]{0}', space=vmem, size = 0x2000, scoped, tag = 'output window, operand 1']
    #allocation21 [shape = 's32[2]{0}', space=sflag, size = 0x8, scoped, tag = 'scoped memory for transformer_decoder_layer.4']
    %17 = vsyncpa [#allocation3], 0
    %s18 = scalar_lea.sflag [#allocation3], 1
    %19 = vsyncpa %s18, 0
    %20 = vsyncpa [#allocation6], 0
    %s21 = scalar_lea.sflag [#allocation6], 1
    %22 = vsyncpa %s21, 0
    %23 = vsyncpa [#allocation9], 0
    %24 = vsyncpa [#allocation12], 0
    %25 = vsyncpa [#allocation15], 0
    %26 = vsyncpa [#allocation18], 0
    %27 = vsyncpa [#allocation4], 0
    %s28 = scalar_lea.sflag [#allocation4], 1
    %29 = vsyncpa %s28, 0
    %30 = vsyncpa [#allocation21], 0
    %s31 = scalar_lea.sflag [#allocation21], 1
    %32 = vsyncpa %s31, 0
    loop: start=0, step=1, limit=4
    $region2: #{transformer_decoder_layer.4} parent=1 // loop_pre_header
      _
    $region3: #{transformer_decoder_layer.4} parent=1 // loop_header
      %s34 = sphi 0, %s38
      %p35 = scmp.ge.s32.totalorder %s34, 4
      %s44 = sphi 0, %s46
      %s47 = sphi 0, %s44
      %s48 = sphi 0, %s47
      %s64 = sphi 0, %s48
      %s70 = sphi 0, %s72
      %s73 = sphi 0, %s70
      %s74 = sphi 0, %s73
      %s90 = sphi 0, %s74
      %s94 = sphi 0, %s94
      %s96 = sphi 0, %s94
      %s97 = sphi 0, %s96
      %s111 = sphi 0, %s97
      %s115 = sphi 0, %s115
      %s117 = sphi 0, %s115
      %s118 = sphi 0, %s117
      %s132 = sphi 0, %s118
      %s136 = sphi 0, %s136
      %s138 = sphi 0, %s136
      %s139 = sphi 0, %s138
      %s153 = sphi 0, %s139
      %s157 = sphi 0, %s157
      %s159 = sphi 0, %s157
      %s160 = sphi 0, %s159
      %s174 = sphi 0, %s160
      %s178 = sphi 0, %s178
      %s180 = sphi 0, %s178
      %s181 = sphi 0, %s180
      %s195 = sphi 0, %s181
      %s199 = sphi 0, %s199
      %s201 = sphi 0, %s199
      %s202 = sphi 0, %s201
      %s216 = sphi 0, %s202
      %s220 = sphi 0, %s220
      %s222 = sphi 0, %s220
      %s223 = sphi 0, %s222
      %s237 = sphi 0, %s223
      %s241 = sphi 0, %s241
      %s243 = sphi 0, %s241
      %s244 = sphi 0, %s243
      %s258 = sphi 0, %s244
      %s264 = sphi 0, %s266
      %s267 = sphi 0, %s264
      %s268 = sphi 0, %s267
      %s284 = sphi 0, %s268
      %s290 = sphi 0, %s292
      %s293 = sphi 0, %s290
      %s294 = sphi 0, %s293
      %s310 = sphi 0, %s294
    $region4: #{transformer_decoder_layer.4} parent=1 // loop_header_branch
      %37 = sbr.rel (%p35) target = $region8
    $region5: #{transformer_decoder_layer.4} parent=1 // loop_body
      %s39 = ssub.s32 %s34, 1
      %s40 = ssub.s32 %s34, 2
      %s41 = sadd.s32 %s34, 1
      %s42 = ssub.s32 %s34, %s41
      %p43 = scmp.eq.s32.totalorder %s42, 0
      %s45 = sadd.s32 %s44, 1
      %s46 = scalar_select %p43, %s44, %s45
      %p49 = pneg %p43
      %p50 = scmp.eq.s32.totalorder %s34, 1
      %p51 = por %p49, %p50
      %p52 = scmp.ne.s32.totalorder %s44, %s47
      %p53 = scmp.eq.s32.totalorder %s34, 0
      %p54 = por %p52, %p53
      %p55 = scmp.ne.s32.totalorder %s44, %s47
      %p56 = scmp.eq.s32.totalorder %s39, 1
      %p57 = por %p55, %p56
      %p58 = scmp.ne.s32.totalorder %s47, %s48
      %p59 = scmp.eq.s32.totalorder %s39, 0
      %p60 = por %p58, %p59
      %p61 = scmp.ne.s32.totalorder %s47, %s48
      %p62 = scmp.eq.s32.totalorder %s40, 1
      %p63 = por %p61, %p62
      %p65 = scmp.ne.s32.totalorder %s48, %s64
      %p66 = scmp.eq.s32.totalorder %s40, 0
      %p67 = por %p65, %p66
      %s68 = ssub.s32 %s34, %s41
      %p69 = scmp.eq.s32.totalorder %s68, 0
      %s71 = sadd.s32 %s70, 1
      %s72 = scalar_select %p69, %s70, %s71
      %p75 = pneg %p69
      %p76 = scmp.eq.s32.totalorder %s34, 1
      %p77 = por %p75, %p76
      %p78 = scmp.ne.s32.totalorder %s70, %s73
      %p79 = scmp.eq.s32.totalorder %s34, 0
      %p80 = por %p78, %p79
      %p81 = scmp.ne.s32.totalorder %s70, %s73
      %p82 = scmp.eq.s32.totalorder %s39, 1
      %p83 = por %p81, %p82
      %p84 = scmp.ne.s32.totalorder %s73, %s74
      %p85 = scmp.eq.s32.totalorder %s39, 0
      %p86 = por %p84, %p85
      %p87 = scmp.ne.s32.totalorder %s73, %s74
      %p88 = scmp.eq.s32.totalorder %s40, 1
      %p89 = por %p87, %p88
      %p91 = scmp.ne.s32.totalorder %s74, %s90
      %p92 = scmp.eq.s32.totalorder %s40, 0
      %p93 = por %p91, %p92
      %s95 = sadd.s32 %s94, 1
      %p98 = scmp.eq.s32.totalorder %s34, 1
      %p99 = scmp.ne.s32.totalorder %s94, %s96
      %p100 = scmp.eq.s32.totalorder %s34, 0
      %p101 = por %p99, %p100
      %p102 = scmp.ne.s32.totalorder %s94, %s96
      %p103 = scmp.eq.s32.totalorder %s39, 1
      %p104 = por %p102, %p103
      %p105 = scmp.ne.s32.totalorder %s96, %s97
      %p106 = scmp.eq.s32.totalorder %s39, 0
      %p107 = por %p105, %p106
      %p108 = scmp.ne.s32.totalorder %s96, %s97
      %p109 = scmp.eq.s32.totalorder %s40, 1
      %p110 = por %p108, %p109
      %p112 = scmp.ne.s32.totalorder %s97, %s111
      %p113 = scmp.eq.s32.totalorder %s40, 0
      %p114 = por %p112, %p113
      %s116 = sadd.s32 %s115, 1
      %p119 = scmp.eq.s32.totalorder %s34, 1
      %p120 = scmp.ne.s32.totalorder %s115, %s117
      %p121 = scmp.eq.s32.totalorder %s34, 0
      %p122 = por %p120, %p121
      %p123 = scmp.ne.s32.totalorder %s115, %s117
      %p124 = scmp.eq.s32.totalorder %s39, 1
      %p125 = por %p123, %p124
      %p126 = scmp.ne.s32.totalorder %s117, %s118
      %p127 = scmp.eq.s32.totalorder %s39, 0
      %p128 = por %p126, %p127
      %p129 = scmp.ne.s32.totalorder %s117, %s118
      %p130 = scmp.eq.s32.totalorder %s40, 1
      %p131 = por %p129, %p130
      %p133 = scmp.ne.s32.totalorder %s118, %s132
      %p134 = scmp.eq.s32.totalorder %s40, 0
      %p135 = por %p133, %p134
      %s137 = sadd.s32 %s136, 1
      %p140 = scmp.eq.s32.totalorder %s34, 1
      %p141 = scmp.ne.s32.totalorder %s136, %s138
      %p142 = scmp.eq.s32.totalorder %s34, 0
      %p143 = por %p141, %p142
      %p144 = scmp.ne.s32.totalorder %s136, %s138
      %p145 = scmp.eq.s32.totalorder %s39, 1
      %p146 = por %p144, %p145
      %p147 = scmp.ne.s32.totalorder %s138, %s139
      %p148 = scmp.eq.s32.totalorder %s39, 0
      %p149 = por %p147, %p148
      %p150 = scmp.ne.s32.totalorder %s138, %s139
      %p151 = scmp.eq.s32.totalorder %s40, 1
      %p152 = por %p150, %p151
      %p154 = scmp.ne.s32.totalorder %s139, %s153
      %p155 = scmp.eq.s32.totalorder %s40, 0
      %p156 = por %p154, %p155
      %s158 = sadd.s32 %s157, 1
      %p161 = scmp.eq.s32.totalorder %s34, 1
      %p162 = scmp.ne.s32.totalorder %s157, %s159
      %p163 = scmp.eq.s32.totalorder %s34, 0
      %p164 = por %p162, %p163
      %p165 = scmp.ne.s32.totalorder %s157, %s159
      %p166 = scmp.eq.s32.totalorder %s39, 1
      %p167 = por %p165, %p166
      %p168 = scmp.ne.s32.totalorder %s159, %s160
      %p169 = scmp.eq.s32.totalorder %s39, 0
      %p170 = por %p168, %p169
      %p171 = scmp.ne.s32.totalorder %s159, %s160
      %p172 = scmp.eq.s32.totalorder %s40, 1
      %p173 = por %p171, %p172
      %p175 = scmp.ne.s32.totalorder %s160, %s174
      %p176 = scmp.eq.s32.totalorder %s40, 0
      %p177 = por %p175, %p176
      %s179 = sadd.s32 %s178, 1
      %p182 = scmp.eq.s32.totalorder %s34, 1
      %p183 = scmp.ne.s32.totalorder %s178, %s180
      %p184 = scmp.eq.s32.totalorder %s34, 0
      %p185 = por %p183, %p184
      %p186 = scmp.ne.s32.totalorder %s178, %s180
      %p187 = scmp.eq.s32.totalorder %s39, 1
      %p188 = por %p186, %p187
      %p189 = scmp.ne.s32.totalorder %s180, %s181
      %p190 = scmp.eq.s32.totalorder %s39, 0
      %p191 = por %p189, %p190
      %p192 = scmp.ne.s32.totalorder %s180, %s181
      %p193 = scmp.eq.s32.totalorder %s40, 1
      %p194 = por %p192, %p193
      %p196 = scmp.ne.s32.totalorder %s181, %s195
      %p197 = scmp.eq.s32.totalorder %s40, 0
      %p198 = por %p196, %p197
      %s200 = sadd.s32 %s199, 1
      %p203 = scmp.eq.s32.totalorder %s34, 1
      %p204 = scmp.ne.s32.totalorder %s199, %s201
      %p205 = scmp.eq.s32.totalorder %s34, 0
      %p206 = por %p204, %p205
      %p207 = scmp.ne.s32.totalorder %s199, %s201
      %p208 = scmp.eq.s32.totalorder %s39, 1
      %p209 = por %p207, %p208
      %p210 = scmp.ne.s32.totalorder %s201, %s202
      %p211 = scmp.eq.s32.totalorder %s39, 0
      %p212 = por %p210, %p211
      %p213 = scmp.ne.s32.totalorder %s201, %s202
      %p214 = scmp.eq.s32.totalorder %s40, 1
      %p215 = por %p213, %p214
      %p217 = scmp.ne.s32.totalorder %s202, %s216
      %p218 = scmp.eq.s32.totalorder %s40, 0
      %p219 = por %p217, %p218
      %s221 = sadd.s32 %s220, 1
      %p224 = scmp.eq.s32.totalorder %s34, 1
      %p225 = scmp.ne.s32.totalorder %s220, %s222
      %p226 = scmp.eq.s32.totalorder %s34, 0
      %p227 = por %p225, %p226
      %p228 = scmp.ne.s32.totalorder %s220, %s222
      %p229 = scmp.eq.s32.totalorder %s39, 1
      %p230 = por %p228, %p229
      %p231 = scmp.ne.s32.totalorder %s222, %s223
      %p232 = scmp.eq.s32.totalorder %s39, 0
      %p233 = por %p231, %p232
      %p234 = scmp.ne.s32.totalorder %s222, %s223
      %p235 = scmp.eq.s32.totalorder %s40, 1
      %p236 = por %p234, %p235
      %p238 = scmp.ne.s32.totalorder %s223, %s237
      %p239 = scmp.eq.s32.totalorder %s40, 0
      %p240 = por %p238, %p239
      %s242 = sadd.s32 %s241, 1
      %p245 = scmp.eq.s32.totalorder %s34, 1
      %p246 = scmp.ne.s32.totalorder %s241, %s243
      %p247 = scmp.eq.s32.totalorder %s34, 0
      %p248 = por %p246, %p247
      %p249 = scmp.ne.s32.totalorder %s241, %s243
      %p250 = scmp.eq.s32.totalorder %s39, 1
      %p251 = por %p249, %p250
      %p252 = scmp.ne.s32.totalorder %s243, %s244
      %p253 = scmp.eq.s32.totalorder %s39, 0
      %p254 = por %p252, %p253
      %p255 = scmp.ne.s32.totalorder %s243, %s244
      %p256 = scmp.eq.s32.totalorder %s40, 1
      %p257 = por %p255, %p256
      %p259 = scmp.ne.s32.totalorder %s244, %s258
      %p260 = scmp.eq.s32.totalorder %s40, 0
      %p261 = por %p259, %p260
      %s262 = ssub.s32 %s34, %s41
      %p263 = scmp.eq.s32.totalorder %s262, 0
      %s265 = sadd.s32 %s264, 1
      %s266 = scalar_select %p263, %s264, %s265
      %p269 = pneg %p263
      %p270 = scmp.eq.s32.totalorder %s34, 1
      %p271 = por %p269, %p270
      %p272 = scmp.ne.s32.totalorder %s264, %s267
      %p273 = scmp.eq.s32.totalorder %s34, 0
      %p274 = por %p272, %p273
      %p275 = scmp.ne.s32.totalorder %s264, %s267
      %p276 = scmp.eq.s32.totalorder %s39, 1
      %p277 = por %p275, %p276
      %p278 = scmp.ne.s32.totalorder %s267, %s268
      %p279 = scmp.eq.s32.totalorder %s39, 0
      %p280 = por %p278, %p279
      %p281 = scmp.ne.s32.totalorder %s267, %s268
      %p282 = scmp.eq.s32.totalorder %s40, 1
      %p283 = por %p281, %p282
      %p285 = scmp.ne.s32.totalorder %s268, %s284
      %p286 = scmp.eq.s32.totalorder %s40, 0
      %p287 = por %p285, %p286
      %s288 = ssub.s32 %s34, %s41
      %p289 = scmp.eq.s32.totalorder %s288, 0
      %s291 = sadd.s32 %s290, 1
      %s292 = scalar_select %p289, %s290, %s291
      %p295 = pneg %p289
      %p296 = scmp.eq.s32.totalorder %s34, 1
      %p297 = por %p295, %p296
      %p298 = scmp.ne.s32.totalorder %s290, %s293
      %p299 = scmp.eq.s32.totalorder %s34, 0
      %p300 = por %p298, %p299
      %p301 = scmp.ne.s32.totalorder %s290, %s293
      %p302 = scmp.eq.s32.totalorder %s39, 1
      %p303 = por %p301, %p302
      %p304 = scmp.ne.s32.totalorder %s293, %s294
      %p305 = scmp.eq.s32.totalorder %s39, 0
      %p306 = por %p304, %p305
      %p307 = scmp.ne.s32.totalorder %s293, %s294
      %p308 = scmp.eq.s32.totalorder %s40, 1
      %p309 = por %p307, %p308
      %p311 = scmp.ne.s32.totalorder %s294, %s310
      %p312 = scmp.eq.s32.totalorder %s40, 0
      %p313 = por %p311, %p312
      %p314 = scmp.le.s32.totalorder 1, %s34
      %p315 = scmp.lt.s32.totalorder %s34, 3
      %p316 = pnand %p314, %p315
      %p317 = pneg %p316
      // Predicated region
      $region9: #{transformer_decoder_layer.4} parent=5 // pred_check
        _
      $region10: #{transformer_decoder_layer.4} parent=5 // pred_check_branch
        %319 = sbr.rel (%p316) target = $region12
      $region11: #{transformer_decoder_layer.4} parent=5 // pred_region
        %s320 = ssub.s32 %s34, 1
        // Predicated region
        $region13: #{transformer_decoder_layer.4} parent=11 // pred_check
          %p321 = pneg %p107
        $region14: #{transformer_decoder_layer.4} parent=11 // pred_check_branch
          %323 = sbr.rel (%p321) target = $region16
        $region15: #{transformer_decoder_layer.4} parent=11 // pred_region
          %s325 = ssub.s32 512, 512
          %326 = vsyncadd [#allocation6], %s325
          %s327 = sshll.u32 [#allocation7], 4
          %s328 = int_to_ptr.vmem [resolvable:$true] %s327
          %333 = dma.hbm_to_vmem [thread:$0]  %s2, 512, %s328, [#allocation6], 128, 128, 8
        $region16: #{transformer_decoder_layer.4} parent=11 // pred_fallthru
          _
        // Predicated region
        $region17: #{transformer_decoder_layer.4} parent=11 // pred_check
          %p334 = pneg %p128
        $region18: #{transformer_decoder_layer.4} parent=11 // pred_check_branch
          %336 = sbr.rel (%p334) target = $region20
        $region19: #{transformer_decoder_layer.4} parent=11 // pred_region
          %s338 = ssub.s32 16, 16
          %339 = vsyncadd [#allocation9], %s338
          %s341 = sshll.u32 [#allocation8], 4
          %s342 = int_to_ptr.vmem [resolvable:$true] %s341
          %344 = dma.hbm_to_vmem [thread:$0]  %s3, 16, %s342, [#allocation9]
        $region20: #{transformer_decoder_layer.4} parent=11 // pred_fallthru
          _
        // Predicated region
        $region21: #{transformer_decoder_layer.4} parent=11 // pred_check
          %p345 = pneg %p149
        $region22: #{transformer_decoder_layer.4} parent=11 // pred_check_branch
          %347 = sbr.rel (%p345) target = $region24
        $region23: #{transformer_decoder_layer.4} parent=11 // pred_region
          %s349 = ssub.s32 512, 512
          %350 = vsyncadd [#allocation9], %s349
          %s351 = sshll.u32 [#allocation10], 4
          %s352 = int_to_ptr.vmem [resolvable:$true] %s351
          %357 = dma.hbm_to_vmem [thread:$0]  %s4, 512, %s352, [#allocation9], 128, 128, 8
        $region24: #{transformer_decoder_layer.4} parent=11 // pred_fallthru
          _
        // Predicated region
        $region25: #{transformer_decoder_layer.4} parent=11 // pred_check
          %p358 = pneg %p170
        $region26: #{transformer_decoder_layer.4} parent=11 // pred_check_branch
          %360 = sbr.rel (%p358) target = $region28
        $region27: #{transformer_decoder_layer.4} parent=11 // pred_region
          %s362 = ssub.s32 16, 16
          %363 = vsyncadd [#allocation12], %s362
          %s365 = sshll.u32 [#allocation11], 4
          %s366 = int_to_ptr.vmem [resolvable:$true] %s365
          %368 = dma.hbm_to_vmem [thread:$0]  %s5, 16, %s366, [#allocation12]
        $region28: #{transformer_decoder_layer.4} parent=11 // pred_fallthru
          _
        // Predicated region
        $region29: #{transformer_decoder_layer.4} parent=11 // pred_check
          %p369 = pneg %p191
        $region30: #{transformer_decoder_layer.4} parent=11 // pred_check_branch
          %371 = sbr.rel (%p369) target = $region32
        $region31: #{transformer_decoder_layer.4} parent=11 // pred_region
          %s373 = ssub.s32 512, 512
          %374 = vsyncadd [#allocation12], %s373
          %s375 = sshll.u32 [#allocation13], 4
          %s376 = int_to_ptr.vmem [resolvable:$true] %s375
          %381 = dma.hbm_to_vmem [thread:$0]  %s6, 512, %s376, [#allocation12], 128, 128, 8
        $region32: #{transformer_decoder_layer.4} parent=11 // pred_fallthru
          _
        // Predicated region
        $region33: #{transformer_decoder_layer.4} parent=11 // pred_check
          %p382 = pneg %p212
        $region34: #{transformer_decoder_layer.4} parent=11 // pred_check_branch
          %384 = sbr.rel (%p382) target = $region36
        $region35: #{transformer_decoder_layer.4} parent=11 // pred_region
          %s386 = ssub.s32 16, 16
          %387 = vsyncadd [#allocation15], %s386
          %s389 = sshll.u32 [#allocation14], 4
          %s390 = int_to_ptr.vmem [resolvable:$true] %s389
          %392 = dma.hbm_to_vmem [thread:$0]  %s7, 16, %s390, [#allocation15]
        $region36: #{transformer_decoder_layer.4} parent=11 // pred_fallthru
          _
        // Predicated region
        $region37: #{transformer_decoder_layer.4} parent=11 // pred_check
          %p393 = pneg %p233
        $region38: #{transformer_decoder_layer.4} parent=11 // pred_check_branch
          %395 = sbr.rel (%p393) target = $region40
        $region39: #{transformer_decoder_layer.4} parent=11 // pred_region
          %s397 = ssub.s32 16, 16
          %398 = vsyncadd [#allocation15], %s397
          %s400 = sshll.u32 [#allocation16], 4
          %s401 = int_to_ptr.vmem [resolvable:$true] %s400
          %403 = dma.hbm_to_vmem [thread:$0]  %s8, 16, %s401, [#allocation15]
        $region40: #{transformer_decoder_layer.4} parent=11 // pred_fallthru
          _
        // Predicated region
        $region41: #{transformer_decoder_layer.4} parent=11 // pred_check
          %p404 = pneg %p254
        $region42: #{transformer_decoder_layer.4} parent=11 // pred_check_branch
          %406 = sbr.rel (%p404) target = $region44
        $region43: #{transformer_decoder_layer.4} parent=11 // pred_region
          %s408 = ssub.s32 16, 16
          %409 = vsyncadd [#allocation18], %s408
          %s411 = sshll.u32 [#allocation17], 4
          %s412 = int_to_ptr.vmem [resolvable:$true] %s411
          %414 = dma.hbm_to_vmem [thread:$0]  %s9, 16, %s412, [#allocation18]
        $region44: #{transformer_decoder_layer.4} parent=11 // pred_fallthru
          _
      $region12: #{transformer_decoder_layer.4} parent=5 // pred_fallthru
        _
      %p415 = scmp.lt.s32.totalorder %s34, 2
      // Predicated region
      $region45: #{transformer_decoder_layer.4} parent=5 // pred_check
        %p416 = pneg %p415
      $region46: #{transformer_decoder_layer.4} parent=5 // pred_check_branch
        %418 = sbr.rel (%p416) target = $region48
      $region47: #{transformer_decoder_layer.4} parent=5 // pred_region
        // Predicated region
        $region49: #{transformer_decoder_layer.4} parent=47 // pred_check
          %p419 = pneg %p54
        $region50: #{transformer_decoder_layer.4} parent=47 // pred_check_branch
          %421 = sbr.rel (%p419) target = $region52
        $region51: #{transformer_decoder_layer.4} parent=47 // pred_region
          %s422 = sand.u32 %s44, 1
          %s423 = scalar_lea.sflag [#allocation3], %s422
          %s424 = sand.u32 %s44, 1
          %s425 = smul.addr %s424, 8
          %s426 = scalar_lea.vmem [#allocation2], %s425
          %s428 = ssub.s32 128, 128
          %429 = vsyncadd %s423, %s428
          %s430 = smul.addr %s34, 128
          %s431 = scalar_lea.hbm %s0, %s430
          %s433 = sshll.u32 %s426, 4
          %s434 = int_to_ptr.vmem [resolvable:$true] %s433
          %436 = dma.hbm_to_vmem [thread:$0]  %s431, 128, %s434, %s423
        $region52: #{transformer_decoder_layer.4} parent=47 // pred_fallthru
          _
        // Predicated region
        $region53: #{transformer_decoder_layer.4} parent=47 // pred_check
          %p437 = pneg %p80
        $region54: #{transformer_decoder_layer.4} parent=47 // pred_check_branch
          %439 = sbr.rel (%p437) target = $region56
        $region55: #{transformer_decoder_layer.4} parent=47 // pred_region
          %s440 = sand.u32 %s34, 1
          %s441 = scalar_lea.sflag [#allocation6], %s440
          %s442 = sand.u32 %s70, 1
          %s443 = smul.addr %s442, 16
          %s444 = scalar_lea.vmem [#allocation5], %s443
          %s446 = ssub.s32 256, 256
          %447 = vsyncadd %s441, %s446
          %s448 = smul.addr %s34, 2
          %s449 = smul.addr %s448, 128
          %s450 = scalar_lea.hbm %s1, %s449
          %s451 = sshll.u32 %s444, 4
          %s452 = int_to_ptr.vmem [resolvable:$true] %s451
          %457 = dma.hbm_to_vmem [thread:$0]  %s450, 256, %s452, %s441, 128, 128, 8
        $region56: #{transformer_decoder_layer.4} parent=47 // pred_fallthru
          _
      $region48: #{transformer_decoder_layer.4} parent=5 // pred_fallthru
        _
      %p458 = scmp.le.s32.totalorder 1, %s34
      %p459 = scmp.lt.s32.totalorder %s34, 3
      %p460 = pnand %p458, %p459
      %p461 = pneg %p460
      // Predicated region
      $region57: #{transformer_decoder_layer.4} parent=5 // pred_check
        _
      $region58: #{transformer_decoder_layer.4} parent=5 // pred_check_branch
        %463 = sbr.rel (%p460) target = $region60
      $region59: #{transformer_decoder_layer.4} parent=5 // pred_region
        %s464 = ssub.s32 %s34, 1
        %s465 = sand.u32 %s47, 1
        %s466 = scalar_lea.sflag [#allocation3], %s465
        %s467 = sand.u32 %s47, 1
        %s468 = smul.addr %s467, 8
        %s469 = scalar_lea.vmem [#allocation2], %s468
        // Predicated region
        $region61: #{transformer_decoder_layer.4} parent=59 // pred_check
          %p470 = pneg %p60
        $region62: #{transformer_decoder_layer.4} parent=59 // pred_check_branch
          %472 = sbr.rel (%p470) target = $region64
        $region63: #{transformer_decoder_layer.4} parent=59 // pred_region
          %473 = dma.done %s466, 128
        $region64: #{transformer_decoder_layer.4} parent=59 // pred_fallthru
          _
        %s474 = sand.u32 %s39, 1
        %s475 = scalar_lea.sflag [#allocation6], %s474
        %s476 = sand.u32 %s73, 1
        %s477 = smul.addr %s476, 16
        %s478 = scalar_lea.vmem [#allocation5], %s477
        // Predicated region
        $region65: #{transformer_decoder_layer.4} parent=59 // pred_check
          %p479 = pneg %p86
        $region66: #{transformer_decoder_layer.4} parent=59 // pred_check_branch
          %481 = sbr.rel (%p479) target = $region68
        $region67: #{transformer_decoder_layer.4} parent=59 // pred_region
          %482 = dma.done %s475, 256
        $region68: #{transformer_decoder_layer.4} parent=59 // pred_fallthru
          _
        // Predicated region
        $region69: #{transformer_decoder_layer.4} parent=59 // pred_check
          %p483 = pneg %p107
        $region70: #{transformer_decoder_layer.4} parent=59 // pred_check_branch
          %485 = sbr.rel (%p483) target = $region72
        $region71: #{transformer_decoder_layer.4} parent=59 // pred_region
          %486 = dma.done [#allocation6], 512
        $region72: #{transformer_decoder_layer.4} parent=59 // pred_fallthru
          _
        // Predicated region
        $region73: #{transformer_decoder_layer.4} parent=59 // pred_check
          %p487 = pneg %p128
        $region74: #{transformer_decoder_layer.4} parent=59 // pred_check_branch
          %489 = sbr.rel (%p487) target = $region76
        $region75: #{transformer_decoder_layer.4} parent=59 // pred_region
          %490 = dma.done [#allocation9], 16
        $region76: #{transformer_decoder_layer.4} parent=59 // pred_fallthru
          _
        // Predicated region
        $region77: #{transformer_decoder_layer.4} parent=59 // pred_check
          %p491 = pneg %p149
        $region78: #{transformer_decoder_layer.4} parent=59 // pred_check_branch
          %493 = sbr.rel (%p491) target = $region80
        $region79: #{transformer_decoder_layer.4} parent=59 // pred_region
          %494 = dma.done [#allocation9], 512
        $region80: #{transformer_decoder_layer.4} parent=59 // pred_fallthru
          _
        // Predicated region
        $region81: #{transformer_decoder_layer.4} parent=59 // pred_check
          %p495 = pneg %p170
        $region82: #{transformer_decoder_layer.4} parent=59 // pred_check_branch
          %497 = sbr.rel (%p495) target = $region84
        $region83: #{transformer_decoder_layer.4} parent=59 // pred_region
          %498 = dma.done [#allocation12], 16
        $region84: #{transformer_decoder_layer.4} parent=59 // pred_fallthru
          _
        // Predicated region
        $region85: #{transformer_decoder_layer.4} parent=59 // pred_check
          %p499 = pneg %p191
        $region86: #{transformer_decoder_layer.4} parent=59 // pred_check_branch
          %501 = sbr.rel (%p499) target = $region88
        $region87: #{transformer_decoder_layer.4} parent=59 // pred_region
          %502 = dma.done [#allocation12], 512
        $region88: #{transformer_decoder_layer.4} parent=59 // pred_fallthru
          _
        // Predicated region
        $region89: #{transformer_decoder_layer.4} parent=59 // pred_check
          %p503 = pneg %p212
        $region90: #{transformer_decoder_layer.4} parent=59 // pred_check_branch
          %505 = sbr.rel (%p503) target = $region92
        $region91: #{transformer_decoder_layer.4} parent=59 // pred_region
          %506 = dma.done [#allocation15], 16
        $region92: #{transformer_decoder_layer.4} parent=59 // pred_fallthru
          _
        // Predicated region
        $region93: #{transformer_decoder_layer.4} parent=59 // pred_check
          %p507 = pneg %p233
        $region94: #{transformer_decoder_layer.4} parent=59 // pred_check_branch
          %509 = sbr.rel (%p507) target = $region96
        $region95: #{transformer_decoder_layer.4} parent=59 // pred_region
          %510 = dma.done [#allocation15], 16
        $region96: #{transformer_decoder_layer.4} parent=59 // pred_fallthru
          _
        // Predicated region
        $region97: #{transformer_decoder_layer.4} parent=59 // pred_check
          %p511 = pneg %p254
        $region98: #{transformer_decoder_layer.4} parent=59 // pred_check_branch
          %513 = sbr.rel (%p511) target = $region100
        $region99: #{transformer_decoder_layer.4} parent=59 // pred_region
          %514 = dma.done [#allocation18], 16
        $region100: #{transformer_decoder_layer.4} parent=59 // pred_fallthru
          _
        %s515 = sand.u32 %s47, 1
        %s516 = scalar_lea.sflag [#allocation3], %s515
        %s517 = sand.u32 %s47, 1
        %s518 = smul.addr %s517, 8
        %s519 = scalar_lea.vmem [#allocation2], %s518
        %p520 = pneg %p60
        %p521 = pneg %p57
        %s522 = sand.u32 %s39, 1
        %s523 = scalar_lea.sflag [#allocation6], %s522
        %s524 = sand.u32 %s73, 1
        %s525 = smul.addr %s524, 16
        %s526 = scalar_lea.vmem [#allocation5], %s525
        %p527 = pneg %p86
        %p528 = pneg %p83
        %p529 = pneg %p107
        %p530 = pneg %p104
        %p531 = pneg %p128
        %p532 = pneg %p125
        %p533 = pneg %p149
        %p534 = pneg %p146
        %p535 = pneg %p170
        %p536 = pneg %p167
        %p537 = pneg %p191
        %p538 = pneg %p188
        %p539 = pneg %p212
        %p540 = pneg %p209
        %p541 = pneg %p233
        %p542 = pneg %p230
        %p543 = pneg %p254
        %p544 = pneg %p251
        %p545 = pneg %p280
        %p546 = pneg %p277
        %s547 = sand.u32 %s267, 1
        %s548 = scalar_lea.sflag [#allocation4], %s547
        %s549 = sand.u32 %s267, 1
        %s550 = smul.addr %s549, 8
        %s551 = scalar_lea.vmem [#allocation19], %s550
        %p552 = pneg %p306
        %p553 = pneg %p303
        %s554 = sand.u32 %s293, 1
        %s555 = scalar_lea.sflag [#allocation21], %s554
        %s556 = sand.u32 %s293, 1
        %s557 = smul.addr %s556, 8
        %s558 = scalar_lea.vmem [#allocation20], %s557
        %v559 = vld [vmem:[%s469] sm:$0xff]
        %v560 = vld [vmem:[%s478] sm:$0xff]
        %v561 = vld [vmem:[%s478 + $0x8] sm:$0xff]
        %v562 = vld [vmem:[#allocation7] sm:$0xff]
        %v563 = vld [vmem:[#allocation7 + $0x8] sm:$0xff]
        %v564 = vld [vmem:[#allocation7 + $0x10] sm:$0xff]
        %v565 = vld [vmem:[#allocation7 + $0x18] sm:$0xff]
        %v566 = vld [vmem:[#allocation8] sm:$0x1]
        %v568 = vlaneseq
        %v569 = vshrl.u32 %v568, 7
        %v570 = vsub.s32 0, %v569
        %v571 = vrot.slane %v566, %v570
        %vm573 = vcmask 261120
        %v575 = vsel %vm573, %v559, 0
        %577 = vmatprep.subr.mxu0 0.0
        %578 = vmatpush1.msra.mxu0 %v562
        %579 = vmatprep.subr.mxu0 0.0
        %580 = vmatpush1.msra.mxu0 %v563
        %581 = vmatprep.subr.mxu0 0.0
        %582 = vmatpush1.msra.mxu0 %v564
        %583 = vmatprep.subr.mxu0 0.0
        %584 = vmatpush1.msra.mxu0 %v565
        %585 = vmatprep.subr.mxu0 0.0
        %586 = vmatpush1.msra.mxu0 0.0
        %587 = vmatprep.subr.mxu0 0.0
        %588 = vmatpush1.msra.mxu0 0.0
        %589 = vmatprep.subr.mxu0 0.0
        %590 = vmatpush1.msra.mxu0 0.0
        %591 = vmatprep.subr.mxu0 0.0
        %592 = vmatpush1.msra.mxu0 0.0
        %593 = vmatprep.subr.mxu0 0.0
        %594 = vmatpush1.msra.mxu0 0.0
        %595 = vmatprep.subr.mxu0 0.0
        %596 = vmatpush1.msra.mxu0 0.0
        %597 = vmatprep.subr.mxu0 0.0
        %598 = vmatpush1.msra.mxu0 0.0
        %599 = vmatprep.subr.mxu0 0.0
        %600 = vmatpush1.msra.mxu0 0.0
        %601 = vmatprep.subr.mxu0 0.0
        %602 = vmatpush1.msra.mxu0 0.0
        %603 = vmatprep.subr.mxu0 0.0
        %604 = vmatpush1.msra.mxu0 0.0
        %605 = vmatprep.subr.mxu0 0.0
        %606 = vmatpush1.msra.mxu0 0.0
        %607 = vmatprep.subr.mxu0 0.0
        %608 = vmatpush1.msra.mxu0 0.0
        %609 = vmatprep.subr.mxu0 0.0
        %610 = vmatpush1.msra.mxu0 0.0
        %611 = vmatprep.subr.mxu0 0.0
        %612 = vmatpush1.msra.mxu0 0.0
        %613 = vmatprep.subr.mxu0 0.0
        %614 = vmatpush1.msra.mxu0 0.0
        %615 = vmatprep.subr.mxu0 0.0
        %616 = vmatpush1.msra.mxu0 0.0
        %617 = vmatprep.subr.mxu0 0.0
        %618 = vmatpush1.msra.mxu0 0.0
        %619 = vmatprep.subr.mxu0 0.0
        %620 = vmatpush1.msra.mxu0 0.0
        %621 = vmatprep.subr.mxu0 0.0
        %622 = vmatpush1.msra.mxu0 0.0
        %623 = vmatprep.subr.mxu0 0.0
        %624 = vmatpush1.msra.mxu0 0.0
        %625 = vmatprep.subr.mxu0 0.0
        %626 = vmatpush1.msra.mxu0 0.0
        %627 = vmatprep.subr.mxu0 0.0
        %628 = vmatpush1.msra.mxu0 0.0
        %629 = vmatprep.subr.mxu0 0.0
        %630 = vmatpush1.msra.mxu0 0.0
        %631 = vmatprep.subr.mxu0 0.0
        %632 = vmatpush1.msra.mxu0 0.0
        %633 = vmatprep.subr.mxu0 0.0
        %634 = vmatpush1.msra.mxu0 0.0
        %635 = vmatprep.subr.mxu0 0.0
        %636 = vmatpush1.msra.mxu0 0.0
        %637 = vmatprep.subr.mxu0 0.0
        %638 = vmatpush1.msra.mxu0 0.0
        %639 = vmatprep.subr.mxu0 0.0
        %640 = vmatpush1.msra.mxu0 0.0
        %641 = vmatprep.mubr.f32.mxu0 0.0
        %642 = vmatmul.mubr.f32.gmra.mrb[0].mxu0 %v575
        %v643 = vpop.f32.mrb[0].mxu0
        %v644 = vadd.f32 %v571, %v643
        %v645 = vpop.f32.mrb[0].mxu0
        %646 = vdwg.mxu0
        %v647 = vld [vmem:[#allocation10] sm:$0xff]
        %v648 = vld [vmem:[#allocation10 + $0x8] sm:$0xff]
        %v649 = vld [vmem:[#allocation10 + $0x10] sm:$0xff]
        %v650 = vld [vmem:[#allocation10 + $0x18] sm:$0xff]
        %v651 = vld [vmem:[#allocation11] sm:$0x1]
        %v653 = vlaneseq
        %v654 = vshrl.u32 %v653, 7
        %v655 = vsub.s32 0, %v654
        %v656 = vrot.slane %v651, %v655
        %v659 = vsel %vm573, %v560, 0
        %v662 = vsel %vm573, %v561, 0
        %664 = vmatprep.subr.mxu0 0.0
        %665 = vmatpush1.msra.mxu0 %v647
        %666 = vmatprep.subr.mxu0 0.0
        %667 = vmatpush1.msra.mxu0 %v648
        %668 = vmatprep.subr.mxu0 0.0
        %669 = vmatpush1.msra.mxu0 %v649
        %670 = vmatprep.subr.mxu0 0.0
        %671 = vmatpush1.msra.mxu0 %v650
        %672 = vmatprep.subr.mxu0 0.0
        %673 = vmatpush1.msra.mxu0 0.0
        %674 = vmatprep.subr.mxu0 0.0
        %675 = vmatpush1.msra.mxu0 0.0
        %676 = vmatprep.subr.mxu0 0.0
        %677 = vmatpush1.msra.mxu0 0.0
        %678 = vmatprep.subr.mxu0 0.0
        %679 = vmatpush1.msra.mxu0 0.0
        %680 = vmatprep.subr.mxu0 0.0
        %681 = vmatpush1.msra.mxu0 0.0
        %682 = vmatprep.subr.mxu0 0.0
        %683 = vmatpush1.msra.mxu0 0.0
        %684 = vmatprep.subr.mxu0 0.0
        %685 = vmatpush1.msra.mxu0 0.0
        %686 = vmatprep.subr.mxu0 0.0
        %687 = vmatpush1.msra.mxu0 0.0
        %688 = vmatprep.subr.mxu0 0.0
        %689 = vmatpush1.msra.mxu0 0.0
        %690 = vmatprep.subr.mxu0 0.0
        %691 = vmatpush1.msra.mxu0 0.0
        %692 = vmatprep.subr.mxu0 0.0
        %693 = vmatpush1.msra.mxu0 0.0
        %694 = vmatprep.subr.mxu0 0.0
        %695 = vmatpush1.msra.mxu0 0.0
        %696 = vmatprep.subr.mxu0 0.0
        %697 = vmatpush1.msra.mxu0 0.0
        %698 = vmatprep.subr.mxu0 0.0
        %699 = vmatpush1.msra.mxu0 0.0
        %700 = vmatprep.subr.mxu0 0.0
        %701 = vmatpush1.msra.mxu0 0.0
        %702 = vmatprep.subr.mxu0 0.0
        %703 = vmatpush1.msra.mxu0 0.0
        %704 = vmatprep.subr.mxu0 0.0
        %705 = vmatpush1.msra.mxu0 0.0
        %706 = vmatprep.subr.mxu0 0.0
        %707 = vmatpush1.msra.mxu0 0.0
        %708 = vmatprep.subr.mxu0 0.0
        %709 = vmatpush1.msra.mxu0 0.0
        %710 = vmatprep.subr.mxu0 0.0
        %711 = vmatpush1.msra.mxu0 0.0
        %712 = vmatprep.subr.mxu0 0.0
        %713 = vmatpush1.msra.mxu0 0.0
        %714 = vmatprep.subr.mxu0 0.0
        %715 = vmatpush1.msra.mxu0 0.0
        %716 = vmatprep.subr.mxu0 0.0
        %717 = vmatpush1.msra.mxu0 0.0
        %718 = vmatprep.subr.mxu0 0.0
        %719 = vmatpush1.msra.mxu0 0.0
        %720 = vmatprep.subr.mxu0 0.0
        %721 = vmatpush1.msra.mxu0 0.0
        %722 = vmatprep.subr.mxu0 0.0
        %723 = vmatpush1.msra.mxu0 0.0
        %724 = vmatprep.subr.mxu0 0.0
        %725 = vmatpush1.msra.mxu0 0.0
        %726 = vmatprep.subr.mxu0 0.0
        %727 = vmatpush1.msra.mxu0 0.0
        %728 = vmatprep.mubr.f32.mxu0 0.0
        %729 = vmatmul.mubr.f32.gmra.mrb[0].mxu0 %v659
        %v730 = vpop.f32.mrb[0].mxu0
        %v731 = vadd.f32 %v656, %v730
        %v732 = vpop.f32.mrb[0].mxu0
        %733 = vmatprep.mubr.f32.mxu0 0.0
        %734 = vmatmul.mubr.f32.gmra.mrb[0].mxu0 %v662
        %v735 = vpop.f32.mrb[0].mxu0
        %v736 = vadd.f32 %v656, %v735
        %v737 = vpop.f32.mrb[0].mxu0
        %738 = vdwg.mxu0
        %vm739 = vcmask 64512
        %v741 = vsel %vm739, %v644, 0
        %v744 = vsel %vm739, %v731, 0
        %v747 = vsel %vm739, %v736, 0
        %749 = vmatprep.subr.mxu0 0.0
        %750 = vmatpush1.xpose.msra.mxu0 %v744
        %751 = vmatprep.subr.mxu0 0.0
        %752 = vmatpush1.xpose.msra.mxu0 %v747
        %753 = vmatprep.subr.mxu0 0.0
        %754 = vmatpush1.xpose.msra.mxu0 0.0
        %755 = vmatprep.subr.mxu0 0.0
        %756 = vmatpush1.xpose.msra.mxu0 0.0
        %757 = vmatprep.subr.mxu0 0.0
        %758 = vmatpush1.xpose.msra.mxu0 0.0
        %759 = vmatprep.subr.mxu0 0.0
        %760 = vmatpush1.xpose.msra.mxu0 0.0
        %761 = vmatprep.subr.mxu0 0.0
        %762 = vmatpush1.xpose.msra.mxu0 0.0
        %763 = vmatprep.subr.mxu0 0.0
        %764 = vmatpush1.xpose.msra.mxu0 0.0
        %765 = vmatprep.subr.mxu0 0.0
        %766 = vmatpush1.xpose.msra.mxu0 0.0
        %767 = vmatprep.subr.mxu0 0.0
        %768 = vmatpush1.xpose.msra.mxu0 0.0
        %769 = vmatprep.subr.mxu0 0.0
        %770 = vmatpush1.xpose.msra.mxu0 0.0
        %771 = vmatprep.subr.mxu0 0.0
        %772 = vmatpush1.xpose.msra.mxu0 0.0
        %773 = vmatprep.subr.mxu0 0.0
        %774 = vmatpush1.xpose.msra.mxu0 0.0
        %775 = vmatprep.subr.mxu0 0.0
        %776 = vmatpush1.xpose.msra.mxu0 0.0
        %777 = vmatprep.subr.mxu0 0.0
        %778 = vmatpush1.xpose.msra.mxu0 0.0
        %779 = vmatprep.subr.mxu0 0.0
        %780 = vmatpush1.xpose.msra.mxu0 0.0
        %781 = vmatprep.subr.mxu0 0.0
        %782 = vmatpush1.xpose.msra.mxu0 0.0
        %783 = vmatprep.subr.mxu0 0.0
        %784 = vmatpush1.xpose.msra.mxu0 0.0
        %785 = vmatprep.subr.mxu0 0.0
        %786 = vmatpush1.xpose.msra.mxu0 0.0
        %787 = vmatprep.subr.mxu0 0.0
        %788 = vmatpush1.xpose.msra.mxu0 0.0
        %789 = vmatprep.subr.mxu0 0.0
        %790 = vmatpush1.xpose.msra.mxu0 0.0
        %791 = vmatprep.subr.mxu0 0.0
        %792 = vmatpush1.xpose.msra.mxu0 0.0
        %793 = vmatprep.subr.mxu0 0.0
        %794 = vmatpush1.xpose.msra.mxu0 0.0
        %795 = vmatprep.subr.mxu0 0.0
        %796 = vmatpush1.xpose.msra.mxu0 0.0
        %797 = vmatprep.subr.mxu0 0.0
        %798 = vmatpush1.xpose.msra.mxu0 0.0
        %799 = vmatprep.subr.mxu0 0.0
        %800 = vmatpush1.xpose.msra.mxu0 0.0
        %801 = vmatprep.subr.mxu0 0.0
        %802 = vmatpush1.xpose.msra.mxu0 0.0
        %803 = vmatprep.subr.mxu0 0.0
        %804 = vmatpush1.xpose.msra.mxu0 0.0
        %805 = vmatprep.subr.mxu0 0.0
        %806 = vmatpush1.xpose.msra.mxu0 0.0
        %807 = vmatprep.subr.mxu0 0.0
        %808 = vmatpush1.xpose.msra.mxu0 0.0
        %809 = vmatprep.subr.mxu0 0.0
        %810 = vmatpush1.xpose.msra.mxu0 0.0
        %811 = vmatprep.subr.mxu0 0.0
        %812 = vmatpush1.xpose.msra.mxu0 0.0
        %813 = vmatprep.mubr.f32.mxu0 0.0
        %814 = vmatmul.mubr.f32.gmra.mrb[0].mxu0 %v741
        %v815 = vpop.f32.mrb[0].mxu0
        %v816 = vadd.f32 0.0, %v815
        %v817 = vpop.f32.mrb[0].mxu0
        %818 = vdwg.mxu0
        %v819 = vmul.f32 %v816, 0.35355338
        %vm820 = vcmask 130048
        %v821 = vsel %vm820, %v819, -inf
        %822 = vmax.xlane.f32.xlu0 %v821
        %v823 = vpop.xlane.xlu0 %822
        %v824 = vsub.f32 %v819, %v823
        %v825 = vmul.f32 %v824, 1.442695
        %v826 = vpow.pop %v825
        %v827 = vsel %vm820, %v826, 0.0
        %828 = vadd.xlane.f32.xlu0 %v827
        %v829 = vpop.xlane.xlu0 %828
        %v830 = vrcp.pop %v829
        %831 = vrot.lane.b32.xlu0 %v731, 96
        %v832 = vpop.permute.xlu0 %831
        %833 = vrot.lane.b32.xlu0 %v736, 96
        %v834 = vpop.permute.xlu0 %833
        %v838 = vsel %vm820, %v826, 0
        %840 = vmatprep.subr.mxu0 0.0
        %841 = vmatpush1.msra.mxu0 %v832
        %842 = vmatprep.subr.mxu0 0.0
        %843 = vmatpush1.msra.mxu0 %v834
        %844 = vmatprep.subr.mxu0 0.0
        %845 = vmatpush1.msra.mxu0 0.0
        %846 = vmatprep.subr.mxu0 0.0
        %847 = vmatpush1.msra.mxu0 0.0
        %848 = vmatprep.subr.mxu0 0.0
        %849 = vmatpush1.msra.mxu0 0.0
        %850 = vmatprep.subr.mxu0 0.0
        %851 = vmatpush1.msra.mxu0 0.0
        %852 = vmatprep.subr.mxu0 0.0
        %853 = vmatpush1.msra.mxu0 0.0
        %854 = vmatprep.subr.mxu0 0.0
        %855 = vmatpush1.msra.mxu0 0.0
        %856 = vmatprep.subr.mxu0 0.0
        %857 = vmatpush1.msra.mxu0 0.0
        %858 = vmatprep.subr.mxu0 0.0
        %859 = vmatpush1.msra.mxu0 0.0
        %860 = vmatprep.subr.mxu0 0.0
        %861 = vmatpush1.msra.mxu0 0.0
        %862 = vmatprep.subr.mxu0 0.0
        %863 = vmatpush1.msra.mxu0 0.0
        %864 = vmatprep.subr.mxu0 0.0
        %865 = vmatpush1.msra.mxu0 0.0
        %866 = vmatprep.subr.mxu0 0.0
        %867 = vmatpush1.msra.mxu0 0.0
        %868 = vmatprep.subr.mxu0 0.0
        %869 = vmatpush1.msra.mxu0 0.0
        %870 = vmatprep.subr.mxu0 0.0
        %871 = vmatpush1.msra.mxu0 0.0
        %872 = vmatprep.subr.mxu0 0.0
        %873 = vmatpush1.msra.mxu0 0.0
        %874 = vmatprep.subr.mxu0 0.0
        %875 = vmatpush1.msra.mxu0 0.0
        %876 = vmatprep.subr.mxu0 0.0
        %877 = vmatpush1.msra.mxu0 0.0
        %878 = vmatprep.subr.mxu0 0.0
        %879 = vmatpush1.msra.mxu0 0.0
        %880 = vmatprep.subr.mxu0 0.0
        %881 = vmatpush1.msra.mxu0 0.0
        %882 = vmatprep.subr.mxu0 0.0
        %883 = vmatpush1.msra.mxu0 0.0
        %884 = vmatprep.subr.mxu0 0.0
        %885 = vmatpush1.msra.mxu0 0.0
        %886 = vmatprep.subr.mxu0 0.0
        %887 = vmatpush1.msra.mxu0 0.0
        %888 = vmatprep.subr.mxu0 0.0
        %889 = vmatpush1.msra.mxu0 0.0
        %890 = vmatprep.subr.mxu0 0.0
        %891 = vmatpush1.msra.mxu0 0.0
        %892 = vmatprep.subr.mxu0 0.0
        %893 = vmatpush1.msra.mxu0 0.0
        %894 = vmatprep.subr.mxu0 0.0
        %895 = vmatpush1.msra.mxu0 0.0
        %896 = vmatprep.subr.mxu0 0.0
        %897 = vmatpush1.msra.mxu0 0.0
        %898 = vmatprep.subr.mxu0 0.0
        %899 = vmatpush1.msra.mxu0 0.0
        %900 = vmatprep.subr.mxu0 0.0
        %901 = vmatpush1.msra.mxu0 0.0
        %902 = vmatprep.subr.mxu0 0.0
        %903 = vmatpush1.msra.mxu0 0.0
        %904 = vmatprep.mubr.f32.mxu0 0.0
        %905 = vmatmul.mubr.f32.gmra.mrb[0].mxu0 %v838
        %v906 = vpop.f32.mrb[0].mxu0
        %v907 = vadd.f32 0.0, %v906
        %v908 = vpop.f32.mrb[0].mxu0
        %909 = vdwg.mxu0
        %v910 = vmul.f32 %v907, %v830
        %v911 = vld [vmem:[#allocation13] sm:$0xff]
        %v912 = vmul.f32 %v826, %v830
        %v913 = vadd.f32 %v912, 0.0
        %914 = vrot.lane.b32.xlu0 %v644, 120
        %v915 = vpop.permute.xlu0 %914
        %916 = vrot.lane.b32.xlu0 %v731, 120
        %v917 = vpop.permute.xlu0 %916
        %918 = vrot.lane.b32.xlu0 %v736, 120
        %v919 = vpop.permute.xlu0 %918
        %v920 = vsel %vm739, %v915, 0
        %v922 = vsel %vm739, %v917, 0
        %v924 = vsel %vm739, %v919, 0
        %926 = vmatprep.subr.mxu0 0.0
        %927 = vmatpush1.xpose.msra.mxu0 %v922
        %928 = vmatprep.subr.mxu0 0.0
        %929 = vmatpush1.xpose.msra.mxu0 %v924
        %930 = vmatprep.subr.mxu0 0.0
        %931 = vmatpush1.xpose.msra.mxu0 0.0
        %932 = vmatprep.subr.mxu0 0.0
        %933 = vmatpush1.xpose.msra.mxu0 0.0
        %934 = vmatprep.subr.mxu0 0.0
        %935 = vmatpush1.xpose.msra.mxu0 0.0
        %936 = vmatprep.subr.mxu0 0.0
        %937 = vmatpush1.xpose.msra.mxu0 0.0
        %938 = vmatprep.subr.mxu0 0.0
        %939 = vmatpush1.xpose.msra.mxu0 0.0
        %940 = vmatprep.subr.mxu0 0.0
        %941 = vmatpush1.xpose.msra.mxu0 0.0
        %942 = vmatprep.subr.mxu0 0.0
        %943 = vmatpush1.xpose.msra.mxu0 0.0
        %944 = vmatprep.subr.mxu0 0.0
        %945 = vmatpush1.xpose.msra.mxu0 0.0
        %946 = vmatprep.subr.mxu0 0.0
        %947 = vmatpush1.xpose.msra.mxu0 0.0
        %948 = vmatprep.subr.mxu0 0.0
        %949 = vmatpush1.xpose.msra.mxu0 0.0
        %950 = vmatprep.subr.mxu0 0.0
        %951 = vmatpush1.xpose.msra.mxu0 0.0
        %952 = vmatprep.subr.mxu0 0.0
        %953 = vmatpush1.xpose.msra.mxu0 0.0
        %954 = vmatprep.subr.mxu0 0.0
        %955 = vmatpush1.xpose.msra.mxu0 0.0
        %956 = vmatprep.subr.mxu0 0.0
        %957 = vmatpush1.xpose.msra.mxu0 0.0
        %958 = vmatprep.subr.mxu0 0.0
        %959 = vmatpush1.xpose.msra.mxu0 0.0
        %960 = vmatprep.subr.mxu0 0.0
        %961 = vmatpush1.xpose.msra.mxu0 0.0
        %962 = vmatprep.subr.mxu0 0.0
        %963 = vmatpush1.xpose.msra.mxu0 0.0
        %964 = vmatprep.subr.mxu0 0.0
        %965 = vmatpush1.xpose.msra.mxu0 0.0
        %966 = vmatprep.subr.mxu0 0.0
        %967 = vmatpush1.xpose.msra.mxu0 0.0
        %968 = vmatprep.subr.mxu0 0.0
        %969 = vmatpush1.xpose.msra.mxu0 0.0
        %970 = vmatprep.subr.mxu0 0.0
        %971 = vmatpush1.xpose.msra.mxu0 0.0
        %972 = vmatprep.subr.mxu0 0.0
        %973 = vmatpush1.xpose.msra.mxu0 0.0
        %974 = vmatprep.subr.mxu0 0.0
        %975 = vmatpush1.xpose.msra.mxu0 0.0
        %976 = vmatprep.subr.mxu0 0.0
        %977 = vmatpush1.xpose.msra.mxu0 0.0
        %978 = vmatprep.subr.mxu0 0.0
        %979 = vmatpush1.xpose.msra.mxu0 0.0
        %980 = vmatprep.subr.mxu0 0.0
        %981 = vmatpush1.xpose.msra.mxu0 0.0
        %982 = vmatprep.subr.mxu0 0.0
        %983 = vmatpush1.xpose.msra.mxu0 0.0
        %984 = vmatprep.subr.mxu0 0.0
        %985 = vmatpush1.xpose.msra.mxu0 0.0
        %986 = vmatprep.subr.mxu0 0.0
        %987 = vmatpush1.xpose.msra.mxu0 0.0
        %988 = vmatprep.subr.mxu0 0.0
        %989 = vmatpush1.xpose.msra.mxu0 0.0
        %990 = vmatprep.mubr.f32.mxu0 0.0
        %991 = vmatmul.mubr.f32.gmra.mrb[0].mxu0 %v920
        %v992 = vpop.f32.mrb[0].mxu0
        %v993 = vadd.f32 0.0, %v992
        %v994 = vpop.f32.mrb[0].mxu0
        %995 = vdwg.mxu0
        %v996 = vmul.f32 %v993, 0.35355338
        %v997 = vsel %vm820, %v996, -inf
        %998 = vmax.xlane.f32.xlu0 %v997
        %v999 = vpop.xlane.xlu0 %998
        %v1000 = vsub.f32 %v996, %v999
        %v1001 = vmul.f32 %v1000, 1.442695
        %v1002 = vpow.pop %v1001
        %v1003 = vsel %vm820, %v1002, 0.0
        %1004 = vadd.xlane.f32.xlu0 %v1003
        %v1005 = vpop.xlane.xlu0 %1004
        %v1006 = vrcp.pop %v1005
        %1007 = vrot.lane.b32.xlu0 %v731, 88
        %v1008 = vpop.permute.xlu0 %1007
        %1009 = vrot.lane.b32.xlu0 %v736, 88
        %v1010 = vpop.permute.xlu0 %1009
        %v1014 = vsel %vm820, %v1002, 0
        %1016 = vmatprep.subr.mxu0 0.0
        %1017 = vmatpush1.msra.mxu0 %v1008
        %1018 = vmatprep.subr.mxu0 0.0
        %1019 = vmatpush1.msra.mxu0 %v1010
        %1020 = vmatprep.subr.mxu0 0.0
        %1021 = vmatpush1.msra.mxu0 0.0
        %1022 = vmatprep.subr.mxu0 0.0
        %1023 = vmatpush1.msra.mxu0 0.0
        %1024 = vmatprep.subr.mxu0 0.0
        %1025 = vmatpush1.msra.mxu0 0.0
        %1026 = vmatprep.subr.mxu0 0.0
        %1027 = vmatpush1.msra.mxu0 0.0
        %1028 = vmatprep.subr.mxu0 0.0
        %1029 = vmatpush1.msra.mxu0 0.0
        %1030 = vmatprep.subr.mxu0 0.0
        %1031 = vmatpush1.msra.mxu0 0.0
        %1032 = vmatprep.subr.mxu0 0.0
        %1033 = vmatpush1.msra.mxu0 0.0
        %1034 = vmatprep.subr.mxu0 0.0
        %1035 = vmatpush1.msra.mxu0 0.0
        %1036 = vmatprep.subr.mxu0 0.0
        %1037 = vmatpush1.msra.mxu0 0.0
        %1038 = vmatprep.subr.mxu0 0.0
        %1039 = vmatpush1.msra.mxu0 0.0
        %1040 = vmatprep.subr.mxu0 0.0
        %1041 = vmatpush1.msra.mxu0 0.0
        %1042 = vmatprep.subr.mxu0 0.0
        %1043 = vmatpush1.msra.mxu0 0.0
        %1044 = vmatprep.subr.mxu0 0.0
        %1045 = vmatpush1.msra.mxu0 0.0
        %1046 = vmatprep.subr.mxu0 0.0
        %1047 = vmatpush1.msra.mxu0 0.0
        %1048 = vmatprep.subr.mxu0 0.0
        %1049 = vmatpush1.msra.mxu0 0.0
        %1050 = vmatprep.subr.mxu0 0.0
        %1051 = vmatpush1.msra.mxu0 0.0
        %1052 = vmatprep.subr.mxu0 0.0
        %1053 = vmatpush1.msra.mxu0 0.0
        %1054 = vmatprep.subr.mxu0 0.0
        %1055 = vmatpush1.msra.mxu0 0.0
        %1056 = vmatprep.subr.mxu0 0.0
        %1057 = vmatpush1.msra.mxu0 0.0
        %1058 = vmatprep.subr.mxu0 0.0
        %1059 = vmatpush1.msra.mxu0 0.0
        %1060 = vmatprep.subr.mxu0 0.0
        %1061 = vmatpush1.msra.mxu0 0.0
        %1062 = vmatprep.subr.mxu0 0.0
        %1063 = vmatpush1.msra.mxu0 0.0
        %1064 = vmatprep.subr.mxu0 0.0
        %1065 = vmatpush1.msra.mxu0 0.0
        %1066 = vmatprep.subr.mxu0 0.0
        %1067 = vmatpush1.msra.mxu0 0.0
        %1068 = vmatprep.subr.mxu0 0.0
        %1069 = vmatpush1.msra.mxu0 0.0
        %1070 = vmatprep.subr.mxu0 0.0
        %1071 = vmatpush1.msra.mxu0 0.0
        %1072 = vmatprep.subr.mxu0 0.0
        %1073 = vmatpush1.msra.mxu0 0.0
        %1074 = vmatprep.subr.mxu0 0.0
        %1075 = vmatpush1.msra.mxu0 0.0
        %1076 = vmatprep.subr.mxu0 0.0
        %1077 = vmatpush1.msra.mxu0 0.0
        %1078 = vmatprep.subr.mxu0 0.0
        %1079 = vmatpush1.msra.mxu0 0.0
        %1080 = vmatprep.mubr.f32.mxu0 0.0
        %1081 = vmatmul.mubr.f32.gmra.mrb[0].mxu0 %v1014
        %v1082 = vpop.f32.mrb[0].mxu0
        %v1083 = vadd.f32 0.0, %v1082
        %v1084 = vpop.f32.mrb[0].mxu0
        %1085 = vdwg.mxu0
        %v1086 = vmul.f32 %v1083, %v1006
        %v1087 = vld [vmem:[#allocation13 + $0x8] sm:$0xff]
        %v1089 = vsel %vm739, %v1086, 0
        %1091 = vmatprep.subr.mxu0 0.0
        %1092 = vmatpush1.msra.mxu0 %v1087
        %1093 = vmatprep.subr.mxu0 0.0
        %1094 = vmatpush1.msra.mxu0 0.0
        %1095 = vmatprep.subr.mxu0 0.0
        %1096 = vmatpush1.msra.mxu0 0.0
        %1097 = vmatprep.subr.mxu0 0.0
        %1098 = vmatpush1.msra.mxu0 0.0
        %1099 = vmatprep.subr.mxu0 0.0
        %1100 = vmatpush1.msra.mxu0 0.0
        %1101 = vmatprep.subr.mxu0 0.0
        %1102 = vmatpush1.msra.mxu0 0.0
        %1103 = vmatprep.subr.mxu0 0.0
        %1104 = vmatpush1.msra.mxu0 0.0
        %1105 = vmatprep.subr.mxu0 0.0
        %1106 = vmatpush1.msra.mxu0 0.0
        %1107 = vmatprep.subr.mxu0 0.0
        %1108 = vmatpush1.msra.mxu0 0.0
        %1109 = vmatprep.subr.mxu0 0.0
        %1110 = vmatpush1.msra.mxu0 0.0
        %1111 = vmatprep.subr.mxu0 0.0
        %1112 = vmatpush1.msra.mxu0 0.0
        %1113 = vmatprep.subr.mxu0 0.0
        %1114 = vmatpush1.msra.mxu0 0.0
        %1115 = vmatprep.subr.mxu0 0.0
        %1116 = vmatpush1.msra.mxu0 0.0
        %1117 = vmatprep.subr.mxu0 0.0
        %1118 = vmatpush1.msra.mxu0 0.0
        %1119 = vmatprep.subr.mxu0 0.0
        %1120 = vmatpush1.msra.mxu0 0.0
        %1121 = vmatprep.subr.mxu0 0.0
        %1122 = vmatpush1.msra.mxu0 0.0
        %1123 = vmatprep.subr.mxu0 0.0
        %1124 = vmatpush1.msra.mxu0 0.0
        %1125 = vmatprep.subr.mxu0 0.0
        %1126 = vmatpush1.msra.mxu0 0.0
        %1127 = vmatprep.subr.mxu0 0.0
        %1128 = vmatpush1.msra.mxu0 0.0
        %1129 = vmatprep.subr.mxu0 0.0
        %1130 = vmatpush1.msra.mxu0 0.0
        %1131 = vmatprep.subr.mxu0 0.0
        %1132 = vmatpush1.msra.mxu0 0.0
        %1133 = vmatprep.subr.mxu0 0.0
        %1134 = vmatpush1.msra.mxu0 0.0
        %1135 = vmatprep.subr.mxu0 0.0
        %1136 = vmatpush1.msra.mxu0 0.0
        %1137 = vmatprep.subr.mxu0 0.0
        %1138 = vmatpush1.msra.mxu0 0.0
        %1139 = vmatprep.subr.mxu0 0.0
        %1140 = vmatpush1.msra.mxu0 0.0
        %1141 = vmatprep.subr.mxu0 0.0
        %1142 = vmatpush1.msra.mxu0 0.0
        %1143 = vmatprep.subr.mxu0 0.0
        %1144 = vmatpush1.msra.mxu0 0.0
        %1145 = vmatprep.subr.mxu0 0.0
        %1146 = vmatpush1.msra.mxu0 0.0
        %1147 = vmatprep.subr.mxu0 0.0
        %1148 = vmatpush1.msra.mxu0 0.0
        %1149 = vmatprep.subr.mxu0 0.0
        %1150 = vmatpush1.msra.mxu0 0.0
        %1151 = vmatprep.subr.mxu0 0.0
        %1152 = vmatpush1.msra.mxu0 0.0
        %1153 = vmatprep.subr.mxu0 0.0
        %1154 = vmatpush1.msra.mxu0 0.0
        %1155 = vmatprep.mubr.f32.mxu0 0.0
        %1156 = vmatmul.mubr.f32.gmra.mrb[0].mxu0 %v1089
        %v1157 = vpop.f32.mrb[0].mxu0
        %v1158 = vadd.f32 0.0, %v1157
        %v1159 = vpop.f32.mrb[0].mxu0
        %1160 = vdwg.mxu0
        %v1162 = vsel %vm739, %v910, 0
        %1164 = vmatprep.subr.mxu0 0.0
        %1165 = vmatpush1.msra.mxu0 %v911
        %1166 = vmatprep.subr.mxu0 0.0
        %1167 = vmatpush1.msra.mxu0 0.0
        %1168 = vmatprep.subr.mxu0 0.0
        %1169 = vmatpush1.msra.mxu0 0.0
        %1170 = vmatprep.subr.mxu0 0.0
        %1171 = vmatpush1.msra.mxu0 0.0
        %1172 = vmatprep.subr.mxu0 0.0
        %1173 = vmatpush1.msra.mxu0 0.0
        %1174 = vmatprep.subr.mxu0 0.0
        %1175 = vmatpush1.msra.mxu0 0.0
        %1176 = vmatprep.subr.mxu0 0.0
        %1177 = vmatpush1.msra.mxu0 0.0
        %1178 = vmatprep.subr.mxu0 0.0
        %1179 = vmatpush1.msra.mxu0 0.0
        %1180 = vmatprep.subr.mxu0 0.0
        %1181 = vmatpush1.msra.mxu0 0.0
        %1182 = vmatprep.subr.mxu0 0.0
        %1183 = vmatpush1.msra.mxu0 0.0
        %1184 = vmatprep.subr.mxu0 0.0
        %1185 = vmatpush1.msra.mxu0 0.0
        %1186 = vmatprep.subr.mxu0 0.0
        %1187 = vmatpush1.msra.mxu0 0.0
        %1188 = vmatprep.subr.mxu0 0.0
        %1189 = vmatpush1.msra.mxu0 0.0
        %1190 = vmatprep.subr.mxu0 0.0
        %1191 = vmatpush1.msra.mxu0 0.0
        %1192 = vmatprep.subr.mxu0 0.0
        %1193 = vmatpush1.msra.mxu0 0.0
        %1194 = vmatprep.subr.mxu0 0.0
        %1195 = vmatpush1.msra.mxu0 0.0
        %1196 = vmatprep.subr.mxu0 0.0
        %1197 = vmatpush1.msra.mxu0 0.0
        %1198 = vmatprep.subr.mxu0 0.0
        %1199 = vmatpush1.msra.mxu0 0.0
        %1200 = vmatprep.subr.mxu0 0.0
        %1201 = vmatpush1.msra.mxu0 0.0
        %1202 = vmatprep.subr.mxu0 0.0
        %1203 = vmatpush1.msra.mxu0 0.0
        %1204 = vmatprep.subr.mxu0 0.0
        %1205 = vmatpush1.msra.mxu0 0.0
        %1206 = vmatprep.subr.mxu0 0.0
        %1207 = vmatpush1.msra.mxu0 0.0
        %1208 = vmatprep.subr.mxu0 0.0
        %1209 = vmatpush1.msra.mxu0 0.0
        %1210 = vmatprep.subr.mxu0 0.0
        %1211 = vmatpush1.msra.mxu0 0.0
        %1212 = vmatprep.subr.mxu0 0.0
        %1213 = vmatpush1.msra.mxu0 0.0
        %1214 = vmatprep.subr.mxu0 0.0
        %1215 = vmatpush1.msra.mxu0 0.0
        %1216 = vmatprep.subr.mxu0 0.0
        %1217 = vmatpush1.msra.mxu0 0.0
        %1218 = vmatprep.subr.mxu0 0.0
        %1219 = vmatpush1.msra.mxu0 0.0
        %1220 = vmatprep.subr.mxu0 0.0
        %1221 = vmatpush1.msra.mxu0 0.0
        %1222 = vmatprep.subr.mxu0 0.0
        %1223 = vmatpush1.msra.mxu0 0.0
        %1224 = vmatprep.subr.mxu0 0.0
        %1225 = vmatpush1.msra.mxu0 0.0
        %1226 = vmatprep.subr.mxu0 0.0
        %1227 = vmatpush1.msra.mxu0 0.0
        %1228 = vmatprep.mubr.f32.mxu0 0.0
        %1229 = vmatmul.mubr.f32.gmra.mrb[0].mxu0 %v1162
        %v1230 = vpop.f32.mrb[0].mxu0
        %v1231 = vadd.f32 %v1158, %v1230
        %v1232 = vpop.f32.mrb[0].mxu0
        %1233 = vdwg.mxu0
        %v1234 = vmul.f32 %v1002, %v1006
        %v1235 = vadd.f32 %v913, %v1234
        %1236 = vrot.lane.b32.xlu0 %v644, 112
        %v1237 = vpop.permute.xlu0 %1236
        %1238 = vrot.lane.b32.xlu0 %v731, 112
        %v1239 = vpop.permute.xlu0 %1238
        %1240 = vrot.lane.b32.xlu0 %v736, 112
        %v1241 = vpop.permute.xlu0 %1240
        %v1242 = vsel %vm739, %v1237, 0
        %v1244 = vsel %vm739, %v1239, 0
        %v1246 = vsel %vm739, %v1241, 0
        %1248 = vmatprep.subr.mxu0 0.0
        %1249 = vmatpush1.xpose.msra.mxu0 %v1244
        %1250 = vmatprep.subr.mxu0 0.0
        %1251 = vmatpush1.xpose.msra.mxu0 %v1246
        %1252 = vmatprep.subr.mxu0 0.0
        %1253 = vmatpush1.xpose.msra.mxu0 0.0
        %1254 = vmatprep.subr.mxu0 0.0
        %1255 = vmatpush1.xpose.msra.mxu0 0.0
        %1256 = vmatprep.subr.mxu0 0.0
        %1257 = vmatpush1.xpose.msra.mxu0 0.0
        %1258 = vmatprep.subr.mxu0 0.0
        %1259 = vmatpush1.xpose.msra.mxu0 0.0
        %1260 = vmatprep.subr.mxu0 0.0
        %1261 = vmatpush1.xpose.msra.mxu0 0.0
        %1262 = vmatprep.subr.mxu0 0.0
        %1263 = vmatpush1.xpose.msra.mxu0 0.0
        %1264 = vmatprep.subr.mxu0 0.0
        %1265 = vmatpush1.xpose.msra.mxu0 0.0
        %1266 = vmatprep.subr.mxu0 0.0
        %1267 = vmatpush1.xpose.msra.mxu0 0.0
        %1268 = vmatprep.subr.mxu0 0.0
        %1269 = vmatpush1.xpose.msra.mxu0 0.0
        %1270 = vmatprep.subr.mxu0 0.0
        %1271 = vmatpush1.xpose.msra.mxu0 0.0
        %1272 = vmatprep.subr.mxu0 0.0
        %1273 = vmatpush1.xpose.msra.mxu0 0.0
        %1274 = vmatprep.subr.mxu0 0.0
        %1275 = vmatpush1.xpose.msra.mxu0 0.0
        %1276 = vmatprep.subr.mxu0 0.0
        %1277 = vmatpush1.xpose.msra.mxu0 0.0
        %1278 = vmatprep.subr.mxu0 0.0
        %1279 = vmatpush1.xpose.msra.mxu0 0.0
        %1280 = vmatprep.subr.mxu0 0.0
        %1281 = vmatpush1.xpose.msra.mxu0 0.0
        %1282 = vmatprep.subr.mxu0 0.0
        %1283 = vmatpush1.xpose.msra.mxu0 0.0
        %1284 = vmatprep.subr.mxu0 0.0
        %1285 = vmatpush1.xpose.msra.mxu0 0.0
        %1286 = vmatprep.subr.mxu0 0.0
        %1287 = vmatpush1.xpose.msra.mxu0 0.0
        %1288 = vmatprep.subr.mxu0 0.0
        %1289 = vmatpush1.xpose.msra.mxu0 0.0
        %1290 = vmatprep.subr.mxu0 0.0
        %1291 = vmatpush1.xpose.msra.mxu0 0.0
        %1292 = vmatprep.subr.mxu0 0.0
        %1293 = vmatpush1.xpose.msra.mxu0 0.0
        %1294 = vmatprep.subr.mxu0 0.0
        %1295 = vmatpush1.xpose.msra.mxu0 0.0
        %1296 = vmatprep.subr.mxu0 0.0
        %1297 = vmatpush1.xpose.msra.mxu0 0.0
        %1298 = vmatprep.subr.mxu0 0.0
        %1299 = vmatpush1.xpose.msra.mxu0 0.0
        %1300 = vmatprep.subr.mxu0 0.0
        %1301 = vmatpush1.xpose.msra.mxu0 0.0
        %1302 = vmatprep.subr.mxu0 0.0
        %1303 = vmatpush1.xpose.msra.mxu0 0.0
        %1304 = vmatprep.subr.mxu0 0.0
        %1305 = vmatpush1.xpose.msra.mxu0 0.0
        %1306 = vmatprep.subr.mxu0 0.0
        %1307 = vmatpush1.xpose.msra.mxu0 0.0
        %1308 = vmatprep.subr.mxu0 0.0
        %1309 = vmatpush1.xpose.msra.mxu0 0.0
        %1310 = vmatprep.subr.mxu0 0.0
        %1311 = vmatpush1.xpose.msra.mxu0 0.0
        %1312 = vmatprep.mubr.f32.mxu0 0.0
        %1313 = vmatmul.mubr.f32.gmra.mrb[0].mxu0 %v1242
        %v1314 = vpop.f32.mrb[0].mxu0
        %v1315 = vadd.f32 0.0, %v1314
        %v1316 = vpop.f32.mrb[0].mxu0
        %1317 = vdwg.mxu0
        %v1318 = vmul.f32 %v1315, 0.35355338
        %v1319 = vsel %vm820, %v1318, -inf
        %1320 = vmax.xlane.f32.xlu0 %v1319
        %v1321 = vpop.xlane.xlu0 %1320
        %v1322 = vsub.f32 %v1318, %v1321
        %v1323 = vmul.f32 %v1322, 1.442695
        %v1324 = vpow.pop %v1323
        %v1325 = vsel %vm820, %v1324, 0.0
        %1326 = vadd.xlane.f32.xlu0 %v1325
        %v1327 = vpop.xlane.xlu0 %1326
        %v1328 = vrcp.pop %v1327
        %1329 = vrot.lane.b32.xlu0 %v731, 80
        %v1330 = vpop.permute.xlu0 %1329
        %1331 = vrot.lane.b32.xlu0 %v736, 80
        %v1332 = vpop.permute.xlu0 %1331
        %v1336 = vsel %vm820, %v1324, 0
        %1338 = vmatprep.subr.mxu0 0.0
        %1339 = vmatpush1.msra.mxu0 %v1330
        %1340 = vmatprep.subr.mxu0 0.0
        %1341 = vmatpush1.msra.mxu0 %v1332
        %1342 = vmatprep.subr.mxu0 0.0
        %1343 = vmatpush1.msra.mxu0 0.0
        %1344 = vmatprep.subr.mxu0 0.0
        %1345 = vmatpush1.msra.mxu0 0.0
        %1346 = vmatprep.subr.mxu0 0.0
        %1347 = vmatpush1.msra.mxu0 0.0
        %1348 = vmatprep.subr.mxu0 0.0
        %1349 = vmatpush1.msra.mxu0 0.0
        %1350 = vmatprep.subr.mxu0 0.0
        %1351 = vmatpush1.msra.mxu0 0.0
        %1352 = vmatprep.subr.mxu0 0.0
        %1353 = vmatpush1.msra.mxu0 0.0
        %1354 = vmatprep.subr.mxu0 0.0
        %1355 = vmatpush1.msra.mxu0 0.0
        %1356 = vmatprep.subr.mxu0 0.0
        %1357 = vmatpush1.msra.mxu0 0.0
        %1358 = vmatprep.subr.mxu0 0.0
        %1359 = vmatpush1.msra.mxu0 0.0
        %1360 = vmatprep.subr.mxu0 0.0
        %1361 = vmatpush1.msra.mxu0 0.0
        %1362 = vmatprep.subr.mxu0 0.0
        %1363 = vmatpush1.msra.mxu0 0.0
        %1364 = vmatprep.subr.mxu0 0.0
        %1365 = vmatpush1.msra.mxu0 0.0
        %1366 = vmatprep.subr.mxu0 0.0
        %1367 = vmatpush1.msra.mxu0 0.0
        %1368 = vmatprep.subr.mxu0 0.0
        %1369 = vmatpush1.msra.mxu0 0.0
        %1370 = vmatprep.subr.mxu0 0.0
        %1371 = vmatpush1.msra.mxu0 0.0
        %1372 = vmatprep.subr.mxu0 0.0
        %1373 = vmatpush1.msra.mxu0 0.0
        %1374 = vmatprep.subr.mxu0 0.0
        %1375 = vmatpush1.msra.mxu0 0.0
        %1376 = vmatprep.subr.mxu0 0.0
        %1377 = vmatpush1.msra.mxu0 0.0
        %1378 = vmatprep.subr.mxu0 0.0
        %1379 = vmatpush1.msra.mxu0 0.0
        %1380 = vmatprep.subr.mxu0 0.0
        %1381 = vmatpush1.msra.mxu0 0.0
        %1382 = vmatprep.subr.mxu0 0.0
        %1383 = vmatpush1.msra.mxu0 0.0
        %1384 = vmatprep.subr.mxu0 0.0
        %1385 = vmatpush1.msra.mxu0 0.0
        %1386 = vmatprep.subr.mxu0 0.0
        %1387 = vmatpush1.msra.mxu0 0.0
        %1388 = vmatprep.subr.mxu0 0.0
        %1389 = vmatpush1.msra.mxu0 0.0
        %1390 = vmatprep.subr.mxu0 0.0
        %1391 = vmatpush1.msra.mxu0 0.0
        %1392 = vmatprep.subr.mxu0 0.0
        %1393 = vmatpush1.msra.mxu0 0.0
        %1394 = vmatprep.subr.mxu0 0.0
        %1395 = vmatpush1.msra.mxu0 0.0
        %1396 = vmatprep.subr.mxu0 0.0
        %1397 = vmatpush1.msra.mxu0 0.0
        %1398 = vmatprep.subr.mxu0 0.0
        %1399 = vmatpush1.msra.mxu0 0.0
        %1400 = vmatprep.subr.mxu0 0.0
        %1401 = vmatpush1.msra.mxu0 0.0
        %1402 = vmatprep.mubr.f32.mxu0 0.0
        %1403 = vmatmul.mubr.f32.gmra.mrb[0].mxu0 %v1336
        %v1404 = vpop.f32.mrb[0].mxu0
        %v1405 = vadd.f32 0.0, %v1404
        %v1406 = vpop.f32.mrb[0].mxu0
        %1407 = vdwg.mxu0
        %v1408 = vmul.f32 %v1405, %v1328
        %v1409 = vld [vmem:[#allocation13 + $0x10] sm:$0xff]
        %v1411 = vsel %vm739, %v1408, 0
        %1413 = vmatprep.subr.mxu0 0.0
        %1414 = vmatpush1.msra.mxu0 %v1409
        %1415 = vmatprep.subr.mxu0 0.0
        %1416 = vmatpush1.msra.mxu0 0.0
        %1417 = vmatprep.subr.mxu0 0.0
        %1418 = vmatpush1.msra.mxu0 0.0
        %1419 = vmatprep.subr.mxu0 0.0
        %1420 = vmatpush1.msra.mxu0 0.0
        %1421 = vmatprep.subr.mxu0 0.0
        %1422 = vmatpush1.msra.mxu0 0.0
        %1423 = vmatprep.subr.mxu0 0.0
        %1424 = vmatpush1.msra.mxu0 0.0
        %1425 = vmatprep.subr.mxu0 0.0
        %1426 = vmatpush1.msra.mxu0 0.0
        %1427 = vmatprep.subr.mxu0 0.0
        %1428 = vmatpush1.msra.mxu0 0.0
        %1429 = vmatprep.subr.mxu0 0.0
        %1430 = vmatpush1.msra.mxu0 0.0
        %1431 = vmatprep.subr.mxu0 0.0
        %1432 = vmatpush1.msra.mxu0 0.0
        %1433 = vmatprep.subr.mxu0 0.0
        %1434 = vmatpush1.msra.mxu0 0.0
        %1435 = vmatprep.subr.mxu0 0.0
        %1436 = vmatpush1.msra.mxu0 0.0
        %1437 = vmatprep.subr.mxu0 0.0
        %1438 = vmatpush1.msra.mxu0 0.0
        %1439 = vmatprep.subr.mxu0 0.0
        %1440 = vmatpush1.msra.mxu0 0.0
        %1441 = vmatprep.subr.mxu0 0.0
        %1442 = vmatpush1.msra.mxu0 0.0
        %1443 = vmatprep.subr.mxu0 0.0
        %1444 = vmatpush1.msra.mxu0 0.0
        %1445 = vmatprep.subr.mxu0 0.0
        %1446 = vmatpush1.msra.mxu0 0.0
        %1447 = vmatprep.subr.mxu0 0.0
        %1448 = vmatpush1.msra.mxu0 0.0
        %1449 = vmatprep.subr.mxu0 0.0
        %1450 = vmatpush1.msra.mxu0 0.0
        %1451 = vmatprep.subr.mxu0 0.0
        %1452 = vmatpush1.msra.mxu0 0.0
        %1453 = vmatprep.subr.mxu0 0.0
        %1454 = vmatpush1.msra.mxu0 0.0
        %1455 = vmatprep.subr.mxu0 0.0
        %1456 = vmatpush1.msra.mxu0 0.0
        %1457 = vmatprep.subr.mxu0 0.0
        %1458 = vmatpush1.msra.mxu0 0.0
        %1459 = vmatprep.subr.mxu0 0.0
        %1460 = vmatpush1.msra.mxu0 0.0
        %1461 = vmatprep.subr.mxu0 0.0
        %1462 = vmatpush1.msra.mxu0 0.0
        %1463 = vmatprep.subr.mxu0 0.0
        %1464 = vmatpush1.msra.mxu0 0.0
        %1465 = vmatprep.subr.mxu0 0.0
        %1466 = vmatpush1.msra.mxu0 0.0
        %1467 = vmatprep.subr.mxu0 0.0
        %1468 = vmatpush1.msra.mxu0 0.0
        %1469 = vmatprep.subr.mxu0 0.0
        %1470 = vmatpush1.msra.mxu0 0.0
        %1471 = vmatprep.subr.mxu0 0.0
        %1472 = vmatpush1.msra.mxu0 0.0
        %1473 = vmatprep.subr.mxu0 0.0
        %1474 = vmatpush1.msra.mxu0 0.0
        %1475 = vmatprep.subr.mxu0 0.0
        %1476 = vmatpush1.msra.mxu0 0.0
        %1477 = vmatprep.mubr.f32.mxu0 0.0
        %1478 = vmatmul.mubr.f32.gmra.mrb[0].mxu0 %v1411
        %v1479 = vpop.f32.mrb[0].mxu0
        %v1480 = vadd.f32 0.0, %v1479
        %v1481 = vpop.f32.mrb[0].mxu0
        %1482 = vdwg.mxu0
        %v1483 = vadd.f32 %v1231, %v1480
        %v1484 = vmul.f32 %v1324, %v1328
        %v1485 = vadd.f32 %v1235, %v1484
        %1486 = vrot.lane.b32.xlu0 %v644, 104
        %v1487 = vpop.permute.xlu0 %1486
        %1488 = vrot.lane.b32.xlu0 %v731, 104
        %v1489 = vpop.permute.xlu0 %1488
        %1490 = vrot.lane.b32.xlu0 %v736, 104
        %v1491 = vpop.permute.xlu0 %1490
        %v1492 = vsel %vm739, %v1487, 0
        %v1494 = vsel %vm739, %v1489, 0
        %v1496 = vsel %vm739, %v1491, 0
        %1498 = vmatprep.subr.mxu0 0.0
        %1499 = vmatpush1.xpose.msra.mxu0 %v1494
        %1500 = vmatprep.subr.mxu0 0.0
        %1501 = vmatpush1.xpose.msra.mxu0 %v1496
        %1502 = vmatprep.subr.mxu0 0.0
        %1503 = vmatpush1.xpose.msra.mxu0 0.0
        %1504 = vmatprep.subr.mxu0 0.0
        %1505 = vmatpush1.xpose.msra.mxu0 0.0
        %1506 = vmatprep.subr.mxu0 0.0
        %1507 = vmatpush1.xpose.msra.mxu0 0.0
        %1508 = vmatprep.subr.mxu0 0.0
        %1509 = vmatpush1.xpose.msra.mxu0 0.0
        %1510 = vmatprep.subr.mxu0 0.0
        %1511 = vmatpush1.xpose.msra.mxu0 0.0
        %1512 = vmatprep.subr.mxu0 0.0
        %1513 = vmatpush1.xpose.msra.mxu0 0.0
        %1514 = vmatprep.subr.mxu0 0.0
        %1515 = vmatpush1.xpose.msra.mxu0 0.0
        %1516 = vmatprep.subr.mxu0 0.0
        %1517 = vmatpush1.xpose.msra.mxu0 0.0
        %1518 = vmatprep.subr.mxu0 0.0
        %1519 = vmatpush1.xpose.msra.mxu0 0.0
        %1520 = vmatprep.subr.mxu0 0.0
        %1521 = vmatpush1.xpose.msra.mxu0 0.0
        %1522 = vmatprep.subr.mxu0 0.0
        %1523 = vmatpush1.xpose.msra.mxu0 0.0
        %1524 = vmatprep.subr.mxu0 0.0
        %1525 = vmatpush1.xpose.msra.mxu0 0.0
        %1526 = vmatprep.subr.mxu0 0.0
        %1527 = vmatpush1.xpose.msra.mxu0 0.0
        %1528 = vmatprep.subr.mxu0 0.0
        %1529 = vmatpush1.xpose.msra.mxu0 0.0
        %1530 = vmatprep.subr.mxu0 0.0
        %1531 = vmatpush1.xpose.msra.mxu0 0.0
        %1532 = vmatprep.subr.mxu0 0.0
        %1533 = vmatpush1.xpose.msra.mxu0 0.0
        %1534 = vmatprep.subr.mxu0 0.0
        %1535 = vmatpush1.xpose.msra.mxu0 0.0
        %1536 = vmatprep.subr.mxu0 0.0
        %1537 = vmatpush1.xpose.msra.mxu0 0.0
        %1538 = vmatprep.subr.mxu0 0.0
        %1539 = vmatpush1.xpose.msra.mxu0 0.0
        %1540 = vmatprep.subr.mxu0 0.0
        %1541 = vmatpush1.xpose.msra.mxu0 0.0
        %1542 = vmatprep.subr.mxu0 0.0
        %1543 = vmatpush1.xpose.msra.mxu0 0.0
        %1544 = vmatprep.subr.mxu0 0.0
        %1545 = vmatpush1.xpose.msra.mxu0 0.0
        %1546 = vmatprep.subr.mxu0 0.0
        %1547 = vmatpush1.xpose.msra.mxu0 0.0
        %1548 = vmatprep.subr.mxu0 0.0
        %1549 = vmatpush1.xpose.msra.mxu0 0.0
        %1550 = vmatprep.subr.mxu0 0.0
        %1551 = vmatpush1.xpose.msra.mxu0 0.0
        %1552 = vmatprep.subr.mxu0 0.0
        %1553 = vmatpush1.xpose.msra.mxu0 0.0
        %1554 = vmatprep.subr.mxu0 0.0
        %1555 = vmatpush1.xpose.msra.mxu0 0.0
        %1556 = vmatprep.subr.mxu0 0.0
        %1557 = vmatpush1.xpose.msra.mxu0 0.0
        %1558 = vmatprep.subr.mxu0 0.0
        %1559 = vmatpush1.xpose.msra.mxu0 0.0
        %1560 = vmatprep.subr.mxu0 0.0
        %1561 = vmatpush1.xpose.msra.mxu0 0.0
        %1562 = vmatprep.mubr.f32.mxu0 0.0
        %1563 = vmatmul.mubr.f32.gmra.mrb[0].mxu0 %v1492
        %v1564 = vpop.f32.mrb[0].mxu0
        %v1565 = vadd.f32 0.0, %v1564
        %v1566 = vpop.f32.mrb[0].mxu0
        %1567 = vdwg.mxu0
        %v1568 = vmul.f32 %v1565, 0.35355338
        %v1569 = vsel %vm820, %v1568, -inf
        %1570 = vmax.xlane.f32.xlu0 %v1569
        %v1571 = vpop.xlane.xlu0 %1570
        %v1572 = vsub.f32 %v1568, %v1571
        %v1573 = vmul.f32 %v1572, 1.442695
        %v1574 = vpow.pop %v1573
        %v1575 = vsel %vm820, %v1574, 0.0
        %1576 = vadd.xlane.f32.xlu0 %v1575
        %v1577 = vpop.xlane.xlu0 %1576
        %v1578 = vrcp.pop %v1577
        %1579 = vrot.lane.b32.xlu0 %v731, 72
        %v1580 = vpop.permute.xlu0 %1579
        %1581 = vrot.lane.b32.xlu0 %v736, 72
        %v1582 = vpop.permute.xlu0 %1581
        %v1586 = vsel %vm820, %v1574, 0
        %1588 = vmatprep.subr.mxu0 0.0
        %1589 = vmatpush1.msra.mxu0 %v1580
        %1590 = vmatprep.subr.mxu0 0.0
        %1591 = vmatpush1.msra.mxu0 %v1582
        %1592 = vmatprep.subr.mxu0 0.0
        %1593 = vmatpush1.msra.mxu0 0.0
        %1594 = vmatprep.subr.mxu0 0.0
        %1595 = vmatpush1.msra.mxu0 0.0
        %1596 = vmatprep.subr.mxu0 0.0
        %1597 = vmatpush1.msra.mxu0 0.0
        %1598 = vmatprep.subr.mxu0 0.0
        %1599 = vmatpush1.msra.mxu0 0.0
        %1600 = vmatprep.subr.mxu0 0.0
        %1601 = vmatpush1.msra.mxu0 0.0
        %1602 = vmatprep.subr.mxu0 0.0
        %1603 = vmatpush1.msra.mxu0 0.0
        %1604 = vmatprep.subr.mxu0 0.0
        %1605 = vmatpush1.msra.mxu0 0.0
        %1606 = vmatprep.subr.mxu0 0.0
        %1607 = vmatpush1.msra.mxu0 0.0
        %1608 = vmatprep.subr.mxu0 0.0
        %1609 = vmatpush1.msra.mxu0 0.0
        %1610 = vmatprep.subr.mxu0 0.0
        %1611 = vmatpush1.msra.mxu0 0.0
        %1612 = vmatprep.subr.mxu0 0.0
        %1613 = vmatpush1.msra.mxu0 0.0
        %1614 = vmatprep.subr.mxu0 0.0
        %1615 = vmatpush1.msra.mxu0 0.0
        %1616 = vmatprep.subr.mxu0 0.0
        %1617 = vmatpush1.msra.mxu0 0.0
        %1618 = vmatprep.subr.mxu0 0.0
        %1619 = vmatpush1.msra.mxu0 0.0
        %1620 = vmatprep.subr.mxu0 0.0
        %1621 = vmatpush1.msra.mxu0 0.0
        %1622 = vmatprep.subr.mxu0 0.0
        %1623 = vmatpush1.msra.mxu0 0.0
        %1624 = vmatprep.subr.mxu0 0.0
        %1625 = vmatpush1.msra.mxu0 0.0
        %1626 = vmatprep.subr.mxu0 0.0
        %1627 = vmatpush1.msra.mxu0 0.0
        %1628 = vmatprep.subr.mxu0 0.0
        %1629 = vmatpush1.msra.mxu0 0.0
        %1630 = vmatprep.subr.mxu0 0.0
        %1631 = vmatpush1.msra.mxu0 0.0
        %1632 = vmatprep.subr.mxu0 0.0
        %1633 = vmatpush1.msra.mxu0 0.0
        %1634 = vmatprep.subr.mxu0 0.0
        %1635 = vmatpush1.msra.mxu0 0.0
        %1636 = vmatprep.subr.mxu0 0.0
        %1637 = vmatpush1.msra.mxu0 0.0
        %1638 = vmatprep.subr.mxu0 0.0
        %1639 = vmatpush1.msra.mxu0 0.0
        %1640 = vmatprep.subr.mxu0 0.0
        %1641 = vmatpush1.msra.mxu0 0.0
        %1642 = vmatprep.subr.mxu0 0.0
        %1643 = vmatpush1.msra.mxu0 0.0
        %1644 = vmatprep.subr.mxu0 0.0
        %1645 = vmatpush1.msra.mxu0 0.0
        %1646 = vmatprep.subr.mxu0 0.0
        %1647 = vmatpush1.msra.mxu0 0.0
        %1648 = vmatprep.subr.mxu0 0.0
        %1649 = vmatpush1.msra.mxu0 0.0
        %1650 = vmatprep.subr.mxu0 0.0
        %1651 = vmatpush1.msra.mxu0 0.0
        %1652 = vmatprep.mubr.f32.mxu0 0.0
        %1653 = vmatmul.mubr.f32.gmra.mrb[0].mxu0 %v1586
        %v1654 = vpop.f32.mrb[0].mxu0
        %v1655 = vadd.f32 0.0, %v1654
        %v1656 = vpop.f32.mrb[0].mxu0
        %1657 = vdwg.mxu0
        %v1658 = vmul.f32 %v1655, %v1578
        %v1659 = vld [vmem:[#allocation13 + $0x18] sm:$0xff]
        %v1661 = vsel %vm739, %v1658, 0
        %1663 = vmatprep.subr.mxu0 0.0
        %1664 = vmatpush1.msra.mxu0 %v1659
        %1665 = vmatprep.subr.mxu0 0.0
        %1666 = vmatpush1.msra.mxu0 0.0
        %1667 = vmatprep.subr.mxu0 0.0
        %1668 = vmatpush1.msra.mxu0 0.0
        %1669 = vmatprep.subr.mxu0 0.0
        %1670 = vmatpush1.msra.mxu0 0.0
        %1671 = vmatprep.subr.mxu0 0.0
        %1672 = vmatpush1.msra.mxu0 0.0
        %1673 = vmatprep.subr.mxu0 0.0
        %1674 = vmatpush1.msra.mxu0 0.0
        %1675 = vmatprep.subr.mxu0 0.0
        %1676 = vmatpush1.msra.mxu0 0.0
        %1677 = vmatprep.subr.mxu0 0.0
        %1678 = vmatpush1.msra.mxu0 0.0
        %1679 = vmatprep.subr.mxu0 0.0
        %1680 = vmatpush1.msra.mxu0 0.0
        %1681 = vmatprep.subr.mxu0 0.0
        %1682 = vmatpush1.msra.mxu0 0.0
        %1683 = vmatprep.subr.mxu0 0.0
        %1684 = vmatpush1.msra.mxu0 0.0
        %1685 = vmatprep.subr.mxu0 0.0
        %1686 = vmatpush1.msra.mxu0 0.0
        %1687 = vmatprep.subr.mxu0 0.0
        %1688 = vmatpush1.msra.mxu0 0.0
        %1689 = vmatprep.subr.mxu0 0.0
        %1690 = vmatpush1.msra.mxu0 0.0
        %1691 = vmatprep.subr.mxu0 0.0
        %1692 = vmatpush1.msra.mxu0 0.0
        %1693 = vmatprep.subr.mxu0 0.0
        %1694 = vmatpush1.msra.mxu0 0.0
        %1695 = vmatprep.subr.mxu0 0.0
        %1696 = vmatpush1.msra.mxu0 0.0
        %1697 = vmatprep.subr.mxu0 0.0
        %1698 = vmatpush1.msra.mxu0 0.0
        %1699 = vmatprep.subr.mxu0 0.0
        %1700 = vmatpush1.msra.mxu0 0.0
        %1701 = vmatprep.subr.mxu0 0.0
        %1702 = vmatpush1.msra.mxu0 0.0
        %1703 = vmatprep.subr.mxu0 0.0
        %1704 = vmatpush1.msra.mxu0 0.0
        %1705 = vmatprep.subr.mxu0 0.0
        %1706 = vmatpush1.msra.mxu0 0.0
        %1707 = vmatprep.subr.mxu0 0.0
        %1708 = vmatpush1.msra.mxu0 0.0
        %1709 = vmatprep.subr.mxu0 0.0
        %1710 = vmatpush1.msra.mxu0 0.0
        %1711 = vmatprep.subr.mxu0 0.0
        %1712 = vmatpush1.msra.mxu0 0.0
        %1713 = vmatprep.subr.mxu0 0.0
        %1714 = vmatpush1.msra.mxu0 0.0
        %1715 = vmatprep.subr.mxu0 0.0
        %1716 = vmatpush1.msra.mxu0 0.0
        %1717 = vmatprep.subr.mxu0 0.0
        %1718 = vmatpush1.msra.mxu0 0.0
        %1719 = vmatprep.subr.mxu0 0.0
        %1720 = vmatpush1.msra.mxu0 0.0
        %1721 = vmatprep.subr.mxu0 0.0
        %1722 = vmatpush1.msra.mxu0 0.0
        %1723 = vmatprep.subr.mxu0 0.0
        %1724 = vmatpush1.msra.mxu0 0.0
        %1725 = vmatprep.subr.mxu0 0.0
        %1726 = vmatpush1.msra.mxu0 0.0
        %1727 = vmatprep.mubr.f32.mxu0 0.0
        %1728 = vmatmul.mubr.f32.gmra.mrb[0].mxu0 %v1661
        %v1729 = vpop.f32.mrb[0].mxu0
        %v1730 = vadd.f32 0.0, %v1729
        %v1731 = vpop.f32.mrb[0].mxu0
        %1732 = vdwg.mxu0
        %v1733 = vadd.f32 %v1483, %v1730
        %v1734 = vmul.f32 %v1574, %v1578
        %v1735 = vadd.f32 %v1485, %v1734
        %v1736 = vadd.f32 %v559, %v1733
        %v1737 = vld [vmem:[#allocation14] sm:$0x1]
        %v1739 = vlaneseq
        %v1740 = vshrl.u32 %v1739, 7
        %v1741 = vsub.s32 0, %v1740
        %v1742 = vrot.slane %v1737, %v1741
        %v1744 = vadd.f32 %v1736, %v1742
        %v1745 = vsel %vm573, %v1744, 0.0
        %1746 = vadd.xlane.f32.xlu0 %v1745
        %v1747 = vpop.xlane.xlu0 %1746
        %v1748 = vrcp.pop 32.0
        %v1749 = vmul.f32 %v1747, %v1748
        %v1750 = vsub.f32 %v1744, %v1749
        %v1751 = vmul.f32 %v1750, %v1750
        %v1752 = vsel %vm573, %v1751, 0.0
        %1753 = vadd.xlane.f32.xlu0 %v1752
        %v1754 = vpop.xlane.xlu0 %1753
        %v1755 = vmul.f32 %v1754, %v1748
        %v1756 = vadd.f32 %v1755, 1e-05
        %v1757 = vrsqrt.pop %v1756
        %v1758 = vmul.f32 %v1750, %v1757
        %v1759 = vld [vmem:[#allocation16] sm:$0x1]
        %v1761 = vlaneseq
        %v1762 = vshrl.u32 %v1761, 7
        %v1763 = vsub.s32 0, %v1762
        %v1764 = vrot.slane %v1759, %v1763
        %v1766 = vmul.f32 %v1758, %v1764
        %v1767 = vld [vmem:[#allocation17] sm:$0x1]
        %v1769 = vlaneseq
        %v1770 = vshrl.u32 %v1769, 7
        %v1771 = vsub.s32 0, %v1770
        %v1772 = vrot.slane %v1767, %v1771
        %v1774 = vadd.f32 %v1766, %v1772
        %1775 = vst.msk [vmem:[%s551] sm:$0xff] %vm573, %v1774
        %v1776 = vmul.f32 %v1735, 0.25
        %1777 = vst.msk [vmem:[%s558] sm:$0xff] %vm820, %v1776
        %s1778 = sand.u32 %s267, 1
        %s1779 = scalar_lea.sflag [#allocation4], %s1778
        %s1780 = sand.u32 %s267, 1
        %s1781 = smul.addr %s1780, 8
        %s1782 = scalar_lea.vmem [#allocation19], %s1781
        %s1783 = sand.u32 %s293, 1
        %s1784 = scalar_lea.sflag [#allocation21], %s1783
        %s1785 = sand.u32 %s293, 1
        %s1786 = smul.addr %s1785, 8
        %s1787 = scalar_lea.vmem [#allocation20], %s1786
        // Predicated region
        $region101: #{transformer_decoder_layer.4} parent=59 // pred_check
          %p1788 = pneg %p277
        $region102: #{transformer_decoder_layer.4} parent=59 // pred_check_branch
          %1790 = sbr.rel (%p1788) target = $region104
        $region103: #{transformer_decoder_layer.4} parent=59 // pred_region
          %s1792 = ssub.s32 128, 128
          %1793 = vsyncadd %s1779, %s1792
          %s1794 = smul.addr %s39, 128
          %s1795 = scalar_lea.hbm %s10, %s1794
          %s1797 = sshll.u32 %s1782, 4
          %s1798 = int_to_ptr.vmem [resolvable:$true] %s1797
          %1800 = dma.vmem_to_hbm [thread:$0]  %s1798, 128, %s1795, %s1779
        $region104: #{transformer_decoder_layer.4} parent=59 // pred_fallthru
          _
        // Predicated region
        $region105: #{transformer_decoder_layer.4} parent=59 // pred_check
          %p1801 = pneg %p303
        $region106: #{transformer_decoder_layer.4} parent=59 // pred_check_branch
          %1803 = sbr.rel (%p1801) target = $region108
        $region107: #{transformer_decoder_layer.4} parent=59 // pred_region
          %s1805 = ssub.s32 128, 128
          %1806 = vsyncadd %s1784, %s1805
          %s1807 = smul.addr %s39, 128
          %s1808 = scalar_lea.hbm %s11, %s1807
          %s1810 = sshll.u32 %s1787, 4
          %s1811 = int_to_ptr.vmem [resolvable:$true] %s1810
          %1813 = dma.vmem_to_hbm [thread:$0]  %s1811, 128, %s1808, %s1784
        $region108: #{transformer_decoder_layer.4} parent=59 // pred_fallthru
          _
      $region60: #{transformer_decoder_layer.4} parent=5 // pred_fallthru
        _
      %p1814 = scmp.le.s32.totalorder 2, %s34
      // Predicated region
      $region109: #{transformer_decoder_layer.4} parent=5 // pred_check
        %p1815 = pneg %p1814
      $region110: #{transformer_decoder_layer.4} parent=5 // pred_check_branch
        %1817 = sbr.rel (%p1815) target = $region112
      $region111: #{transformer_decoder_layer.4} parent=5 // pred_region
        %s1818 = ssub.s32 %s34, 2
        // Predicated region
        $region113: #{transformer_decoder_layer.4} parent=111 // pred_check
          %p1819 = pneg %p283
        $region114: #{transformer_decoder_layer.4} parent=111 // pred_check_branch
          %1821 = sbr.rel (%p1819) target = $region116
        $region115: #{transformer_decoder_layer.4} parent=111 // pred_region
          %s1822 = sand.u32 %s268, 1
          %s1823 = scalar_lea.sflag [#allocation4], %s1822
          %s1824 = sand.u32 %s268, 1
          %s1825 = smul.addr %s1824, 8
          %s1826 = scalar_lea.vmem [#allocation19], %s1825
          %1827 = dma.done %s1823, 128
        $region116: #{transformer_decoder_layer.4} parent=111 // pred_fallthru
          _
        // Predicated region
        $region117: #{transformer_decoder_layer.4} parent=111 // pred_check
          %p1828 = pneg %p309
        $region118: #{transformer_decoder_layer.4} parent=111 // pred_check_branch
          %1830 = sbr.rel (%p1828) target = $region120
        $region119: #{transformer_decoder_layer.4} parent=111 // pred_region
          %s1831 = sand.u32 %s294, 1
          %s1832 = scalar_lea.sflag [#allocation21], %s1831
          %s1833 = sand.u32 %s294, 1
          %s1834 = smul.addr %s1833, 8
          %s1835 = scalar_lea.vmem [#allocation20], %s1834
          %1836 = dma.done %s1832, 128
        $region120: #{transformer_decoder_layer.4} parent=111 // pred_fallthru
          _
      $region112: #{transformer_decoder_layer.4} parent=5 // pred_fallthru
        _
    $region6: #{transformer_decoder_layer.4} parent=1 // loop_footer
      %s38 = sadd.s32 1, %s34
    $region7: #{transformer_decoder_layer.4} parent=1 // loop_footer_branch
      %33 = sbr.rel target = $region3
    $region8: #{transformer_decoder_layer.4} parent=1 // loop_exit
      _
    %1837 = vsyncpa [#allocation3], 1
    %s1838 = scalar_lea.sflag [#allocation3], 1
    %1839 = vsyncpa %s1838, 1
    %1840 = vsyncpa [#allocation6], 1
    %s1841 = scalar_lea.sflag [#allocation6], 1
    %1842 = vsyncpa %s1841, 1
    %1843 = vsyncpa [#allocation9], 1
    %1844 = vsyncpa [#allocation12], 1
    %1845 = vsyncpa [#allocation15], 1
    %1846 = vsyncpa [#allocation18], 1
    %1847 = vsyncpa [#allocation4], 1
    %s1848 = scalar_lea.sflag [#allocation4], 1
    %1849 = vsyncpa %s1848, 1
    %1850 = vsyncpa [#allocation21], 1
    %s1851 = scalar_lea.sflag [#allocation21], 1
    %1852 = vsyncpa %s1851, 1

// kernel: transformer_decoder_layer.5
$region0: #{transformer_decoder_layer.5}
  #allocation0 [shape = 'u32[]', space=smem, size = 0x4, offset = 0x4, fixed_abs, tag = 'smem constant byte address 0x4 - core index']
  #allocation1 [shape = 'u32[144,128]{1,0:T(1,128)}', space=vmem, size = 0x12000, scoped, tag = 'internal scratch']
  %s0 = inlined_call_operand.hbm [shape: f32[16,32], index: 0, kind: input, shape index: {}]
  %s1 = inlined_call_operand.hbm [shape: f32[32,64], index: 1, kind: input, shape index: {}]
  %s2 = inlined_call_operand.hbm [shape: f32[1,64], index: 2, kind: input, shape index: {}]
  %s3 = inlined_call_operand.hbm [shape: f32[64,32], index: 3, kind: input, shape index: {}]
  %s4 = inlined_call_operand.hbm [shape: f32[1,32], index: 4, kind: input, shape index: {}]
  %s5 = inlined_call_operand.hbm [shape: f32[1,32], index: 5, kind: input, shape index: {}]
  %s6 = inlined_call_operand.hbm [shape: f32[1,32], index: 6, kind: input, shape index: {}]
  %s7 = inlined_call_operand.hbm [shape: f32[16,32], index: 7, kind: output, shape index: {}]
  %s8 = sld [smem:[#allocation0]]
  $region66: #{transformer_decoder_layer.5} parent=0
    _
  %s10 = ssub.s32 1, %s8
  %s11 = scalar_select 0, %s10, %s8
  $region1: #{transformer_decoder_layer.5} parent=0
    #allocation2 [shape = 'u8[8192]{0}', space=vmem, size = 0x2000, scoped, tag = 'input window, operand 0, single buffered']
    #allocation3 [shape = 's32[1]{0}', space=sflag, size = 0x4, scoped, tag = 'scoped memory for transformer_decoder_layer.5']
    #allocation4 [shape = 's32[1]{0}', space=sflag, size = 0x4, scoped, tag = 'scoped memory for transformer_decoder_layer.5']
    #allocation5 [shape = 'u8[16384]{0}', space=vmem, size = 0x4000, scoped, tag = 'input window, operand 1, single buffered']
    #allocation6 [shape = 's32[1]{0}', space=sflag, size = 0x4, scoped, tag = 'scoped memory for transformer_decoder_layer.5']
    #allocation7 [shape = 'u8[512]{0}', space=vmem, size = 0x400, scoped, tag = 'input window, operand 2, single buffered']
    #allocation8 [shape = 'u8[32768]{0}', space=vmem, size = 0x8000, scoped, tag = 'input window, operand 3, single buffered']
    #allocation9 [shape = 's32[1]{0}', space=sflag, size = 0x4, scoped, tag = 'scoped memory for transformer_decoder_layer.5']
    #allocation10 [shape = 'u8[512]{0}', space=vmem, size = 0x400, scoped, tag = 'input window, operand 4, single buffered']
    #allocation11 [shape = 'u8[512]{0}', space=vmem, size = 0x400, scoped, tag = 'input window, operand 5, single buffered']
    #allocation12 [shape = 's32[1]{0}', space=sflag, size = 0x4, scoped, tag = 'scoped memory for transformer_decoder_layer.5']
    #allocation13 [shape = 'u8[512]{0}', space=vmem, size = 0x400, scoped, tag = 'input window, operand 6, single buffered']
    #allocation14 [shape = 'u8[8192]{0}', space=vmem, size = 0x2000, scoped, tag = 'output window, operand 0, single buffered']
    %12 = vsyncpa [#allocation3], 0
    %13 = vsyncpa [#allocation6], 0
    %14 = vsyncpa [#allocation9], 0
    %15 = vsyncpa [#allocation12], 0
    %16 = vsyncpa [#allocation4], 0
    // Predicated region
    $region2: #{transformer_decoder_layer.5} parent=1 // pred_check
      _
    $region3: #{transformer_decoder_layer.5} parent=1 // pred_check_branch
      %18 = sbr.rel (0) target = $region5
    $region4: #{transformer_decoder_layer.5} parent=1 // pred_region
      %s20 = ssub.s32 256, 256
      %21 = vsyncadd [#allocation3], %s20
      %s22 = sshll.u32 [#allocation2], 4
      %s23 = int_to_ptr.vmem [resolvable:$true] %s22
      %28 = dma.hbm_to_vmem [thread:$0]  %s0, 256, %s23, [#allocation3], 128, 128, 8
    $region5: #{transformer_decoder_layer.5} parent=1 // pred_fallthru
      _
    // Predicated region
    $region6: #{transformer_decoder_layer.5} parent=1 // pred_check
      _
    $region7: #{transformer_decoder_layer.5} parent=1 // pred_check_branch
      %30 = sbr.rel (0) target = $region9
    $region8: #{transformer_decoder_layer.5} parent=1 // pred_region
      %s32 = ssub.s32 512, 512
      %33 = vsyncadd [#allocation6], %s32
      %s34 = sshll.u32 [#allocation5], 4
      %s35 = int_to_ptr.vmem [resolvable:$true] %s34
      %40 = dma.hbm_to_vmem [thread:$0]  %s1, 512, %s35, [#allocation6], 128, 128, 8
    $region9: #{transformer_decoder_layer.5} parent=1 // pred_fallthru
      _
    // Predicated region
    $region10: #{transformer_decoder_layer.5} parent=1 // pred_check
      _
    $region11: #{transformer_decoder_layer.5} parent=1 // pred_check_branch
      %42 = sbr.rel (0) target = $region13
    $region12: #{transformer_decoder_layer.5} parent=1 // pred_region
      %s44 = ssub.s32 16, 16
      %45 = vsyncadd [#allocation6], %s44
      %s47 = sshll.u32 [#allocation7], 4
      %s48 = int_to_ptr.vmem [resolvable:$true] %s47
      %50 = dma.hbm_to_vmem [thread:$0]  %s2, 16, %s48, [#allocation6]
    $region13: #{transformer_decoder_layer.5} parent=1 // pred_fallthru
      _
    // Predicated region
    $region14: #{transformer_decoder_layer.5} parent=1 // pred_check
      _
    $region15: #{transformer_decoder_layer.5} parent=1 // pred_check_branch
      %52 = sbr.rel (0) target = $region17
    $region16: #{transformer_decoder_layer.5} parent=1 // pred_region
      %s54 = ssub.s32 1024, 1024
      %55 = vsyncadd [#allocation9], %s54
      %s56 = sshll.u32 [#allocation8], 4
      %s57 = int_to_ptr.vmem [resolvable:$true] %s56
      %62 = dma.hbm_to_vmem [thread:$0]  %s3, 1024, %s57, [#allocation9], 128, 128, 8
    $region17: #{transformer_decoder_layer.5} parent=1 // pred_fallthru
      _
    // Predicated region
    $region18: #{transformer_decoder_layer.5} parent=1 // pred_check
      _
    $region19: #{transformer_decoder_layer.5} parent=1 // pred_check_branch
      %64 = sbr.rel (0) target = $region21
    $region20: #{transformer_decoder_layer.5} parent=1 // pred_region
      %s66 = ssub.s32 16, 16
      %67 = vsyncadd [#allocation9], %s66
      %s69 = sshll.u32 [#allocation10], 4
      %s70 = int_to_ptr.vmem [resolvable:$true] %s69
      %72 = dma.hbm_to_vmem [thread:$0]  %s4, 16, %s70, [#allocation9]
    $region21: #{transformer_decoder_layer.5} parent=1 // pred_fallthru
      _
    // Predicated region
    $region22: #{transformer_decoder_layer.5} parent=1 // pred_check
      _
    $region23: #{transformer_decoder_layer.5} parent=1 // pred_check_branch
      %74 = sbr.rel (0) target = $region25
    $region24: #{transformer_decoder_layer.5} parent=1 // pred_region
      %s76 = ssub.s32 16, 16
      %77 = vsyncadd [#allocation12], %s76
      %s79 = sshll.u32 [#allocation11], 4
      %s80 = int_to_ptr.vmem [resolvable:$true] %s79
      %82 = dma.hbm_to_vmem [thread:$0]  %s5, 16, %s80, [#allocation12]
    $region25: #{transformer_decoder_layer.5} parent=1 // pred_fallthru
      _
    // Predicated region
    $region26: #{transformer_decoder_layer.5} parent=1 // pred_check
      _
    $region27: #{transformer_decoder_layer.5} parent=1 // pred_check_branch
      %84 = sbr.rel (0) target = $region29
    $region28: #{transformer_decoder_layer.5} parent=1 // pred_region
      %s86 = ssub.s32 16, 16
      %87 = vsyncadd [#allocation12], %s86
      %s89 = sshll.u32 [#allocation13], 4
      %s90 = int_to_ptr.vmem [resolvable:$true] %s89
      %92 = dma.hbm_to_vmem [thread:$0]  %s6, 16, %s90, [#allocation12]
    $region29: #{transformer_decoder_layer.5} parent=1 // pred_fallthru
      _
    // Predicated region
    $region30: #{transformer_decoder_layer.5} parent=1 // pred_check
      _
    $region31: #{transformer_decoder_layer.5} parent=1 // pred_check_branch
      %94 = sbr.rel (0) target = $region33
    $region32: #{transformer_decoder_layer.5} parent=1 // pred_region
      %95 = dma.done [#allocation3], 256
    $region33: #{transformer_decoder_layer.5} parent=1 // pred_fallthru
      _
    // Predicated region
    $region34: #{transformer_decoder_layer.5} parent=1 // pred_check
      _
    $region35: #{transformer_decoder_layer.5} parent=1 // pred_check_branch
      %97 = sbr.rel (0) target = $region37
    $region36: #{transformer_decoder_layer.5} parent=1 // pred_region
      %98 = dma.done [#allocation6], 512
    $region37: #{transformer_decoder_layer.5} parent=1 // pred_fallthru
      _
    // Predicated region
    $region38: #{transformer_decoder_layer.5} parent=1 // pred_check
      _
    $region39: #{transformer_decoder_layer.5} parent=1 // pred_check_branch
      %100 = sbr.rel (0) target = $region41
    $region40: #{transformer_decoder_layer.5} parent=1 // pred_region
      %101 = dma.done [#allocation6], 16
    $region41: #{transformer_decoder_layer.5} parent=1 // pred_fallthru
      _
    // Predicated region
    $region42: #{transformer_decoder_layer.5} parent=1 // pred_check
      _
    $region43: #{transformer_decoder_layer.5} parent=1 // pred_check_branch
      %103 = sbr.rel (0) target = $region45
    $region44: #{transformer_decoder_layer.5} parent=1 // pred_region
      %104 = dma.done [#allocation9], 1024
    $region45: #{transformer_decoder_layer.5} parent=1 // pred_fallthru
      _
    // Predicated region
    $region46: #{transformer_decoder_layer.5} parent=1 // pred_check
      _
    $region47: #{transformer_decoder_layer.5} parent=1 // pred_check_branch
      %106 = sbr.rel (0) target = $region49
    $region48: #{transformer_decoder_layer.5} parent=1 // pred_region
      %107 = dma.done [#allocation9], 16
    $region49: #{transformer_decoder_layer.5} parent=1 // pred_fallthru
      _
    // Predicated region
    $region50: #{transformer_decoder_layer.5} parent=1 // pred_check
      _
    $region51: #{transformer_decoder_layer.5} parent=1 // pred_check_branch
      %109 = sbr.rel (0) target = $region53
    $region52: #{transformer_decoder_layer.5} parent=1 // pred_region
      %110 = dma.done [#allocation12], 16
    $region53: #{transformer_decoder_layer.5} parent=1 // pred_fallthru
      _
    // Predicated region
    $region54: #{transformer_decoder_layer.5} parent=1 // pred_check
      _
    $region55: #{transformer_decoder_layer.5} parent=1 // pred_check_branch
      %112 = sbr.rel (0) target = $region57
    $region56: #{transformer_decoder_layer.5} parent=1 // pred_region
      %113 = dma.done [#allocation12], 16
    $region57: #{transformer_decoder_layer.5} parent=1 // pred_fallthru
      _
    %v114 = vld [vmem:[#allocation2] sm:$0xff]
    %v115 = vld [vmem:[#allocation2 + $0x8] sm:$0xff]
    %v116 = vld [vmem:[#allocation5] sm:$0xff]
    %v117 = vld [vmem:[#allocation5 + $0x8] sm:$0xff]
    %v118 = vld [vmem:[#allocation5 + $0x10] sm:$0xff]
    %v119 = vld [vmem:[#allocation5 + $0x18] sm:$0xff]
    %v120 = vld [vmem:[#allocation7] sm:$0x1]
    %v122 = vlaneseq
    %v123 = vshrl.u32 %v122, 7
    %v124 = vsub.s32 0, %v123
    %v125 = vrot.slane %v120, %v124
    %vm127 = vcmask 261120
    %v129 = vsel %vm127, %v114, 0
    %v132 = vsel %vm127, %v115, 0
    %134 = vmatprep.subr.mxu0 0.0
    %135 = vmatpush1.msra.mxu0 %v116
    %136 = vmatprep.subr.mxu0 0.0
    %137 = vmatpush1.msra.mxu0 %v117
    %138 = vmatprep.subr.mxu0 0.0
    %139 = vmatpush1.msra.mxu0 %v118
    %140 = vmatprep.subr.mxu0 0.0
    %141 = vmatpush1.msra.mxu0 %v119
    %142 = vmatprep.subr.mxu0 0.0
    %143 = vmatpush1.msra.mxu0 0.0
    %144 = vmatprep.subr.mxu0 0.0
    %145 = vmatpush1.msra.mxu0 0.0
    %146 = vmatprep.subr.mxu0 0.0
    %147 = vmatpush1.msra.mxu0 0.0
    %148 = vmatprep.subr.mxu0 0.0
    %149 = vmatpush1.msra.mxu0 0.0
    %150 = vmatprep.subr.mxu0 0.0
    %151 = vmatpush1.msra.mxu0 0.0
    %152 = vmatprep.subr.mxu0 0.0
    %153 = vmatpush1.msra.mxu0 0.0
    %154 = vmatprep.subr.mxu0 0.0
    %155 = vmatpush1.msra.mxu0 0.0
    %156 = vmatprep.subr.mxu0 0.0
    %157 = vmatpush1.msra.mxu0 0.0
    %158 = vmatprep.subr.mxu0 0.0
    %159 = vmatpush1.msra.mxu0 0.0
    %160 = vmatprep.subr.mxu0 0.0
    %161 = vmatpush1.msra.mxu0 0.0
    %162 = vmatprep.subr.mxu0 0.0
    %163 = vmatpush1.msra.mxu0 0.0
    %164 = vmatprep.subr.mxu0 0.0
    %165 = vmatpush1.msra.mxu0 0.0
    %166 = vmatprep.subr.mxu0 0.0
    %167 = vmatpush1.msra.mxu0 0.0
    %168 = vmatprep.subr.mxu0 0.0
    %169 = vmatpush1.msra.mxu0 0.0
    %170 = vmatprep.subr.mxu0 0.0
    %171 = vmatpush1.msra.mxu0 0.0
    %172 = vmatprep.subr.mxu0 0.0
    %173 = vmatpush1.msra.mxu0 0.0
    %174 = vmatprep.subr.mxu0 0.0
    %175 = vmatpush1.msra.mxu0 0.0
    %176 = vmatprep.subr.mxu0 0.0
    %177 = vmatpush1.msra.mxu0 0.0
    %178 = vmatprep.subr.mxu0 0.0
    %179 = vmatpush1.msra.mxu0 0.0
    %180 = vmatprep.subr.mxu0 0.0
    %181 = vmatpush1.msra.mxu0 0.0
    %182 = vmatprep.subr.mxu0 0.0
    %183 = vmatpush1.msra.mxu0 0.0
    %184 = vmatprep.subr.mxu0 0.0
    %185 = vmatpush1.msra.mxu0 0.0
    %186 = vmatprep.subr.mxu0 0.0
    %187 = vmatpush1.msra.mxu0 0.0
    %188 = vmatprep.subr.mxu0 0.0
    %189 = vmatpush1.msra.mxu0 0.0
    %190 = vmatprep.subr.mxu0 0.0
    %191 = vmatpush1.msra.mxu0 0.0
    %192 = vmatprep.subr.mxu0 0.0
    %193 = vmatpush1.msra.mxu0 0.0
    %194 = vmatprep.subr.mxu0 0.0
    %195 = vmatpush1.msra.mxu0 0.0
    %196 = vmatprep.subr.mxu0 0.0
    %197 = vmatpush1.msra.mxu0 0.0
    %198 = vmatprep.mubr.f32.mxu0 0.0
    %199 = vmatmul.mubr.f32.gmra.mrb[0].mxu0 %v129
    %v200 = vpop.f32.mrb[0].mxu0
    %v201 = vadd.f32 %v125, %v200
    %v202 = vpop.f32.mrb[0].mxu0
    %203 = vmatprep.mubr.f32.mxu0 0.0
    %204 = vmatmul.mubr.f32.gmra.mrb[0].mxu0 %v132
    %v205 = vpop.f32.mrb[0].mxu0
    %v206 = vadd.f32 %v125, %v205
    %v207 = vpop.f32.mrb[0].mxu0
    %208 = vdwg.mxu0
    %v209 = vmax.f32 %v201, 0.0
    %v210 = vmax.f32 %v206, 0.0
    %v211 = vld [vmem:[#allocation8] sm:$0xff]
    %v212 = vld [vmem:[#allocation8 + $0x8] sm:$0xff]
    %v213 = vld [vmem:[#allocation8 + $0x10] sm:$0xff]
    %v214 = vld [vmem:[#allocation8 + $0x18] sm:$0xff]
    %v215 = vld [vmem:[#allocation8 + $0x20] sm:$0xff]
    %v216 = vld [vmem:[#allocation8 + $0x28] sm:$0xff]
    %v217 = vld [vmem:[#allocation8 + $0x30] sm:$0xff]
    %v218 = vld [vmem:[#allocation8 + $0x38] sm:$0xff]
    %v219 = vld [vmem:[#allocation10] sm:$0x1]
    %v221 = vlaneseq
    %v222 = vshrl.u32 %v221, 7
    %v223 = vsub.s32 0, %v222
    %v224 = vrot.slane %v219, %v223
    %vm226 = vcmask 523264
    %v228 = vsel %vm226, %v209, 0
    %v231 = vsel %vm226, %v210, 0
    %233 = vmatprep.subr.mxu0 0.0
    %234 = vmatpush1.msra.mxu0 %v211
    %235 = vmatprep.subr.mxu0 0.0
    %236 = vmatpush1.msra.mxu0 %v212
    %237 = vmatprep.subr.mxu0 0.0
    %238 = vmatpush1.msra.mxu0 %v213
    %239 = vmatprep.subr.mxu0 0.0
    %240 = vmatpush1.msra.mxu0 %v214
    %241 = vmatprep.subr.mxu0 0.0
    %242 = vmatpush1.msra.mxu0 %v215
    %243 = vmatprep.subr.mxu0 0.0
    %244 = vmatpush1.msra.mxu0 %v216
    %245 = vmatprep.subr.mxu0 0.0
    %246 = vmatpush1.msra.mxu0 %v217
    %247 = vmatprep.subr.mxu0 0.0
    %248 = vmatpush1.msra.mxu0 %v218
    %249 = vmatprep.subr.mxu0 0.0
    %250 = vmatpush1.msra.mxu0 0.0
    %251 = vmatprep.subr.mxu0 0.0
    %252 = vmatpush1.msra.mxu0 0.0
    %253 = vmatprep.subr.mxu0 0.0
    %254 = vmatpush1.msra.mxu0 0.0
    %255 = vmatprep.subr.mxu0 0.0
    %256 = vmatpush1.msra.mxu0 0.0
    %257 = vmatprep.subr.mxu0 0.0
    %258 = vmatpush1.msra.mxu0 0.0
    %259 = vmatprep.subr.mxu0 0.0
    %260 = vmatpush1.msra.mxu0 0.0
    %261 = vmatprep.subr.mxu0 0.0
    %262 = vmatpush1.msra.mxu0 0.0
    %263 = vmatprep.subr.mxu0 0.0
    %264 = vmatpush1.msra.mxu0 0.0
    %265 = vmatprep.subr.mxu0 0.0
    %266 = vmatpush1.msra.mxu0 0.0
    %267 = vmatprep.subr.mxu0 0.0
    %268 = vmatpush1.msra.mxu0 0.0
    %269 = vmatprep.subr.mxu0 0.0
    %270 = vmatpush1.msra.mxu0 0.0
    %271 = vmatprep.subr.mxu0 0.0
    %272 = vmatpush1.msra.mxu0 0.0
    %273 = vmatprep.subr.mxu0 0.0
    %274 = vmatpush1.msra.mxu0 0.0
    %275 = vmatprep.subr.mxu0 0.0
    %276 = vmatpush1.msra.mxu0 0.0
    %277 = vmatprep.subr.mxu0 0.0
    %278 = vmatpush1.msra.mxu0 0.0
    %279 = vmatprep.subr.mxu0 0.0
    %280 = vmatpush1.msra.mxu0 0.0
    %281 = vmatprep.subr.mxu0 0.0
    %282 = vmatpush1.msra.mxu0 0.0
    %283 = vmatprep.subr.mxu0 0.0
    %284 = vmatpush1.msra.mxu0 0.0
    %285 = vmatprep.subr.mxu0 0.0
    %286 = vmatpush1.msra.mxu0 0.0
    %287 = vmatprep.subr.mxu0 0.0
    %288 = vmatpush1.msra.mxu0 0.0
    %289 = vmatprep.subr.mxu0 0.0
    %290 = vmatpush1.msra.mxu0 0.0
    %291 = vmatprep.subr.mxu0 0.0
    %292 = vmatpush1.msra.mxu0 0.0
    %293 = vmatprep.subr.mxu0 0.0
    %294 = vmatpush1.msra.mxu0 0.0
    %295 = vmatprep.subr.mxu0 0.0
    %296 = vmatpush1.msra.mxu0 0.0
    %297 = vmatprep.mubr.f32.mxu0 0.0
    %298 = vmatmul.mubr.f32.gmra.mrb[0].mxu0 %v228
    %v299 = vpop.f32.mrb[0].mxu0
    %v300 = vadd.f32 %v224, %v299
    %v301 = vpop.f32.mrb[0].mxu0
    %302 = vmatprep.mubr.f32.mxu0 0.0
    %303 = vmatmul.mubr.f32.gmra.mrb[0].mxu0 %v231
    %v304 = vpop.f32.mrb[0].mxu0
    %v305 = vadd.f32 %v224, %v304
    %v306 = vpop.f32.mrb[0].mxu0
    %307 = vdwg.mxu0
    %v308 = vadd.f32 %v114, %v300
    %v309 = vadd.f32 %v115, %v305
    %v310 = vsel %vm127, %v308, 0.0
    %311 = vadd.xlane.f32.xlu0 %v310
    %v312 = vpop.xlane.xlu0 %311
    %v313 = vsel %vm127, %v309, 0.0
    %314 = vadd.xlane.f32.xlu0 %v313
    %v315 = vpop.xlane.xlu0 %314
    %v316 = vrcp.pop 32.0
    %v317 = vmul.f32 %v312, %v316
    %v318 = vmul.f32 %v315, %v316
    %v319 = vsub.f32 %v308, %v317
    %v320 = vsub.f32 %v309, %v318
    %v321 = vmul.f32 %v319, %v319
    %v322 = vmul.f32 %v320, %v320
    %v323 = vsel %vm127, %v321, 0.0
    %324 = vadd.xlane.f32.xlu0 %v323
    %v325 = vpop.xlane.xlu0 %324
    %v326 = vsel %vm127, %v322, 0.0
    %327 = vadd.xlane.f32.xlu0 %v326
    %v328 = vpop.xlane.xlu0 %327
    %v329 = vmul.f32 %v325, %v316
    %v330 = vmul.f32 %v328, %v316
    %v331 = vadd.f32 %v329, 1e-05
    %v332 = vadd.f32 %v330, 1e-05
    %v333 = vrsqrt.pop %v331
    %v334 = vrsqrt.pop %v332
    %v335 = vmul.f32 %v319, %v333
    %v336 = vmul.f32 %v320, %v334
    %v337 = vld [vmem:[#allocation11] sm:$0x1]
    %v339 = vlaneseq
    %v340 = vshrl.u32 %v339, 7
    %v341 = vsub.s32 0, %v340
    %v342 = vrot.slane %v337, %v341
    %v344 = vmul.f32 %v335, %v342
    %v345 = vmul.f32 %v336, %v342
    %v346 = vld [vmem:[#allocation13] sm:$0x1]
    %v348 = vlaneseq
    %v349 = vshrl.u32 %v348, 7
    %v350 = vsub.s32 0, %v349
    %v351 = vrot.slane %v346, %v350
    %v353 = vadd.f32 %v344, %v351
    %v354 = vadd.f32 %v345, %v351
    %355 = vst.msk [vmem:[#allocation14] sm:$0xff] %vm127, %v353
    %356 = vst.msk [vmem:[#allocation14 + $0x8] sm:$0xff] %vm127, %v354
    // Predicated region
    $region58: #{transformer_decoder_layer.5} parent=1 // pred_check
      _
    $region59: #{transformer_decoder_layer.5} parent=1 // pred_check_branch
      %358 = sbr.rel (0) target = $region61
    $region60: #{transformer_decoder_layer.5} parent=1 // pred_region
      %s360 = ssub.s32 256, 256
      %361 = vsyncadd [#allocation4], %s360
      %s362 = sshll.u32 [#allocation14], 4
      %s363 = int_to_ptr.vmem [resolvable:$true] %s362
      %368 = dma.vmem_to_hbm [thread:$0]  %s363, 256, %s7, [#allocation4], 128, 128, 8
    $region61: #{transformer_decoder_layer.5} parent=1 // pred_fallthru
      _
    // Predicated region
    $region62: #{transformer_decoder_layer.5} parent=1 // pred_check
      _
    $region63: #{transformer_decoder_layer.5} parent=1 // pred_check_branch
      %370 = sbr.rel (0) target = $region65
    $region64: #{transformer_decoder_layer.5} parent=1 // pred_region
      %371 = dma.done [#allocation4], 256
    $region65: #{transformer_decoder_layer.5} parent=1 // pred_fallthru
      _
    %372 = vsyncpa [#allocation3], 1
    %373 = vsyncpa [#allocation6], 1
    %374 = vsyncpa [#allocation9], 1
    %375 = vsyncpa [#allocation12], 1
    %376 = vsyncpa [#allocation4], 1

</llo_original>
